<compile_context>
chip_gen: v6e
topology: v6e:2x2x1
jax: 0.10.0
libtpu: 0.0.40
codegen_flags: <defaults>
</compile_context>

<pallas_src>
import math

import jax
import jax.numpy as jnp
from jax.experimental import pallas as pl
from jax.experimental.pallas import tpu as pltpu


def _round_up(x, m):
    return ((x + m - 1) // m) * m


# ---------------------------------------------------------------------------
# Fused multi-layer GRU kernel (one grid program per batch tile)
# ---------------------------------------------------------------------------
def _make_encoder_kernel(num_layers, T, bb, Hg):
    """Fused GRU-stack kernel for one batch tile of `bb` sequences.

    Ref order:
      lens_ref : (bb, 1)       int32  valid lengths of this tile's sequences
      x_ref    : (T*bb, E)     bf16   time-major flattened input (row = t*bb + b)
      per layer l: w_ih (I_l, 3*Hg) bf16, w_hh (Hg, 3*Hg) bf16,
                   gi_bias (1, 3*Hg) f32, b_hn (1, Hg) f32
                   (each gate on a 128-lane boundary; padding is zero)
      out_ref  : (T*bb, Hg)    bf16   last layer per-step hidden (0 at pads)
      hn_ref   : (L*bb, Hg)    f32    final hidden per layer (row = l*bb + b)
      gi_scr   : (T*bb, 3*Hg)  f32    VMEM scratch: hoisted input projection
      act_scr  : (T*bb, Hg)    bf16   VMEM scratch: inter-layer activation
    """

    def kernel(lens_ref, x_ref, *args):
        w_refs = args[: 4 * num_layers]
        out_ref = args[4 * num_layers]
        hn_ref = args[4 * num_layers + 1]
        gi_scr = args[4 * num_layers + 2]
        act_scr = args[4 * num_layers + 3]

        lens = lens_ref[...]                       # (bb, 1) int32, loaded once

        for l in range(num_layers):
            w_ih = w_refs[4 * l][...]              # (I_l, 3*Hg) bf16
            w_hh = w_refs[4 * l + 1][...]          # (Hg, 3*Hg)  bf16
            gib = w_refs[4 * l + 2][...]           # (1, 3*Hg)   f32
            bhn = w_refs[4 * l + 3][...]           # (1, Hg)     f32

            x = x_ref[...] if l == 0 else act_scr[...]   # (T*bb, I_l) bf16

            # Hoisted input projection: one MXU matmul for the whole tile,
            # biases pre-folded; parked in VMEM scratch so the unrolled time
            # loop only keeps one (bb, 3*Hg) slab live at a time.
            gi_scr[...] = (
                jnp.dot(x, w_ih, preferred_element_type=jnp.float32) + gib
            )

            h = jnp.zeros((bb, Hg), jnp.float32)
            last = l == num_layers - 1

            # Fully-unrolled recurrence (T static & small): only the h-dependent
            # matmul + gate nonlinearities sit on the serial path.
            for t in range(T):
                gi_t = gi_scr[pl.ds(t * bb, bb), :]                 # (bb, 3*Hg)
                gh = jnp.dot(h.astype(jnp.bfloat16), w_hh,
                             preferred_element_type=jnp.float32)    # (bb, 3*Hg)
                # Gate slices start on 128-lane boundaries -> whole-vreg slices.
                r = jax.nn.sigmoid(gi_t[:, :Hg] + gh[:, :Hg])
                z = jax.nn.sigmoid(gi_t[:, Hg:2 * Hg] + gh[:, Hg:2 * Hg])
                # PyTorch GRU: n = tanh(W_in x + b_in + r * (W_hn h + b_hn))
                n = jnp.tanh(gi_t[:, 2 * Hg:] + r * (gh[:, 2 * Hg:] + bhn))
                h_new = (1.0 - z) * n + z * h

                valid = lens > t                     # (bb, 1) bool
                h = jnp.where(valid, h_new, h)       # exact freeze past length
                o_t = jnp.where(valid, h_new, 0.0)   # zeros at padded steps

                if last:
                    out_ref[pl.ds(t * bb, bb), :] = o_t.astype(out_ref.dtype)
                else:
                    act_scr[pl.ds(t * bb, bb), :] = o_t.astype(jnp.bfloat16)

            hn_ref[pl.ds(l * bb, bb), :] = h

    return kernel


def encoder_gru(x_tiles, lens_tiles, packed, *, hidden_pad):
    """x_tiles: (NB, T*bb, E) bf16; lens_tiles: (NB, bb, 1) int32;
    packed: per layer (w_ih (I,3Hg) bf16, w_hh (Hg,3Hg) bf16,
    gi_bias (1,3Hg) f32, b_hn (1,Hg) f32).
    Returns (out (NB, T*bb, Hg) bf16, h_n (NB, L*bb, Hg) f32)."""
    NB, TBb, E = x_tiles.shape
    bb = lens_tiles.shape[1]
    T = TBb // bb
    Hg = hidden_pad
    L = len(packed)
    flat_w = [w for layer in packed for w in layer]

    def whole(shape):
        nd = len(shape)

        def imap(i):
            return (0,) * nd

        return pl.BlockSpec(shape, imap)

    in_specs = (
        [pl.BlockSpec((None, bb, 1), lambda i: (i, 0, 0)),      # lengths
         pl.BlockSpec((None, TBb, E), lambda i: (i, 0, 0))]     # x
        + [whole(w.shape) for w in flat_w]                       # weights (resident)
    )
    out_specs = (
        pl.BlockSpec((None, TBb, Hg), lambda i: (i, 0, 0)),
        pl.BlockSpec((None, L * bb, Hg), lambda i: (i, 0, 0)),
    )

    out, h_n = pl.pallas_call(
        _make_encoder_kernel(L, T, bb, Hg),
        grid=(NB,),
        out_shape=(
            jax.ShapeDtypeStruct((NB, TBb, Hg), jnp.bfloat16),
            jax.ShapeDtypeStruct((NB, L * bb, Hg), jnp.float32),
        ),
        in_specs=in_specs,
        out_specs=out_specs,
        scratch_shapes=[
            pltpu.VMEM((TBb, 3 * Hg), jnp.float32),   # hoisted projection gi
            pltpu.VMEM((TBb, Hg), jnp.bfloat16),      # inter-layer activation
        ],
        compiler_params=pltpu.CompilerParams(
            # Batch tiles are independent -> v7x's second TensorCore gets half
            # the batch; no effect on single-core v5e/v6e.
            dimension_semantics=("parallel",),
            # Everything resident here is a few hundred KiB — far under v7x's
            # 64 MiB. Re-derive / stream weights for production H, T, B.
            vmem_limit_bytes=32 * 1024 * 1024,
        ),
    )(lens_tiles, x_tiles, *flat_w)
    return out, h_n


# ---------------------------------------------------------------------------
# Parameters (nn.Embedding + nn.GRU shapes) and gate packing
# ---------------------------------------------------------------------------
def init_encoder_params(key, vocab_size, embed_dim, hidden_size, layers, pad):
    """Deterministic synthetic parameters (shapes follow nn.Embedding + nn.GRU)."""
    params = {}
    key, k_emb = jax.random.split(key)
    emb = jax.random.normal(k_emb, (vocab_size, embed_dim), jnp.float32)
    emb = emb.at[pad].set(0.0)               # nn.Embedding(padding_idx=pad)
    params["embedding"] = emb

    stdv = 1.0 / math.sqrt(hidden_size)      # PyTorch GRU init range
    gru = []
    for layer in range(layers):
        in_dim = embed_dim if layer == 0 else hidden_size
        key, k1, k2, k3, k4 = jax.random.split(key, 5)
        w_ih = jax.random.uniform(k1, (3, in_dim, hidden_size), jnp.float32, -stdv, stdv)
        w_hh = jax.random.uniform(k2, (3, hidden_size, hidden_size), jnp.float32, -stdv, stdv)
        b_ih = jax.random.uniform(k3, (3, 1, hidden_size), jnp.float32, -stdv, stdv)
        b_hh = jax.random.uniform(k4, (3, 1, hidden_size), jnp.float32, -stdv, stdv)
        gru.append((w_ih, w_hh, b_ih, b_hh))
    params["gru"] = gru
    return params


def pack_gru_params(gru_params, hidden_size, gate_stride):
    """Concatenate gates (r, z, n) with each gate padded to `gate_stride` lanes
    (a multiple of 128) and fold biases. Padding is zero, so padded lanes of the
    recurrence stay exactly 0 and do not affect active lanes.

    Per layer: (w_ih (I, 3*Hg) bf16, w_hh (Hg, 3*Hg) bf16,
                gi_bias (1, 3*Hg) f32, b_hn (1, Hg) f32)."""
    H, Hg = hidden_size, gate_stride
    packed = []
    for layer, (w_ih, w_hh, b_ih, b_hh) in enumerate(gru_params):
        in_dim = w_ih.shape[1]
        # Layers >= 1 consume the padded (Hg-wide) activation of the previous
        # layer; the extra K rows are zero so they contribute nothing.
        in_dim_p = in_dim if layer == 0 else Hg
        w_ih_p = jnp.zeros((in_dim_p, 3 * Hg), jnp.float32)
        w_hh_p = jnp.zeros((Hg, 3 * Hg), jnp.float32)
        gi_bias = jnp.zeros((1, 3 * Hg), jnp.float32)
        for g in range(3):
            w_ih_p = w_ih_p.at[:in_dim, g * Hg:g * Hg + H].set(w_ih[g])
            w_hh_p = w_hh_p.at[:H, g * Hg:g * Hg + H].set(w_hh[g])
            # b_ih (all gates) + b_hh for r,z folded into the hoisted projection;
            # b_hn stays separate because PyTorch gates it by r.
            b = b_ih[g] + (b_hh[g] if g < 2 else 0.0)
            gi_bias = gi_bias.at[:, g * Hg:g * Hg + H].set(b)
        b_hn = jnp.zeros((1, Hg), jnp.float32).at[:, :H].set(b_hh[2])
        packed.append((w_ih_p.astype(jnp.bfloat16), w_hh_p.astype(jnp.bfloat16),
                       gi_bias, b_hn))
    return packed


# ---------------------------------------------------------------------------
# Encoder forward (wrapper)
# ---------------------------------------------------------------------------
def encoder_forward(params, tokens, lengths, *, batch_tiles=1):
    """tokens: (B, T) int32 (padded with `pad`), lengths: (B,) int32 sorted
    descending, all >= 1 (pack_padded_sequence enforce_sorted=True).
    Returns (output, h_n): output (B, T, H) f32 with zeros at padded steps
    (padded equivalent of the PackedSequence), h_n (layers, B, H) f32."""
    # TODO(synk): fuse the embedding gather + transpose into the kernel via
    # scalar-prefetched token ids (PrefetchScalarGridSpec) to remove the extra
    # HBM traversals of the (B, T, E) activation at production shapes.
    emb = params["embedding"][tokens]                 # (B, T, E) XLA gather
    B, T, E = emb.shape
    H = params["gru"][0][1].shape[-1]
    L = len(params["gru"])
    Hg = _round_up(H, 128)                            # 128-lane gate slabs
    NB = batch_tiles
    assert B % NB == 0, "batch must divide evenly into batch tiles"
    bb = B // NB

    # Layout plumbing in XLA (not in the kernel): per batch tile, time-major,
    # flattened so row = t*bb + b — exactly the layout the kernel consumes.
    x = (emb.reshape(NB, bb, T, E).transpose(0, 2, 1, 3)
            .reshape(NB, T * bb, E).astype(jnp.bfloat16))
    lens_tiles = lengths.astype(jnp.int32).reshape(NB, bb, 1)

    packed = pack_gru_params(params["gru"], H, Hg)
    out, h_n = encoder_gru(x, lens_tiles, packed, hidden_pad=Hg)

    out = (out.reshape(NB, T, bb, Hg).transpose(0, 2, 1, 3)
              .reshape(B, T, Hg)[..., :H]).astype(jnp.float32)
    h_n = (h_n.reshape(NB, L, bb, Hg).transpose(1, 0, 2, 3)
              .reshape(L, B, Hg)[..., :H])
    return out, h_n


# ---------------------------------------------------------------------------
# References
# ---------------------------------------------------------------------------
def reference_forward_mirror(params, tokens, lengths):
    """Pure-JAX mirror of the kernel math (gate concatenation, bias folding,
    bf16 matmul operands, exact where-selects, bf16 output store)."""
    emb = params["embedding"][tokens]
    B, T, _ = emb.shape
    H = params["gru"][0][1].shape[-1]
    x = jnp.transpose(emb, (1, 0, 2)).astype(jnp.bfloat16)   # (T, B, E)
    valid_tb = (jnp.arange(T, dtype=jnp.int32)[:, None]
                < lengths.astype(jnp.int32)[None, :])        # (T, B)

    h_ns, y = [], None
    for (w_ih, w_hh, b_ih, b_hh) in params["gru"]:
        w_ih_c = jnp.concatenate([w_ih[0], w_ih[1], w_ih[2]], -1).astype(jnp.bfloat16)
        w_hh_c = jnp.concatenate([w_hh[0], w_hh[1], w_hh[2]], -1).astype(jnp.bfloat16)
        gib = jnp.concatenate([b_ih[0] + b_hh[0], b_ih[1] + b_hh[1], b_ih[2]], -1)
        bhn = b_hh[2]
        in_dim = x.shape[-1]
        gi = (jnp.dot(x.reshape(T * B, in_dim), w_ih_c,
                      preferred_element_type=jnp.float32) + gib).reshape(T, B, 3 * H)
        h = jnp.zeros((B, H), jnp.float32)
        outs = []
        for t in range(T):
            gh = jnp.dot(h.astype(jnp.bfloat16), w_hh_c,
                         preferred_element_type=jnp.float32)
            r = jax.nn.sigmoid(gi[t, :, :H] + gh[:, :H])
            z = jax.nn.sigmoid(gi[t, :, H:2 * H] + gh[:, H:2 * H])
            n = jnp.tanh(gi[t, :, 2 * H:] + r * (gh[:, 2 * H:] + bhn))
            h_new = (1.0 - z) * n + z * h
            valid = valid_tb[t][:, None]
            h = jnp.where(valid, h_new, h)
            outs.append(jnp.where(valid, h_new, 0.0))
        h_ns.append(h)
        y = jnp.stack(outs, axis=0)                    # (T, B, H) f32
        x = y.astype(jnp.bfloat16)
    out = y.astype(jnp.bfloat16).astype(jnp.float32)   # mirror the bf16 store
    return jnp.transpose(out, (1, 0, 2)), jnp.stack(h_ns, axis=0)


def reference_forward_f32(params, tokens, lengths):
    """Pure-f32 reference of the PyTorch GRU math (per-gate, no bf16)."""
    emb = params["embedding"][tokens]
    B, T, _ = emb.shape
    H = params["gru"][0][1].shape[-1]
    x = emb.astype(jnp.float32)
    h_ns = []
    for (w_ih, w_hh, b_ih, b_hh) in params["gru"]:
        h = jnp.zeros((B, H), jnp.float32)
        outs = []
        for t in range(T):
            x_t = x[:, t, :]
            gi_r = x_t @ w_ih[0] + b_ih[0]
            gi_z = x_t @ w_ih[1] + b_ih[1]
            gi_n = x_t @ w_ih[2] + b_ih[2]
            gh_r = h @ w_hh[0] + b_hh[0]
            gh_z = h @ w_hh[1] + b_hh[1]
            gh_n = h @ w_hh[2] + b_hh[2]
            r = jax.nn.sigmoid(gi_r + gh_r)
            z = jax.nn.sigmoid(gi_z + gh_z)
            n = jnp.tanh(gi_n + r * gh_n)
            h_new = (1.0 - z) * n + z * h
            valid = (lengths > t)[:, None]
            h = jnp.where(valid, h_new, h)
            outs.append(jnp.where(valid, h_new, 0.0))
        x = jnp.stack(outs, axis=1)
        h_ns.append(h)
    return x, jnp.stack(h_ns, axis=0)


# ---------------------------------------------------------------------------
if __name__ == "__main__":
    vocab_size, embed_dim, hidden_size, layers, pad = 50, 16, 32, 2, 0
    B, T = 4, 8

    key = jax.random.PRNGKey(0)
    key, k_params, k_tok = jax.random.split(key, 3)
    params = init_encoder_params(k_params, vocab_size, embed_dim, hidden_size, layers, pad)

    # lengths sorted descending, all >= 1 (pack_padded_sequence enforce_sorted=True);
    # PyTorch forward takes [B, S(, 1)] tokens — we use the squeezed (B, S) ids.
    lengths = jnp.array([8, 6, 5, 3], dtype=jnp.int32)
    tokens = jax.random.randint(k_tok, (B, T), 1, vocab_size, dtype=jnp.int32)
    t_idx = jnp.arange(T)[None, :]
    tokens = jnp.where(t_idx < lengths[:, None], tokens, pad)   # pad the tail

    # batch_tiles=2 exercises the "parallel" grid axis (v7x megacore split).
    out, h_n = encoder_forward(params, tokens, lengths, batch_tiles=2)
    jax.block_until_ready((out, h_n))
    assert out.shape == (B, T, hidden_size) and h_n.shape == (layers, B, hidden_size)

    # Tight check: kernel vs pure-JAX mirror (same math incl. bf16 operands and
    # bf16 output store; 1e-2 absorbs a single bf16 ulp on the stored output).
    m_out, m_h = reference_forward_mirror(params, tokens, lengths)
    assert jnp.allclose(out, m_out, atol=1e-2, rtol=1e-2)
    assert jnp.allclose(h_n, m_h, atol=5e-3, rtol=5e-3)

    # Semantic check vs the full-f32 PyTorch-GRU math; looser tolerance absorbs
    # only the intentional bf16 MXU-operand / output rounding.
    ref_out, ref_h = reference_forward_f32(params, tokens, lengths)
    assert jnp.allclose(out, ref_out, atol=5e-2, rtol=5e-2)
    assert jnp.allclose(h_n, ref_h, atol=5e-2, rtol=5e-2)

    # TODO(synk): the PyTorch module returns a PackedSequence container; we return
    # the padded-with-zeros equivalent plus h_n (same information, no container).
    print("KERNEL_OK")
</pallas_src>

<mosaic_0001>
module attributes {stable_mosaic.version = 11 : i64} {
  func.func @kernel(%arg0: i32, %arg1: memref<1x2x1xi32, #tpu.memory_space<vmem>>, %arg2: memref<1x16x16xbf16, #tpu.memory_space<vmem>>, %arg3: memref<16x384xbf16, #tpu.memory_space<vmem>>, %arg4: memref<128x384xbf16, #tpu.memory_space<vmem>>, %arg5: memref<1x384xf32, #tpu.memory_space<vmem>>, %arg6: memref<1x128xf32, #tpu.memory_space<vmem>>, %arg7: memref<128x384xbf16, #tpu.memory_space<vmem>>, %arg8: memref<128x384xbf16, #tpu.memory_space<vmem>>, %arg9: memref<1x384xf32, #tpu.memory_space<vmem>>, %arg10: memref<1x128xf32, #tpu.memory_space<vmem>>, %arg11: memref<1x16x128xbf16, #tpu.memory_space<vmem>>, %arg12: memref<1x4x128xf32, #tpu.memory_space<vmem>>, %arg13: memref<16x384xf32, #tpu.memory_space<vmem>>, %arg14: memref<16x128xbf16, #tpu.memory_space<vmem>>) attributes {dimension_semantics = [#tpu.dimension_semantics<parallel>], iteration_bounds = array<i64: 2>, scalar_prefetch = 0 : i64, scratch_operands = 2 : i64, tpu.core_type = #tpu.core_type<tc>, window_params = [{transform_indices = @transform_0, window_bounds = array<i64: 1, 2, 1>}, {transform_indices = @transform_1, window_bounds = array<i64: 1, 16, 16>}, {pipeline_mode = #tpu.pipeline_mode<synchronous>, transform_indices = @transform_2, window_bounds = array<i64: 16, 384>}, {pipeline_mode = #tpu.pipeline_mode<synchronous>, transform_indices = @transform_3, window_bounds = array<i64: 128, 384>}, {pipeline_mode = #tpu.pipeline_mode<synchronous>, transform_indices = @transform_4, window_bounds = array<i64: 1, 384>}, {pipeline_mode = #tpu.pipeline_mode<synchronous>, transform_indices = @transform_5, window_bounds = array<i64: 1, 128>}, {pipeline_mode = #tpu.pipeline_mode<synchronous>, transform_indices = @transform_6, window_bounds = array<i64: 128, 384>}, {pipeline_mode = #tpu.pipeline_mode<synchronous>, transform_indices = @transform_7, window_bounds = array<i64: 128, 384>}, {pipeline_mode = #tpu.pipeline_mode<synchronous>, transform_indices = @transform_8, window_bounds = array<i64: 1, 384>}, {pipeline_mode = #tpu.pipeline_mode<synchronous>, transform_indices = @transform_9, window_bounds = array<i64: 1, 128>}, {transform_indices = @transform_10, window_bounds = array<i64: 1, 16, 128>}, {transform_indices = @transform_11, window_bounds = array<i64: 1, 4, 128>}]} {
    %c0 = arith.constant 0 : index
    %c0_0 = arith.constant 0 : index
    %c0_1 = arith.constant 0 : index
    %0 = vector.load %arg1[%c0, %c0_0, %c0_1] : memref<1x2x1xi32, #tpu.memory_space<vmem>>, vector<1x2x1xi32>
    %1 = vector.shape_cast %0 : vector<1x2x1xi32> to vector<2x1xi32>
    %c0_2 = arith.constant 0 : index
    %c0_3 = arith.constant 0 : index
    %2 = vector.load %arg3[%c0_2, %c0_3] : memref<16x384xbf16, #tpu.memory_space<vmem>>, vector<16x384xbf16>
    %c0_4 = arith.constant 0 : index
    %c0_5 = arith.constant 0 : index
    %3 = vector.load %arg4[%c0_4, %c0_5] : memref<128x384xbf16, #tpu.memory_space<vmem>>, vector<128x384xbf16>
    %c0_6 = arith.constant 0 : index
    %c0_7 = arith.constant 0 : index
    %4 = vector.load %arg5[%c0_6, %c0_7] : memref<1x384xf32, #tpu.memory_space<vmem>>, vector<1x384xf32>
    %c0_8 = arith.constant 0 : index
    %c0_9 = arith.constant 0 : index
    %5 = vector.load %arg6[%c0_8, %c0_9] : memref<1x128xf32, #tpu.memory_space<vmem>>, vector<1x128xf32>
    %c0_10 = arith.constant 0 : index
    %c0_11 = arith.constant 0 : index
    %c0_12 = arith.constant 0 : index
    %6 = vector.load %arg2[%c0_10, %c0_11, %c0_12] : memref<1x16x16xbf16, #tpu.memory_space<vmem>>, vector<1x16x16xbf16>
    %7 = vector.shape_cast %6 : vector<1x16x16xbf16> to vector<16x16xbf16>
    %cst = arith.constant dense<0.000000e+00> : vector<16x384xf32>
    %8 = tpu.matmul %7, %2, %cst {dimension_numbers = #tpu.dot_dimension_numbers<[1], [0], [0], [1], [0, 0, 1, 1], [], []>} : vector<16x16xbf16>, vector<16x384xbf16>, vector<16x384xf32> -> vector<16x384xf32>
    %9 = vector.broadcast %4 : vector<1x384xf32> to vector<16x384xf32>
    %10 = arith.addf %8, %9 : vector<16x384xf32>
    %c0_13 = arith.constant 0 : index
    %c0_14 = arith.constant 0 : index
    %11 = vector.load %arg13[%c0_13, %c0_14] : memref<16x384xf32, #tpu.memory_space<vmem>>, vector<16x384xf32>
    tpu.vector_store %arg13[%c0_13, %c0_14], %10 {strides = array<i32>} : memref<16x384xf32, #tpu.memory_space<vmem>>, vector<16x384xf32>,
    %cst_15 = arith.constant 0.000000e+00 : f32
    %12 = vector.broadcast %cst_15 : f32 to vector<2x128xf32>
    %c0_16 = arith.constant 0 : index
    %c0_17 = arith.constant 0 : index
    %13 = vector.load %arg13[%c0_16, %c0_17] : memref<16x384xf32, #tpu.memory_space<vmem>>, vector<2x384xf32>
    %14 = arith.truncf %12 : vector<2x128xf32> to vector<2x128xbf16>
    %cst_18 = arith.constant dense<0.000000e+00> : vector<2x384xf32>
    %15 = tpu.matmul %14, %3, %cst_18 {dimension_numbers = #tpu.dot_dimension_numbers<[1], [0], [0], [1], [0, 0, 1, 1], [], []>} : vector<2x128xbf16>, vector<128x384xbf16>, vector<2x384xf32> -> vector<2x384xf32>
    %16 = vector.extract_strided_slice %13 {offsets = [0, 0], sizes = [2, 128], strides = [1, 1]} : vector<2x384xf32> to vector<2x128xf32>
    %17 = vector.extract_strided_slice %15 {offsets = [0, 0], sizes = [2, 128], strides = [1, 1]} : vector<2x384xf32> to vector<2x128xf32>
    %18 = arith.addf %16, %17 : vector<2x128xf32>
    %19 = arith.negf %18 : vector<2x128xf32>
    %20 = math.exp %19 : vector<2x128xf32>
    %cst_19 = arith.constant 1.000000e+00 : f32
    %21 = vector.broadcast %cst_19 : f32 to vector<2x128xf32>
    %22 = arith.addf %21, %20 : vector<2x128xf32>
    %23 = arith.divf %21, %22 : vector<2x128xf32>
    %24 = vector.extract_strided_slice %13 {offsets = [0, 128], sizes = [2, 128], strides = [1, 1]} : vector<2x384xf32> to vector<2x128xf32>
    %25 = vector.extract_strided_slice %15 {offsets = [0, 128], sizes = [2, 128], strides = [1, 1]} : vector<2x384xf32> to vector<2x128xf32>
    %26 = arith.addf %24, %25 : vector<2x128xf32>
    %27 = arith.negf %26 : vector<2x128xf32>
    %28 = math.exp %27 : vector<2x128xf32>
    %cst_20 = arith.constant 1.000000e+00 : f32
    %29 = vector.broadcast %cst_20 : f32 to vector<2x128xf32>
    %30 = arith.addf %29, %28 : vector<2x128xf32>
    %31 = arith.divf %29, %30 : vector<2x128xf32>
    %32 = vector.extract_strided_slice %13 {offsets = [0, 256], sizes = [2, 128], strides = [1, 1]} : vector<2x384xf32> to vector<2x128xf32>
    %33 = vector.extract_strided_slice %15 {offsets = [0, 256], sizes = [2, 128], strides = [1, 1]} : vector<2x384xf32> to vector<2x128xf32>
    %34 = vector.broadcast %5 : vector<1x128xf32> to vector<2x128xf32>
    %35 = arith.addf %33, %34 : vector<2x128xf32>
    %36 = arith.mulf %23, %35 : vector<2x128xf32>
    %37 = arith.addf %32, %36 : vector<2x128xf32>
    %38 = math.tanh %37 : vector<2x128xf32>
    %cst_21 = arith.constant 1.000000e+00 : f32
    %39 = vector.broadcast %cst_21 : f32 to vector<2x128xf32>
    %40 = arith.subf %39, %31 : vector<2x128xf32>
    %41 = arith.mulf %40, %38 : vector<2x128xf32>
    %42 = arith.mulf %31, %12 : vector<2x128xf32>
    %43 = arith.addf %41, %42 : vector<2x128xf32>
    %c0_i32 = arith.constant 0 : i32
    %44 = vector.broadcast %c0_i32 : i32 to vector<2x1xi32>
    %45 = arith.cmpi sgt, %1, %44 : vector<2x1xi32>
    %46 = vector.shape_cast %45 : vector<2x1xi1> to vector<2x1xi1>
    %47 = vector.broadcast %46 : vector<2x1xi1> to vector<2x128xi1>
    %48 = arith.select %47, %43, %12 : vector<2x128xi1>, vector<2x128xf32>
    %cst_22 = arith.constant 0.000000e+00 : f32
    %49 = vector.shape_cast %45 : vector<2x1xi1> to vector<2x1xi1>
    %50 = vector.broadcast %49 : vector<2x1xi1> to vector<2x128xi1>
    %51 = vector.broadcast %cst_22 : f32 to vector<2x128xf32>
    %52 = arith.select %50, %43, %51 : vector<2x128xi1>, vector<2x128xf32>
    %53 = arith.truncf %52 : vector<2x128xf32> to vector<2x128xbf16>
    %c0_23 = arith.constant 0 : index
    %c0_24 = arith.constant 0 : index
    %54 = vector.load %arg14[%c0_23, %c0_24] : memref<16x128xbf16, #tpu.memory_space<vmem>>, vector<2x128xbf16>
    tpu.vector_store %arg14[%c0_23, %c0_24], %53 {strides = array<i32>} : memref<16x128xbf16, #tpu.memory_space<vmem>>, vector<2x128xbf16>,
    %c2 = arith.constant 2 : index
    %c0_25 = arith.constant 0 : index
    %55 = vector.load %arg13[%c2, %c0_25] : memref<16x384xf32, #tpu.memory_space<vmem>>, vector<2x384xf32>
    %56 = arith.truncf %48 : vector<2x128xf32> to vector<2x128xbf16>
    %cst_26 = arith.constant dense<0.000000e+00> : vector<2x384xf32>
    %57 = tpu.matmul %56, %3, %cst_26 {dimension_numbers = #tpu.dot_dimension_numbers<[1], [0], [0], [1], [0, 0, 1, 1], [], []>} : vector<2x128xbf16>, vector<128x384xbf16>, vector<2x384xf32> -> vector<2x384xf32>
    %58 = vector.extract_strided_slice %55 {offsets = [0, 0], sizes = [2, 128], strides = [1, 1]} : vector<2x384xf32> to vector<2x128xf32>
    %59 = vector.extract_strided_slice %57 {offsets = [0, 0], sizes = [2, 128], strides = [1, 1]} : vector<2x384xf32> to vector<2x128xf32>
    %60 = arith.addf %58, %59 : vector<2x128xf32>
    %61 = arith.negf %60 : vector<2x128xf32>
    %62 = math.exp %61 : vector<2x128xf32>
    %cst_27 = arith.constant 1.000000e+00 : f32
    %63 = vector.broadcast %cst_27 : f32 to vector<2x128xf32>
    %64 = arith.addf %63, %62 : vector<2x128xf32>
    %65 = arith.divf %63, %64 : vector<2x128xf32>
    %66 = vector.extract_strided_slice %55 {offsets = [0, 128], sizes = [2, 128], strides = [1, 1]} : vector<2x384xf32> to vector<2x128xf32>
    %67 = vector.extract_strided_slice %57 {offsets = [0, 128], sizes = [2, 128], strides = [1, 1]} : vector<2x384xf32> to vector<2x128xf32>
    %68 = arith.addf %66, %67 : vector<2x128xf32>
    %69 = arith.negf %68 : vector<2x128xf32>
    %70 = math.exp %69 : vector<2x128xf32>
    %cst_28 = arith.constant 1.000000e+00 : f32
    %71 = vector.broadcast %cst_28 : f32 to vector<2x128xf32>
    %72 = arith.addf %71, %70 : vector<2x128xf32>
    %73 = arith.divf %71, %72 : vector<2x128xf32>
    %74 = vector.extract_strided_slice %55 {offsets = [0, 256], sizes = [2, 128], strides = [1, 1]} : vector<2x384xf32> to vector<2x128xf32>
    %75 = vector.extract_strided_slice %57 {offsets = [0, 256], sizes = [2, 128], strides = [1, 1]} : vector<2x384xf32> to vector<2x128xf32>
    %76 = vector.broadcast %5 : vector<1x128xf32> to vector<2x128xf32>
    %77 = arith.addf %75, %76 : vector<2x128xf32>
    %78 = arith.mulf %65, %77 : vector<2x128xf32>
    %79 = arith.addf %74, %78 : vector<2x128xf32>
    %80 = math.tanh %79 : vector<2x128xf32>
    %cst_29 = arith.constant 1.000000e+00 : f32
    %81 = vector.broadcast %cst_29 : f32 to vector<2x128xf32>
    %82 = arith.subf %81, %73 : vector<2x128xf32>
    %83 = arith.mulf %82, %80 : vector<2x128xf32>
    %84 = arith.mulf %73, %48 : vector<2x128xf32>
    %85 = arith.addf %83, %84 : vector<2x128xf32>
    %c1_i32 = arith.constant 1 : i32
    %86 = vector.broadcast %c1_i32 : i32 to vector<2x1xi32>
    %87 = arith.cmpi sgt, %1, %86 : vector<2x1xi32>
    %88 = vector.shape_cast %87 : vector<2x1xi1> to vector<2x1xi1>
    %89 = vector.broadcast %88 : vector<2x1xi1> to vector<2x128xi1>
    %90 = arith.select %89, %85, %48 : vector<2x128xi1>, vector<2x128xf32>
    %cst_30 = arith.constant 0.000000e+00 : f32
    %91 = vector.shape_cast %87 : vector<2x1xi1> to vector<2x1xi1>
    %92 = vector.broadcast %91 : vector<2x1xi1> to vector<2x128xi1>
    %93 = vector.broadcast %cst_30 : f32 to vector<2x128xf32>
    %94 = arith.select %92, %85, %93 : vector<2x128xi1>, vector<2x128xf32>
    %95 = arith.truncf %94 : vector<2x128xf32> to vector<2x128xbf16>
    %c2_31 = arith.constant 2 : index
    %c0_32 = arith.constant 0 : index
    %96 = vector.load %arg14[%c2_31, %c0_32] : memref<16x128xbf16, #tpu.memory_space<vmem>>, vector<2x128xbf16>
    tpu.vector_store %arg14[%c2_31, %c0_32], %95 {strides = array<i32>} : memref<16x128xbf16, #tpu.memory_space<vmem>>, vector<2x128xbf16>,
    %c4 = arith.constant 4 : index
    %c0_33 = arith.constant 0 : index
    %97 = vector.load %arg13[%c4, %c0_33] : memref<16x384xf32, #tpu.memory_space<vmem>>, vector<2x384xf32>
    %98 = arith.truncf %90 : vector<2x128xf32> to vector<2x128xbf16>
    %cst_34 = arith.constant dense<0.000000e+00> : vector<2x384xf32>
    %99 = tpu.matmul %98, %3, %cst_34 {dimension_numbers = #tpu.dot_dimension_numbers<[1], [0], [0], [1], [0, 0, 1, 1], [], []>} : vector<2x128xbf16>, vector<128x384xbf16>, vector<2x384xf32> -> vector<2x384xf32>
    %100 = vector.extract_strided_slice %97 {offsets = [0, 0], sizes = [2, 128], strides = [1, 1]} : vector<2x384xf32> to vector<2x128xf32>
    %101 = vector.extract_strided_slice %99 {offsets = [0, 0], sizes = [2, 128], strides = [1, 1]} : vector<2x384xf32> to vector<2x128xf32>
    %102 = arith.addf %100, %101 : vector<2x128xf32>
    %103 = arith.negf %102 : vector<2x128xf32>
    %104 = math.exp %103 : vector<2x128xf32>
    %cst_35 = arith.constant 1.000000e+00 : f32
    %105 = vector.broadcast %cst_35 : f32 to vector<2x128xf32>
    %106 = arith.addf %105, %104 : vector<2x128xf32>
    %107 = arith.divf %105, %106 : vector<2x128xf32>
    %108 = vector.extract_strided_slice %97 {offsets = [0, 128], sizes = [2, 128], strides = [1, 1]} : vector<2x384xf32> to vector<2x128xf32>
    %109 = vector.extract_strided_slice %99 {offsets = [0, 128], sizes = [2, 128], strides = [1, 1]} : vector<2x384xf32> to vector<2x128xf32>
    %110 = arith.addf %108, %109 : vector<2x128xf32>
    %111 = arith.negf %110 : vector<2x128xf32>
    %112 = math.exp %111 : vector<2x128xf32>
    %cst_36 = arith.constant 1.000000e+00 : f32
    %113 = vector.broadcast %cst_36 : f32 to vector<2x128xf32>
    %114 = arith.addf %113, %112 : vector<2x128xf32>
    %115 = arith.divf %113, %114 : vector<2x128xf32>
    %116 = vector.extract_strided_slice %97 {offsets = [0, 256], sizes = [2, 128], strides = [1, 1]} : vector<2x384xf32> to vector<2x128xf32>
    %117 = vector.extract_strided_slice %99 {offsets = [0, 256], sizes = [2, 128], strides = [1, 1]} : vector<2x384xf32> to vector<2x128xf32>
    %118 = vector.broadcast %5 : vector<1x128xf32> to vector<2x128xf32>
    %119 = arith.addf %117, %118 : vector<2x128xf32>
    %120 = arith.mulf %107, %119 : vector<2x128xf32>
    %121 = arith.addf %116, %120 : vector<2x128xf32>
    %122 = math.tanh %121 : vector<2x128xf32>
    %cst_37 = arith.constant 1.000000e+00 : f32
    %123 = vector.broadcast %cst_37 : f32 to vector<2x128xf32>
    %124 = arith.subf %123, %115 : vector<2x128xf32>
    %125 = arith.mulf %124, %122 : vector<2x128xf32>
    %126 = arith.mulf %115, %90 : vector<2x128xf32>
    %127 = arith.addf %125, %126 : vector<2x128xf32>
    %c2_i32 = arith.constant 2 : i32
    %128 = vector.broadcast %c2_i32 : i32 to vector<2x1xi32>
    %129 = arith.cmpi sgt, %1, %128 : vector<2x1xi32>
    %130 = vector.shape_cast %129 : vector<2x1xi1> to vector<2x1xi1>
    %131 = vector.broadcast %130 : vector<2x1xi1> to vector<2x128xi1>
    %132 = arith.select %131, %127, %90 : vector<2x128xi1>, vector<2x128xf32>
    %cst_38 = arith.constant 0.000000e+00 : f32
    %133 = vector.shape_cast %129 : vector<2x1xi1> to vector<2x1xi1>
    %134 = vector.broadcast %133 : vector<2x1xi1> to vector<2x128xi1>
    %135 = vector.broadcast %cst_38 : f32 to vector<2x128xf32>
    %136 = arith.select %134, %127, %135 : vector<2x128xi1>, vector<2x128xf32>
    %137 = arith.truncf %136 : vector<2x128xf32> to vector<2x128xbf16>
    %c4_39 = arith.constant 4 : index
    %c0_40 = arith.constant 0 : index
    %138 = vector.load %arg14[%c4_39, %c0_40] : memref<16x128xbf16, #tpu.memory_space<vmem>>, vector<2x128xbf16>
    tpu.vector_store %arg14[%c4_39, %c0_40], %137 {strides = array<i32>} : memref<16x128xbf16, #tpu.memory_space<vmem>>, vector<2x128xbf16>,
    %c6 = arith.constant 6 : index
    %c0_41 = arith.constant 0 : index
    %139 = vector.load %arg13[%c6, %c0_41] : memref<16x384xf32, #tpu.memory_space<vmem>>, vector<2x384xf32>
    %140 = arith.truncf %132 : vector<2x128xf32> to vector<2x128xbf16>
    %cst_42 = arith.constant dense<0.000000e+00> : vector<2x384xf32>
    %141 = tpu.matmul %140, %3, %cst_42 {dimension_numbers = #tpu.dot_dimension_numbers<[1], [0], [0], [1], [0, 0, 1, 1], [], []>} : vector<2x128xbf16>, vector<128x384xbf16>, vector<2x384xf32> -> vector<2x384xf32>
    %142 = vector.extract_strided_slice %139 {offsets = [0, 0], sizes = [2, 128], strides = [1, 1]} : vector<2x384xf32> to vector<2x128xf32>
    %143 = vector.extract_strided_slice %141 {offsets = [0, 0], sizes = [2, 128], strides = [1, 1]} : vector<2x384xf32> to vector<2x128xf32>
    %144 = arith.addf %142, %143 : vector<2x128xf32>
    %145 = arith.negf %144 : vector<2x128xf32>
    %146 = math.exp %145 : vector<2x128xf32>
    %cst_43 = arith.constant 1.000000e+00 : f32
    %147 = vector.broadcast %cst_43 : f32 to vector<2x128xf32>
    %148 = arith.addf %147, %146 : vector<2x128xf32>
    %149 = arith.divf %147, %148 : vector<2x128xf32>
    %150 = vector.extract_strided_slice %139 {offsets = [0, 128], sizes = [2, 128], strides = [1, 1]} : vector<2x384xf32> to vector<2x128xf32>
    %151 = vector.extract_strided_slice %141 {offsets = [0, 128], sizes = [2, 128], strides = [1, 1]} : vector<2x384xf32> to vector<2x128xf32>
    %152 = arith.addf %150, %151 : vector<2x128xf32>
    %153 = arith.negf %152 : vector<2x128xf32>
    %154 = math.exp %153 : vector<2x128xf32>
    %cst_44 = arith.constant 1.000000e+00 : f32
    %155 = vector.broadcast %cst_44 : f32 to vector<2x128xf32>
    %156 = arith.addf %155, %154 : vector<2x128xf32>
    %157 = arith.divf %155, %156 : vector<2x128xf32>
    %158 = vector.extract_strided_slice %139 {offsets = [0, 256], sizes = [2, 128], strides = [1, 1]} : vector<2x384xf32> to vector<2x128xf32>
    %159 = vector.extract_strided_slice %141 {offsets = [0, 256], sizes = [2, 128], strides = [1, 1]} : vector<2x384xf32> to vector<2x128xf32>
    %160 = vector.broadcast %5 : vector<1x128xf32> to vector<2x128xf32>
    %161 = arith.addf %159, %160 : vector<2x128xf32>
    %162 = arith.mulf %149, %161 : vector<2x128xf32>
    %163 = arith.addf %158, %162 : vector<2x128xf32>
    %164 = math.tanh %163 : vector<2x128xf32>
    %cst_45 = arith.constant 1.000000e+00 : f32
    %165 = vector.broadcast %cst_45 : f32 to vector<2x128xf32>
    %166 = arith.subf %165, %157 : vector<2x128xf32>
    %167 = arith.mulf %166, %164 : vector<2x128xf32>
    %168 = arith.mulf %157, %132 : vector<2x128xf32>
    %169 = arith.addf %167, %168 : vector<2x128xf32>
    %c3_i32 = arith.constant 3 : i32
    %170 = vector.broadcast %c3_i32 : i32 to vector<2x1xi32>
    %171 = arith.cmpi sgt, %1, %170 : vector<2x1xi32>
    %172 = vector.shape_cast %171 : vector<2x1xi1> to vector<2x1xi1>
    %173 = vector.broadcast %172 : vector<2x1xi1> to vector<2x128xi1>
    %174 = arith.select %173, %169, %132 : vector<2x128xi1>, vector<2x128xf32>
    %cst_46 = arith.constant 0.000000e+00 : f32
    %175 = vector.shape_cast %171 : vector<2x1xi1> to vector<2x1xi1>
    %176 = vector.broadcast %175 : vector<2x1xi1> to vector<2x128xi1>
    %177 = vector.broadcast %cst_46 : f32 to vector<2x128xf32>
    %178 = arith.select %176, %169, %177 : vector<2x128xi1>, vector<2x128xf32>
    %179 = arith.truncf %178 : vector<2x128xf32> to vector<2x128xbf16>
    %c6_47 = arith.constant 6 : index
    %c0_48 = arith.constant 0 : index
    %180 = vector.load %arg14[%c6_47, %c0_48] : memref<16x128xbf16, #tpu.memory_space<vmem>>, vector<2x128xbf16>
    tpu.vector_store %arg14[%c6_47, %c0_48], %179 {strides = array<i32>} : memref<16x128xbf16, #tpu.memory_space<vmem>>, vector<2x128xbf16>,
    %c8 = arith.constant 8 : index
    %c0_49 = arith.constant 0 : index
    %181 = vector.load %arg13[%c8, %c0_49] : memref<16x384xf32, #tpu.memory_space<vmem>>, vector<2x384xf32>
    %182 = arith.truncf %174 : vector<2x128xf32> to vector<2x128xbf16>
    %cst_50 = arith.constant dense<0.000000e+00> : vector<2x384xf32>
    %183 = tpu.matmul %182, %3, %cst_50 {dimension_numbers = #tpu.dot_dimension_numbers<[1], [0], [0], [1], [0, 0, 1, 1], [], []>} : vector<2x128xbf16>, vector<128x384xbf16>, vector<2x384xf32> -> vector<2x384xf32>
    %184 = vector.extract_strided_slice %181 {offsets = [0, 0], sizes = [2, 128], strides = [1, 1]} : vector<2x384xf32> to vector<2x128xf32>
    %185 = vector.extract_strided_slice %183 {offsets = [0, 0], sizes = [2, 128], strides = [1, 1]} : vector<2x384xf32> to vector<2x128xf32>
    %186 = arith.addf %184, %185 : vector<2x128xf32>
    %187 = arith.negf %186 : vector<2x128xf32>
    %188 = math.exp %187 : vector<2x128xf32>
    %cst_51 = arith.constant 1.000000e+00 : f32
    %189 = vector.broadcast %cst_51 : f32 to vector<2x128xf32>
    %190 = arith.addf %189, %188 : vector<2x128xf32>
    %191 = arith.divf %189, %190 : vector<2x128xf32>
    %192 = vector.extract_strided_slice %181 {offsets = [0, 128], sizes = [2, 128], strides = [1, 1]} : vector<2x384xf32> to vector<2x128xf32>
    %193 = vector.extract_strided_slice %183 {offsets = [0, 128], sizes = [2, 128], strides = [1, 1]} : vector<2x384xf32> to vector<2x128xf32>
    %194 = arith.addf %192, %193 : vector<2x128xf32>
    %195 = arith.negf %194 : vector<2x128xf32>
    %196 = math.exp %195 : vector<2x128xf32>
    %cst_52 = arith.constant 1.000000e+00 : f32
    %197 = vector.broadcast %cst_52 : f32 to vector<2x128xf32>
    %198 = arith.addf %197, %196 : vector<2x128xf32>
    %199 = arith.divf %197, %198 : vector<2x128xf32>
    %200 = vector.extract_strided_slice %181 {offsets = [0, 256], sizes = [2, 128], strides = [1, 1]} : vector<2x384xf32> to vector<2x128xf32>
    %201 = vector.extract_strided_slice %183 {offsets = [0, 256], sizes = [2, 128], strides = [1, 1]} : vector<2x384xf32> to vector<2x128xf32>
    %202 = vector.broadcast %5 : vector<1x128xf32> to vector<2x128xf32>
    %203 = arith.addf %201, %202 : vector<2x128xf32>
    %204 = arith.mulf %191, %203 : vector<2x128xf32>
    %205 = arith.addf %200, %204 : vector<2x128xf32>
    %206 = math.tanh %205 : vector<2x128xf32>
    %cst_53 = arith.constant 1.000000e+00 : f32
    %207 = vector.broadcast %cst_53 : f32 to vector<2x128xf32>
    %208 = arith.subf %207, %199 : vector<2x128xf32>
    %209 = arith.mulf %208, %206 : vector<2x128xf32>
    %210 = arith.mulf %199, %174 : vector<2x128xf32>
    %211 = arith.addf %209, %210 : vector<2x128xf32>
    %c4_i32 = arith.constant 4 : i32
    %212 = vector.broadcast %c4_i32 : i32 to vector<2x1xi32>
    %213 = arith.cmpi sgt, %1, %212 : vector<2x1xi32>
    %214 = vector.shape_cast %213 : vector<2x1xi1> to vector<2x1xi1>
    %215 = vector.broadcast %214 : vector<2x1xi1> to vector<2x128xi1>
    %216 = arith.select %215, %211, %174 : vector<2x128xi1>, vector<2x128xf32>
    %cst_54 = arith.constant 0.000000e+00 : f32
    %217 = vector.shape_cast %213 : vector<2x1xi1> to vector<2x1xi1>
    %218 = vector.broadcast %217 : vector<2x1xi1> to vector<2x128xi1>
    %219 = vector.broadcast %cst_54 : f32 to vector<2x128xf32>
    %220 = arith.select %218, %211, %219 : vector<2x128xi1>, vector<2x128xf32>
    %221 = arith.truncf %220 : vector<2x128xf32> to vector<2x128xbf16>
    %c8_55 = arith.constant 8 : index
    %c0_56 = arith.constant 0 : index
    %222 = vector.load %arg14[%c8_55, %c0_56] : memref<16x128xbf16, #tpu.memory_space<vmem>>, vector<2x128xbf16>
    tpu.vector_store %arg14[%c8_55, %c0_56], %221 {strides = array<i32>} : memref<16x128xbf16, #tpu.memory_space<vmem>>, vector<2x128xbf16>,
    %c10 = arith.constant 10 : index
    %c0_57 = arith.constant 0 : index
    %223 = vector.load %arg13[%c10, %c0_57] : memref<16x384xf32, #tpu.memory_space<vmem>>, vector<2x384xf32>
    %224 = arith.truncf %216 : vector<2x128xf32> to vector<2x128xbf16>
    %cst_58 = arith.constant dense<0.000000e+00> : vector<2x384xf32>
    %225 = tpu.matmul %224, %3, %cst_58 {dimension_numbers = #tpu.dot_dimension_numbers<[1], [0], [0], [1], [0, 0, 1, 1], [], []>} : vector<2x128xbf16>, vector<128x384xbf16>, vector<2x384xf32> -> vector<2x384xf32>
    %226 = vector.extract_strided_slice %223 {offsets = [0, 0], sizes = [2, 128], strides = [1, 1]} : vector<2x384xf32> to vector<2x128xf32>
    %227 = vector.extract_strided_slice %225 {offsets = [0, 0], sizes = [2, 128], strides = [1, 1]} : vector<2x384xf32> to vector<2x128xf32>
    %228 = arith.addf %226, %227 : vector<2x128xf32>
    %229 = arith.negf %228 : vector<2x128xf32>
    %230 = math.exp %229 : vector<2x128xf32>
    %cst_59 = arith.constant 1.000000e+00 : f32
    %231 = vector.broadcast %cst_59 : f32 to vector<2x128xf32>
    %232 = arith.addf %231, %230 : vector<2x128xf32>
    %233 = arith.divf %231, %232 : vector<2x128xf32>
    %234 = vector.extract_strided_slice %223 {offsets = [0, 128], sizes = [2, 128], strides = [1, 1]} : vector<2x384xf32> to vector<2x128xf32>
    %235 = vector.extract_strided_slice %225 {offsets = [0, 128], sizes = [2, 128], strides = [1, 1]} : vector<2x384xf32> to vector<2x128xf32>
    %236 = arith.addf %234, %235 : vector<2x128xf32>
    %237 = arith.negf %236 : vector<2x128xf32>
    %238 = math.exp %237 : vector<2x128xf32>
    %cst_60 = arith.constant 1.000000e+00 : f32
    %239 = vector.broadcast %cst_60 : f32 to vector<2x128xf32>
    %240 = arith.addf %239, %238 : vector<2x128xf32>
    %241 = arith.divf %239, %240 : vector<2x128xf32>
    %242 = vector.extract_strided_slice %223 {offsets = [0, 256], sizes = [2, 128], strides = [1, 1]} : vector<2x384xf32> to vector<2x128xf32>
    %243 = vector.extract_strided_slice %225 {offsets = [0, 256], sizes = [2, 128], strides = [1, 1]} : vector<2x384xf32> to vector<2x128xf32>
    %244 = vector.broadcast %5 : vector<1x128xf32> to vector<2x128xf32>
    %245 = arith.addf %243, %244 : vector<2x128xf32>
    %246 = arith.mulf %233, %245 : vector<2x128xf32>
    %247 = arith.addf %242, %246 : vector<2x128xf32>
    %248 = math.tanh %247 : vector<2x128xf32>
    %cst_61 = arith.constant 1.000000e+00 : f32
    %249 = vector.broadcast %cst_61 : f32 to vector<2x128xf32>
    %250 = arith.subf %249, %241 : vector<2x128xf32>
    %251 = arith.mulf %250, %248 : vector<2x128xf32>
    %252 = arith.mulf %241, %216 : vector<2x128xf32>
    %253 = arith.addf %251, %252 : vector<2x128xf32>
    %c5_i32 = arith.constant 5 : i32
    %254 = vector.broadcast %c5_i32 : i32 to vector<2x1xi32>
    %255 = arith.cmpi sgt, %1, %254 : vector<2x1xi32>
    %256 = vector.shape_cast %255 : vector<2x1xi1> to vector<2x1xi1>
    %257 = vector.broadcast %256 : vector<2x1xi1> to vector<2x128xi1>
    %258 = arith.select %257, %253, %216 : vector<2x128xi1>, vector<2x128xf32>
    %cst_62 = arith.constant 0.000000e+00 : f32
    %259 = vector.shape_cast %255 : vector<2x1xi1> to vector<2x1xi1>
    %260 = vector.broadcast %259 : vector<2x1xi1> to vector<2x128xi1>
    %261 = vector.broadcast %cst_62 : f32 to vector<2x128xf32>
    %262 = arith.select %260, %253, %261 : vector<2x128xi1>, vector<2x128xf32>
    %263 = arith.truncf %262 : vector<2x128xf32> to vector<2x128xbf16>
    %c10_63 = arith.constant 10 : index
    %c0_64 = arith.constant 0 : index
    %264 = vector.load %arg14[%c10_63, %c0_64] : memref<16x128xbf16, #tpu.memory_space<vmem>>, vector<2x128xbf16>
    tpu.vector_store %arg14[%c10_63, %c0_64], %263 {strides = array<i32>} : memref<16x128xbf16, #tpu.memory_space<vmem>>, vector<2x128xbf16>,
    %c12 = arith.constant 12 : index
    %c0_65 = arith.constant 0 : index
    %265 = vector.load %arg13[%c12, %c0_65] : memref<16x384xf32, #tpu.memory_space<vmem>>, vector<2x384xf32>
    %266 = arith.truncf %258 : vector<2x128xf32> to vector<2x128xbf16>
    %cst_66 = arith.constant dense<0.000000e+00> : vector<2x384xf32>
    %267 = tpu.matmul %266, %3, %cst_66 {dimension_numbers = #tpu.dot_dimension_numbers<[1], [0], [0], [1], [0, 0, 1, 1], [], []>} : vector<2x128xbf16>, vector<128x384xbf16>, vector<2x384xf32> -> vector<2x384xf32>
    %268 = vector.extract_strided_slice %265 {offsets = [0, 0], sizes = [2, 128], strides = [1, 1]} : vector<2x384xf32> to vector<2x128xf32>
    %269 = vector.extract_strided_slice %267 {offsets = [0, 0], sizes = [2, 128], strides = [1, 1]} : vector<2x384xf32> to vector<2x128xf32>
    %270 = arith.addf %268, %269 : vector<2x128xf32>
    %271 = arith.negf %270 : vector<2x128xf32>
    %272 = math.exp %271 : vector<2x128xf32>
    %cst_67 = arith.constant 1.000000e+00 : f32
    %273 = vector.broadcast %cst_67 : f32 to vector<2x128xf32>
    %274 = arith.addf %273, %272 : vector<2x128xf32>
    %275 = arith.divf %273, %274 : vector<2x128xf32>
    %276 = vector.extract_strided_slice %265 {offsets = [0, 128], sizes = [2, 128], strides = [1, 1]} : vector<2x384xf32> to vector<2x128xf32>
    %277 = vector.extract_strided_slice %267 {offsets = [0, 128], sizes = [2, 128], strides = [1, 1]} : vector<2x384xf32> to vector<2x128xf32>
    %278 = arith.addf %276, %277 : vector<2x128xf32>
    %279 = arith.negf %278 : vector<2x128xf32>
    %280 = math.exp %279 : vector<2x128xf32>
    %cst_68 = arith.constant 1.000000e+00 : f32
    %281 = vector.broadcast %cst_68 : f32 to vector<2x128xf32>
    %282 = arith.addf %281, %280 : vector<2x128xf32>
    %283 = arith.divf %281, %282 : vector<2x128xf32>
    %284 = vector.extract_strided_slice %265 {offsets = [0, 256], sizes = [2, 128], strides = [1, 1]} : vector<2x384xf32> to vector<2x128xf32>
    %285 = vector.extract_strided_slice %267 {offsets = [0, 256], sizes = [2, 128], strides = [1, 1]} : vector<2x384xf32> to vector<2x128xf32>
    %286 = vector.broadcast %5 : vector<1x128xf32> to vector<2x128xf32>
    %287 = arith.addf %285, %286 : vector<2x128xf32>
    %288 = arith.mulf %275, %287 : vector<2x128xf32>
    %289 = arith.addf %284, %288 : vector<2x128xf32>
    %290 = math.tanh %289 : vector<2x128xf32>
    %cst_69 = arith.constant 1.000000e+00 : f32
    %291 = vector.broadcast %cst_69 : f32 to vector<2x128xf32>
    %292 = arith.subf %291, %283 : vector<2x128xf32>
    %293 = arith.mulf %292, %290 : vector<2x128xf32>
    %294 = arith.mulf %283, %258 : vector<2x128xf32>
    %295 = arith.addf %293, %294 : vector<2x128xf32>
    %c6_i32 = arith.constant 6 : i32
    %296 = vector.broadcast %c6_i32 : i32 to vector<2x1xi32>
    %297 = arith.cmpi sgt, %1, %296 : vector<2x1xi32>
    %298 = vector.shape_cast %297 : vector<2x1xi1> to vector<2x1xi1>
    %299 = vector.broadcast %298 : vector<2x1xi1> to vector<2x128xi1>
    %300 = arith.select %299, %295, %258 : vector<2x128xi1>, vector<2x128xf32>
    %cst_70 = arith.constant 0.000000e+00 : f32
    %301 = vector.shape_cast %297 : vector<2x1xi1> to vector<2x1xi1>
    %302 = vector.broadcast %301 : vector<2x1xi1> to vector<2x128xi1>
    %303 = vector.broadcast %cst_70 : f32 to vector<2x128xf32>
    %304 = arith.select %302, %295, %303 : vector<2x128xi1>, vector<2x128xf32>
    %305 = arith.truncf %304 : vector<2x128xf32> to vector<2x128xbf16>
    %c12_71 = arith.constant 12 : index
    %c0_72 = arith.constant 0 : index
    %306 = vector.load %arg14[%c12_71, %c0_72] : memref<16x128xbf16, #tpu.memory_space<vmem>>, vector<2x128xbf16>
    tpu.vector_store %arg14[%c12_71, %c0_72], %305 {strides = array<i32>} : memref<16x128xbf16, #tpu.memory_space<vmem>>, vector<2x128xbf16>,
    %c14 = arith.constant 14 : index
    %c0_73 = arith.constant 0 : index
    %307 = vector.load %arg13[%c14, %c0_73] : memref<16x384xf32, #tpu.memory_space<vmem>>, vector<2x384xf32>
    %308 = arith.truncf %300 : vector<2x128xf32> to vector<2x128xbf16>
    %cst_74 = arith.constant dense<0.000000e+00> : vector<2x384xf32>
    %309 = tpu.matmul %308, %3, %cst_74 {dimension_numbers = #tpu.dot_dimension_numbers<[1], [0], [0], [1], [0, 0, 1, 1], [], []>} : vector<2x128xbf16>, vector<128x384xbf16>, vector<2x384xf32> -> vector<2x384xf32>
    %310 = vector.extract_strided_slice %307 {offsets = [0, 0], sizes = [2, 128], strides = [1, 1]} : vector<2x384xf32> to vector<2x128xf32>
    %311 = vector.extract_strided_slice %309 {offsets = [0, 0], sizes = [2, 128], strides = [1, 1]} : vector<2x384xf32> to vector<2x128xf32>
    %312 = arith.addf %310, %311 : vector<2x128xf32>
    %313 = arith.negf %312 : vector<2x128xf32>
    %314 = math.exp %313 : vector<2x128xf32>
    %cst_75 = arith.constant 1.000000e+00 : f32
    %315 = vector.broadcast %cst_75 : f32 to vector<2x128xf32>
    %316 = arith.addf %315, %314 : vector<2x128xf32>
    %317 = arith.divf %315, %316 : vector<2x128xf32>
    %318 = vector.extract_strided_slice %307 {offsets = [0, 128], sizes = [2, 128], strides = [1, 1]} : vector<2x384xf32> to vector<2x128xf32>
    %319 = vector.extract_strided_slice %309 {offsets = [0, 128], sizes = [2, 128], strides = [1, 1]} : vector<2x384xf32> to vector<2x128xf32>
    %320 = arith.addf %318, %319 : vector<2x128xf32>
    %321 = arith.negf %320 : vector<2x128xf32>
    %322 = math.exp %321 : vector<2x128xf32>
    %cst_76 = arith.constant 1.000000e+00 : f32
    %323 = vector.broadcast %cst_76 : f32 to vector<2x128xf32>
    %324 = arith.addf %323, %322 : vector<2x128xf32>
    %325 = arith.divf %323, %324 : vector<2x128xf32>
    %326 = vector.extract_strided_slice %307 {offsets = [0, 256], sizes = [2, 128], strides = [1, 1]} : vector<2x384xf32> to vector<2x128xf32>
    %327 = vector.extract_strided_slice %309 {offsets = [0, 256], sizes = [2, 128], strides = [1, 1]} : vector<2x384xf32> to vector<2x128xf32>
    %328 = vector.broadcast %5 : vector<1x128xf32> to vector<2x128xf32>
    %329 = arith.addf %327, %328 : vector<2x128xf32>
    %330 = arith.mulf %317, %329 : vector<2x128xf32>
    %331 = arith.addf %326, %330 : vector<2x128xf32>
    %332 = math.tanh %331 : vector<2x128xf32>
    %cst_77 = arith.constant 1.000000e+00 : f32
    %333 = vector.broadcast %cst_77 : f32 to vector<2x128xf32>
    %334 = arith.subf %333, %325 : vector<2x128xf32>
    %335 = arith.mulf %334, %332 : vector<2x128xf32>
    %336 = arith.mulf %325, %300 : vector<2x128xf32>
    %337 = arith.addf %335, %336 : vector<2x128xf32>
    %c7_i32 = arith.constant 7 : i32
    %338 = vector.broadcast %c7_i32 : i32 to vector<2x1xi32>
    %339 = arith.cmpi sgt, %1, %338 : vector<2x1xi32>
    %340 = vector.shape_cast %339 : vector<2x1xi1> to vector<2x1xi1>
    %341 = vector.broadcast %340 : vector<2x1xi1> to vector<2x128xi1>
    %342 = arith.select %341, %337, %300 : vector<2x128xi1>, vector<2x128xf32>
    %cst_78 = arith.constant 0.000000e+00 : f32
    %343 = vector.shape_cast %339 : vector<2x1xi1> to vector<2x1xi1>
    %344 = vector.broadcast %343 : vector<2x1xi1> to vector<2x128xi1>
    %345 = vector.broadcast %cst_78 : f32 to vector<2x128xf32>
    %346 = arith.select %344, %337, %345 : vector<2x128xi1>, vector<2x128xf32>
    %347 = arith.truncf %346 : vector<2x128xf32> to vector<2x128xbf16>
    %c14_79 = arith.constant 14 : index
    %c0_80 = arith.constant 0 : index
    %348 = vector.load %arg14[%c14_79, %c0_80] : memref<16x128xbf16, #tpu.memory_space<vmem>>, vector<2x128xbf16>
    tpu.vector_store %arg14[%c14_79, %c0_80], %347 {strides = array<i32>} : memref<16x128xbf16, #tpu.memory_space<vmem>>, vector<2x128xbf16>,
    %c0_81 = arith.constant 0 : index
    %c0_82 = arith.constant 0 : index
    %c0_83 = arith.constant 0 : index
    %349 = vector.load %arg12[%c0_81, %c0_82, %c0_83] : memref<1x4x128xf32, #tpu.memory_space<vmem>>, vector<1x2x128xf32>
    %350 = vector.shape_cast %349 : vector<1x2x128xf32> to vector<2x128xf32>
    %351 = vector.shape_cast %342 : vector<2x128xf32> to vector<1x2x128xf32>
    tpu.vector_store %arg12[%c0_81, %c0_82, %c0_83], %351 {strides = array<i32>} : memref<1x4x128xf32, #tpu.memory_space<vmem>>, vector<1x2x128xf32>,
    %c0_84 = arith.constant 0 : index
    %c0_85 = arith.constant 0 : index
    %352 = vector.load %arg7[%c0_84, %c0_85] : memref<128x384xbf16, #tpu.memory_space<vmem>>, vector<128x384xbf16>
    %c0_86 = arith.constant 0 : index
    %c0_87 = arith.constant 0 : index
    %353 = vector.load %arg8[%c0_86, %c0_87] : memref<128x384xbf16, #tpu.memory_space<vmem>>, vector<128x384xbf16>
    %c0_88 = arith.constant 0 : index
    %c0_89 = arith.constant 0 : index
    %354 = vector.load %arg9[%c0_88, %c0_89] : memref<1x384xf32, #tpu.memory_space<vmem>>, vector<1x384xf32>
    %c0_90 = arith.constant 0 : index
    %c0_91 = arith.constant 0 : index
    %355 = vector.load %arg10[%c0_90, %c0_91] : memref<1x128xf32, #tpu.memory_space<vmem>>, vector<1x128xf32>
    %c0_92 = arith.constant 0 : index
    %c0_93 = arith.constant 0 : index
    %356 = vector.load %arg14[%c0_92, %c0_93] : memref<16x128xbf16, #tpu.memory_space<vmem>>, vector<16x128xbf16>
    %cst_94 = arith.constant dense<0.000000e+00> : vector<16x384xf32>
    %357 = tpu.matmul %356, %352, %cst_94 {dimension_numbers = #tpu.dot_dimension_numbers<[1], [0], [0], [1], [0, 0, 1, 1], [], []>} : vector<16x128xbf16>, vector<128x384xbf16>, vector<16x384xf32> -> vector<16x384xf32>
    %358 = vector.broadcast %354 : vector<1x384xf32> to vector<16x384xf32>
    %359 = arith.addf %357, %358 : vector<16x384xf32>
    %c0_95 = arith.constant 0 : index
    %c0_96 = arith.constant 0 : index
    %360 = vector.load %arg13[%c0_95, %c0_96] : memref<16x384xf32, #tpu.memory_space<vmem>>, vector<16x384xf32>
    tpu.vector_store %arg13[%c0_95, %c0_96], %359 {strides = array<i32>} : memref<16x384xf32, #tpu.memory_space<vmem>>, vector<16x384xf32>,
    %cst_97 = arith.constant 0.000000e+00 : f32
    %361 = vector.broadcast %cst_97 : f32 to vector<2x128xf32>
    %c0_98 = arith.constant 0 : index
    %c0_99 = arith.constant 0 : index
    %362 = vector.load %arg13[%c0_98, %c0_99] : memref<16x384xf32, #tpu.memory_space<vmem>>, vector<2x384xf32>
    %363 = arith.truncf %361 : vector<2x128xf32> to vector<2x128xbf16>
    %cst_100 = arith.constant dense<0.000000e+00> : vector<2x384xf32>
    %364 = tpu.matmul %363, %353, %cst_100 {dimension_numbers = #tpu.dot_dimension_numbers<[1], [0], [0], [1], [0, 0, 1, 1], [], []>} : vector<2x128xbf16>, vector<128x384xbf16>, vector<2x384xf32> -> vector<2x384xf32>
    %365 = vector.extract_strided_slice %362 {offsets = [0, 0], sizes = [2, 128], strides = [1, 1]} : vector<2x384xf32> to vector<2x128xf32>
    %366 = vector.extract_strided_slice %364 {offsets = [0, 0], sizes = [2, 128], strides = [1, 1]} : vector<2x384xf32> to vector<2x128xf32>
    %367 = arith.addf %365, %366 : vector<2x128xf32>
    %368 = arith.negf %367 : vector<2x128xf32>
    %369 = math.exp %368 : vector<2x128xf32>
    %cst_101 = arith.constant 1.000000e+00 : f32
    %370 = vector.broadcast %cst_101 : f32 to vector<2x128xf32>
    %371 = arith.addf %370, %369 : vector<2x128xf32>
    %372 = arith.divf %370, %371 : vector<2x128xf32>
    %373 = vector.extract_strided_slice %362 {offsets = [0, 128], sizes = [2, 128], strides = [1, 1]} : vector<2x384xf32> to vector<2x128xf32>
    %374 = vector.extract_strided_slice %364 {offsets = [0, 128], sizes = [2, 128], strides = [1, 1]} : vector<2x384xf32> to vector<2x128xf32>
    %375 = arith.addf %373, %374 : vector<2x128xf32>
    %376 = arith.negf %375 : vector<2x128xf32>
    %377 = math.exp %376 : vector<2x128xf32>
    %cst_102 = arith.constant 1.000000e+00 : f32
    %378 = vector.broadcast %cst_102 : f32 to vector<2x128xf32>
    %379 = arith.addf %378, %377 : vector<2x128xf32>
    %380 = arith.divf %378, %379 : vector<2x128xf32>
    %381 = vector.extract_strided_slice %362 {offsets = [0, 256], sizes = [2, 128], strides = [1, 1]} : vector<2x384xf32> to vector<2x128xf32>
    %382 = vector.extract_strided_slice %364 {offsets = [0, 256], sizes = [2, 128], strides = [1, 1]} : vector<2x384xf32> to vector<2x128xf32>
    %383 = vector.broadcast %355 : vector<1x128xf32> to vector<2x128xf32>
    %384 = arith.addf %382, %383 : vector<2x128xf32>
    %385 = arith.mulf %372, %384 : vector<2x128xf32>
    %386 = arith.addf %381, %385 : vector<2x128xf32>
    %387 = math.tanh %386 : vector<2x128xf32>
    %cst_103 = arith.constant 1.000000e+00 : f32
    %388 = vector.broadcast %cst_103 : f32 to vector<2x128xf32>
    %389 = arith.subf %388, %380 : vector<2x128xf32>
    %390 = arith.mulf %389, %387 : vector<2x128xf32>
    %391 = arith.mulf %380, %361 : vector<2x128xf32>
    %392 = arith.addf %390, %391 : vector<2x128xf32>
    %c0_i32_104 = arith.constant 0 : i32
    %393 = vector.broadcast %c0_i32_104 : i32 to vector<2x1xi32>
    %394 = arith.cmpi sgt, %1, %393 : vector<2x1xi32>
    %395 = vector.shape_cast %394 : vector<2x1xi1> to vector<2x1xi1>
    %396 = vector.broadcast %395 : vector<2x1xi1> to vector<2x128xi1>
    %397 = arith.select %396, %392, %361 : vector<2x128xi1>, vector<2x128xf32>
    %cst_105 = arith.constant 0.000000e+00 : f32
    %398 = vector.shape_cast %394 : vector<2x1xi1> to vector<2x1xi1>
    %399 = vector.broadcast %398 : vector<2x1xi1> to vector<2x128xi1>
    %400 = vector.broadcast %cst_105 : f32 to vector<2x128xf32>
    %401 = arith.select %399, %392, %400 : vector<2x128xi1>, vector<2x128xf32>
    %402 = arith.truncf %401 : vector<2x128xf32> to vector<2x128xbf16>
    %c0_106 = arith.constant 0 : index
    %c0_107 = arith.constant 0 : index
    %c0_108 = arith.constant 0 : index
    %403 = vector.load %arg11[%c0_106, %c0_107, %c0_108] : memref<1x16x128xbf16, #tpu.memory_space<vmem>>, vector<1x2x128xbf16>
    %404 = vector.shape_cast %403 : vector<1x2x128xbf16> to vector<2x128xbf16>
    %405 = vector.shape_cast %402 : vector<2x128xbf16> to vector<1x2x128xbf16>
    tpu.vector_store %arg11[%c0_106, %c0_107, %c0_108], %405 {strides = array<i32>} : memref<1x16x128xbf16, #tpu.memory_space<vmem>>, vector<1x2x128xbf16>,
    %c2_109 = arith.constant 2 : index
    %c0_110 = arith.constant 0 : index
    %406 = vector.load %arg13[%c2_109, %c0_110] : memref<16x384xf32, #tpu.memory_space<vmem>>, vector<2x384xf32>
    %407 = arith.truncf %397 : vector<2x128xf32> to vector<2x128xbf16>
    %cst_111 = arith.constant dense<0.000000e+00> : vector<2x384xf32>
    %408 = tpu.matmul %407, %353, %cst_111 {dimension_numbers = #tpu.dot_dimension_numbers<[1], [0], [0], [1], [0, 0, 1, 1], [], []>} : vector<2x128xbf16>, vector<128x384xbf16>, vector<2x384xf32> -> vector<2x384xf32>
    %409 = vector.extract_strided_slice %406 {offsets = [0, 0], sizes = [2, 128], strides = [1, 1]} : vector<2x384xf32> to vector<2x128xf32>
    %410 = vector.extract_strided_slice %408 {offsets = [0, 0], sizes = [2, 128], strides = [1, 1]} : vector<2x384xf32> to vector<2x128xf32>
    %411 = arith.addf %409, %410 : vector<2x128xf32>
    %412 = arith.negf %411 : vector<2x128xf32>
    %413 = math.exp %412 : vector<2x128xf32>
    %cst_112 = arith.constant 1.000000e+00 : f32
    %414 = vector.broadcast %cst_112 : f32 to vector<2x128xf32>
    %415 = arith.addf %414, %413 : vector<2x128xf32>
    %416 = arith.divf %414, %415 : vector<2x128xf32>
    %417 = vector.extract_strided_slice %406 {offsets = [0, 128], sizes = [2, 128], strides = [1, 1]} : vector<2x384xf32> to vector<2x128xf32>
    %418 = vector.extract_strided_slice %408 {offsets = [0, 128], sizes = [2, 128], strides = [1, 1]} : vector<2x384xf32> to vector<2x128xf32>
    %419 = arith.addf %417, %418 : vector<2x128xf32>
    %420 = arith.negf %419 : vector<2x128xf32>
    %421 = math.exp %420 : vector<2x128xf32>
    %cst_113 = arith.constant 1.000000e+00 : f32
    %422 = vector.broadcast %cst_113 : f32 to vector<2x128xf32>
    %423 = arith.addf %422, %421 : vector<2x128xf32>
    %424 = arith.divf %422, %423 : vector<2x128xf32>
    %425 = vector.extract_strided_slice %406 {offsets = [0, 256], sizes = [2, 128], strides = [1, 1]} : vector<2x384xf32> to vector<2x128xf32>
    %426 = vector.extract_strided_slice %408 {offsets = [0, 256], sizes = [2, 128], strides = [1, 1]} : vector<2x384xf32> to vector<2x128xf32>
    %427 = vector.broadcast %355 : vector<1x128xf32> to vector<2x128xf32>
    %428 = arith.addf %426, %427 : vector<2x128xf32>
    %429 = arith.mulf %416, %428 : vector<2x128xf32>
    %430 = arith.addf %425, %429 : vector<2x128xf32>
    %431 = math.tanh %430 : vector<2x128xf32>
    %cst_114 = arith.constant 1.000000e+00 : f32
    %432 = vector.broadcast %cst_114 : f32 to vector<2x128xf32>
    %433 = arith.subf %432, %424 : vector<2x128xf32>
    %434 = arith.mulf %433, %431 : vector<2x128xf32>
    %435 = arith.mulf %424, %397 : vector<2x128xf32>
    %436 = arith.addf %434, %435 : vector<2x128xf32>
    %c1_i32_115 = arith.constant 1 : i32
    %437 = vector.broadcast %c1_i32_115 : i32 to vector<2x1xi32>
    %438 = arith.cmpi sgt, %1, %437 : vector<2x1xi32>
    %439 = vector.shape_cast %438 : vector<2x1xi1> to vector<2x1xi1>
    %440 = vector.broadcast %439 : vector<2x1xi1> to vector<2x128xi1>
    %441 = arith.select %440, %436, %397 : vector<2x128xi1>, vector<2x128xf32>
    %cst_116 = arith.constant 0.000000e+00 : f32
    %442 = vector.shape_cast %438 : vector<2x1xi1> to vector<2x1xi1>
    %443 = vector.broadcast %442 : vector<2x1xi1> to vector<2x128xi1>
    %444 = vector.broadcast %cst_116 : f32 to vector<2x128xf32>
    %445 = arith.select %443, %436, %444 : vector<2x128xi1>, vector<2x128xf32>
    %446 = arith.truncf %445 : vector<2x128xf32> to vector<2x128xbf16>
    %c0_117 = arith.constant 0 : index
    %c2_118 = arith.constant 2 : index
    %c0_119 = arith.constant 0 : index
    %447 = vector.load %arg11[%c0_117, %c2_118, %c0_119] : memref<1x16x128xbf16, #tpu.memory_space<vmem>>, vector<1x2x128xbf16>
    %448 = vector.shape_cast %447 : vector<1x2x128xbf16> to vector<2x128xbf16>
    %449 = vector.shape_cast %446 : vector<2x128xbf16> to vector<1x2x128xbf16>
    tpu.vector_store %arg11[%c0_117, %c2_118, %c0_119], %449 {strides = array<i32>} : memref<1x16x128xbf16, #tpu.memory_space<vmem>>, vector<1x2x128xbf16>,
    %c4_120 = arith.constant 4 : index
    %c0_121 = arith.constant 0 : index
    %450 = vector.load %arg13[%c4_120, %c0_121] : memref<16x384xf32, #tpu.memory_space<vmem>>, vector<2x384xf32>
    %451 = arith.truncf %441 : vector<2x128xf32> to vector<2x128xbf16>
    %cst_122 = arith.constant dense<0.000000e+00> : vector<2x384xf32>
    %452 = tpu.matmul %451, %353, %cst_122 {dimension_numbers = #tpu.dot_dimension_numbers<[1], [0], [0], [1], [0, 0, 1, 1], [], []>} : vector<2x128xbf16>, vector<128x384xbf16>, vector<2x384xf32> -> vector<2x384xf32>
    %453 = vector.extract_strided_slice %450 {offsets = [0, 0], sizes = [2, 128], strides = [1, 1]} : vector<2x384xf32> to vector<2x128xf32>
    %454 = vector.extract_strided_slice %452 {offsets = [0, 0], sizes = [2, 128], strides = [1, 1]} : vector<2x384xf32> to vector<2x128xf32>
    %455 = arith.addf %453, %454 : vector<2x128xf32>
    %456 = arith.negf %455 : vector<2x128xf32>
    %457 = math.exp %456 : vector<2x128xf32>
    %cst_123 = arith.constant 1.000000e+00 : f32
    %458 = vector.broadcast %cst_123 : f32 to vector<2x128xf32>
    %459 = arith.addf %458, %457 : vector<2x128xf32>
    %460 = arith.divf %458, %459 : vector<2x128xf32>
    %461 = vector.extract_strided_slice %450 {offsets = [0, 128], sizes = [2, 128], strides = [1, 1]} : vector<2x384xf32> to vector<2x128xf32>
    %462 = vector.extract_strided_slice %452 {offsets = [0, 128], sizes = [2, 128], strides = [1, 1]} : vector<2x384xf32> to vector<2x128xf32>
    %463 = arith.addf %461, %462 : vector<2x128xf32>
    %464 = arith.negf %463 : vector<2x128xf32>
    %465 = math.exp %464 : vector<2x128xf32>
    %cst_124 = arith.constant 1.000000e+00 : f32
    %466 = vector.broadcast %cst_124 : f32 to vector<2x128xf32>
    %467 = arith.addf %466, %465 : vector<2x128xf32>
    %468 = arith.divf %466, %467 : vector<2x128xf32>
    %469 = vector.extract_strided_slice %450 {offsets = [0, 256], sizes = [2, 128], strides = [1, 1]} : vector<2x384xf32> to vector<2x128xf32>
    %470 = vector.extract_strided_slice %452 {offsets = [0, 256], sizes = [2, 128], strides = [1, 1]} : vector<2x384xf32> to vector<2x128xf32>
    %471 = vector.broadcast %355 : vector<1x128xf32> to vector<2x128xf32>
    %472 = arith.addf %470, %471 : vector<2x128xf32>
    %473 = arith.mulf %460, %472 : vector<2x128xf32>
    %474 = arith.addf %469, %473 : vector<2x128xf32>
    %475 = math.tanh %474 : vector<2x128xf32>
    %cst_125 = arith.constant 1.000000e+00 : f32
    %476 = vector.broadcast %cst_125 : f32 to vector<2x128xf32>
    %477 = arith.subf %476, %468 : vector<2x128xf32>
    %478 = arith.mulf %477, %475 : vector<2x128xf32>
    %479 = arith.mulf %468, %441 : vector<2x128xf32>
    %480 = arith.addf %478, %479 : vector<2x128xf32>
    %c2_i32_126 = arith.constant 2 : i32
    %481 = vector.broadcast %c2_i32_126 : i32 to vector<2x1xi32>
    %482 = arith.cmpi sgt, %1, %481 : vector<2x1xi32>
    %483 = vector.shape_cast %482 : vector<2x1xi1> to vector<2x1xi1>
    %484 = vector.broadcast %483 : vector<2x1xi1> to vector<2x128xi1>
    %485 = arith.select %484, %480, %441 : vector<2x128xi1>, vector<2x128xf32>
    %cst_127 = arith.constant 0.000000e+00 : f32
    %486 = vector.shape_cast %482 : vector<2x1xi1> to vector<2x1xi1>
    %487 = vector.broadcast %486 : vector<2x1xi1> to vector<2x128xi1>
    %488 = vector.broadcast %cst_127 : f32 to vector<2x128xf32>
    %489 = arith.select %487, %480, %488 : vector<2x128xi1>, vector<2x128xf32>
    %490 = arith.truncf %489 : vector<2x128xf32> to vector<2x128xbf16>
    %c0_128 = arith.constant 0 : index
    %c4_129 = arith.constant 4 : index
    %c0_130 = arith.constant 0 : index
    %491 = vector.load %arg11[%c0_128, %c4_129, %c0_130] : memref<1x16x128xbf16, #tpu.memory_space<vmem>>, vector<1x2x128xbf16>
    %492 = vector.shape_cast %491 : vector<1x2x128xbf16> to vector<2x128xbf16>
    %493 = vector.shape_cast %490 : vector<2x128xbf16> to vector<1x2x128xbf16>
    tpu.vector_store %arg11[%c0_128, %c4_129, %c0_130], %493 {strides = array<i32>} : memref<1x16x128xbf16, #tpu.memory_space<vmem>>, vector<1x2x128xbf16>,
    %c6_131 = arith.constant 6 : index
    %c0_132 = arith.constant 0 : index
    %494 = vector.load %arg13[%c6_131, %c0_132] : memref<16x384xf32, #tpu.memory_space<vmem>>, vector<2x384xf32>
    %495 = arith.truncf %485 : vector<2x128xf32> to vector<2x128xbf16>
    %cst_133 = arith.constant dense<0.000000e+00> : vector<2x384xf32>
    %496 = tpu.matmul %495, %353, %cst_133 {dimension_numbers = #tpu.dot_dimension_numbers<[1], [0], [0], [1], [0, 0, 1, 1], [], []>} : vector<2x128xbf16>, vector<128x384xbf16>, vector<2x384xf32> -> vector<2x384xf32>
    %497 = vector.extract_strided_slice %494 {offsets = [0, 0], sizes = [2, 128], strides = [1, 1]} : vector<2x384xf32> to vector<2x128xf32>
    %498 = vector.extract_strided_slice %496 {offsets = [0, 0], sizes = [2, 128], strides = [1, 1]} : vector<2x384xf32> to vector<2x128xf32>
    %499 = arith.addf %497, %498 : vector<2x128xf32>
    %500 = arith.negf %499 : vector<2x128xf32>
    %501 = math.exp %500 : vector<2x128xf32>
    %cst_134 = arith.constant 1.000000e+00 : f32
    %502 = vector.broadcast %cst_134 : f32 to vector<2x128xf32>
    %503 = arith.addf %502, %501 : vector<2x128xf32>
    %504 = arith.divf %502, %503 : vector<2x128xf32>
    %505 = vector.extract_strided_slice %494 {offsets = [0, 128], sizes = [2, 128], strides = [1, 1]} : vector<2x384xf32> to vector<2x128xf32>
    %506 = vector.extract_strided_slice %496 {offsets = [0, 128], sizes = [2, 128], strides = [1, 1]} : vector<2x384xf32> to vector<2x128xf32>
    %507 = arith.addf %505, %506 : vector<2x128xf32>
    %508 = arith.negf %507 : vector<2x128xf32>
    %509 = math.exp %508 : vector<2x128xf32>
    %cst_135 = arith.constant 1.000000e+00 : f32
    %510 = vector.broadcast %cst_135 : f32 to vector<2x128xf32>
    %511 = arith.addf %510, %509 : vector<2x128xf32>
    %512 = arith.divf %510, %511 : vector<2x128xf32>
    %513 = vector.extract_strided_slice %494 {offsets = [0, 256], sizes = [2, 128], strides = [1, 1]} : vector<2x384xf32> to vector<2x128xf32>
    %514 = vector.extract_strided_slice %496 {offsets = [0, 256], sizes = [2, 128], strides = [1, 1]} : vector<2x384xf32> to vector<2x128xf32>
    %515 = vector.broadcast %355 : vector<1x128xf32> to vector<2x128xf32>
    %516 = arith.addf %514, %515 : vector<2x128xf32>
    %517 = arith.mulf %504, %516 : vector<2x128xf32>
    %518 = arith.addf %513, %517 : vector<2x128xf32>
    %519 = math.tanh %518 : vector<2x128xf32>
    %cst_136 = arith.constant 1.000000e+00 : f32
    %520 = vector.broadcast %cst_136 : f32 to vector<2x128xf32>
    %521 = arith.subf %520, %512 : vector<2x128xf32>
    %522 = arith.mulf %521, %519 : vector<2x128xf32>
    %523 = arith.mulf %512, %485 : vector<2x128xf32>
    %524 = arith.addf %522, %523 : vector<2x128xf32>
    %c3_i32_137 = arith.constant 3 : i32
    %525 = vector.broadcast %c3_i32_137 : i32 to vector<2x1xi32>
    %526 = arith.cmpi sgt, %1, %525 : vector<2x1xi32>
    %527 = vector.shape_cast %526 : vector<2x1xi1> to vector<2x1xi1>
    %528 = vector.broadcast %527 : vector<2x1xi1> to vector<2x128xi1>
    %529 = arith.select %528, %524, %485 : vector<2x128xi1>, vector<2x128xf32>
    %cst_138 = arith.constant 0.000000e+00 : f32
    %530 = vector.shape_cast %526 : vector<2x1xi1> to vector<2x1xi1>
    %531 = vector.broadcast %530 : vector<2x1xi1> to vector<2x128xi1>
    %532 = vector.broadcast %cst_138 : f32 to vector<2x128xf32>
    %533 = arith.select %531, %524, %532 : vector<2x128xi1>, vector<2x128xf32>
    %534 = arith.truncf %533 : vector<2x128xf32> to vector<2x128xbf16>
    %c0_139 = arith.constant 0 : index
    %c6_140 = arith.constant 6 : index
    %c0_141 = arith.constant 0 : index
    %535 = vector.load %arg11[%c0_139, %c6_140, %c0_141] : memref<1x16x128xbf16, #tpu.memory_space<vmem>>, vector<1x2x128xbf16>
    %536 = vector.shape_cast %535 : vector<1x2x128xbf16> to vector<2x128xbf16>
    %537 = vector.shape_cast %534 : vector<2x128xbf16> to vector<1x2x128xbf16>
    tpu.vector_store %arg11[%c0_139, %c6_140, %c0_141], %537 {strides = array<i32>} : memref<1x16x128xbf16, #tpu.memory_space<vmem>>, vector<1x2x128xbf16>,
    %c8_142 = arith.constant 8 : index
    %c0_143 = arith.constant 0 : index
    %538 = vector.load %arg13[%c8_142, %c0_143] : memref<16x384xf32, #tpu.memory_space<vmem>>, vector<2x384xf32>
    %539 = arith.truncf %529 : vector<2x128xf32> to vector<2x128xbf16>
    %cst_144 = arith.constant dense<0.000000e+00> : vector<2x384xf32>
    %540 = tpu.matmul %539, %353, %cst_144 {dimension_numbers = #tpu.dot_dimension_numbers<[1], [0], [0], [1], [0, 0, 1, 1], [], []>} : vector<2x128xbf16>, vector<128x384xbf16>, vector<2x384xf32> -> vector<2x384xf32>
    %541 = vector.extract_strided_slice %538 {offsets = [0, 0], sizes = [2, 128], strides = [1, 1]} : vector<2x384xf32> to vector<2x128xf32>
    %542 = vector.extract_strided_slice %540 {offsets = [0, 0], sizes = [2, 128], strides = [1, 1]} : vector<2x384xf32> to vector<2x128xf32>
    %543 = arith.addf %541, %542 : vector<2x128xf32>
    %544 = arith.negf %543 : vector<2x128xf32>
    %545 = math.exp %544 : vector<2x128xf32>
    %cst_145 = arith.constant 1.000000e+00 : f32
    %546 = vector.broadcast %cst_145 : f32 to vector<2x128xf32>
    %547 = arith.addf %546, %545 : vector<2x128xf32>
    %548 = arith.divf %546, %547 : vector<2x128xf32>
    %549 = vector.extract_strided_slice %538 {offsets = [0, 128], sizes = [2, 128], strides = [1, 1]} : vector<2x384xf32> to vector<2x128xf32>
    %550 = vector.extract_strided_slice %540 {offsets = [0, 128], sizes = [2, 128], strides = [1, 1]} : vector<2x384xf32> to vector<2x128xf32>
    %551 = arith.addf %549, %550 : vector<2x128xf32>
    %552 = arith.negf %551 : vector<2x128xf32>
    %553 = math.exp %552 : vector<2x128xf32>
    %cst_146 = arith.constant 1.000000e+00 : f32
    %554 = vector.broadcast %cst_146 : f32 to vector<2x128xf32>
    %555 = arith.addf %554, %553 : vector<2x128xf32>
    %556 = arith.divf %554, %555 : vector<2x128xf32>
    %557 = vector.extract_strided_slice %538 {offsets = [0, 256], sizes = [2, 128], strides = [1, 1]} : vector<2x384xf32> to vector<2x128xf32>
    %558 = vector.extract_strided_slice %540 {offsets = [0, 256], sizes = [2, 128], strides = [1, 1]} : vector<2x384xf32> to vector<2x128xf32>
    %559 = vector.broadcast %355 : vector<1x128xf32> to vector<2x128xf32>
    %560 = arith.addf %558, %559 : vector<2x128xf32>
    %561 = arith.mulf %548, %560 : vector<2x128xf32>
    %562 = arith.addf %557, %561 : vector<2x128xf32>
    %563 = math.tanh %562 : vector<2x128xf32>
    %cst_147 = arith.constant 1.000000e+00 : f32
    %564 = vector.broadcast %cst_147 : f32 to vector<2x128xf32>
    %565 = arith.subf %564, %556 : vector<2x128xf32>
    %566 = arith.mulf %565, %563 : vector<2x128xf32>
    %567 = arith.mulf %556, %529 : vector<2x128xf32>
    %568 = arith.addf %566, %567 : vector<2x128xf32>
    %c4_i32_148 = arith.constant 4 : i32
    %569 = vector.broadcast %c4_i32_148 : i32 to vector<2x1xi32>
    %570 = arith.cmpi sgt, %1, %569 : vector<2x1xi32>
    %571 = vector.shape_cast %570 : vector<2x1xi1> to vector<2x1xi1>
    %572 = vector.broadcast %571 : vector<2x1xi1> to vector<2x128xi1>
    %573 = arith.select %572, %568, %529 : vector<2x128xi1>, vector<2x128xf32>
    %cst_149 = arith.constant 0.000000e+00 : f32
    %574 = vector.shape_cast %570 : vector<2x1xi1> to vector<2x1xi1>
    %575 = vector.broadcast %574 : vector<2x1xi1> to vector<2x128xi1>
    %576 = vector.broadcast %cst_149 : f32 to vector<2x128xf32>
    %577 = arith.select %575, %568, %576 : vector<2x128xi1>, vector<2x128xf32>
    %578 = arith.truncf %577 : vector<2x128xf32> to vector<2x128xbf16>
    %c0_150 = arith.constant 0 : index
    %c8_151 = arith.constant 8 : index
    %c0_152 = arith.constant 0 : index
    %579 = vector.load %arg11[%c0_150, %c8_151, %c0_152] : memref<1x16x128xbf16, #tpu.memory_space<vmem>>, vector<1x2x128xbf16>
    %580 = vector.shape_cast %579 : vector<1x2x128xbf16> to vector<2x128xbf16>
    %581 = vector.shape_cast %578 : vector<2x128xbf16> to vector<1x2x128xbf16>
    tpu.vector_store %arg11[%c0_150, %c8_151, %c0_152], %581 {strides = array<i32>} : memref<1x16x128xbf16, #tpu.memory_space<vmem>>, vector<1x2x128xbf16>,
    %c10_153 = arith.constant 10 : index
    %c0_154 = arith.constant 0 : index
    %582 = vector.load %arg13[%c10_153, %c0_154] : memref<16x384xf32, #tpu.memory_space<vmem>>, vector<2x384xf32>
    %583 = arith.truncf %573 : vector<2x128xf32> to vector<2x128xbf16>
    %cst_155 = arith.constant dense<0.000000e+00> : vector<2x384xf32>
    %584 = tpu.matmul %583, %353, %cst_155 {dimension_numbers = #tpu.dot_dimension_numbers<[1], [0], [0], [1], [0, 0, 1, 1], [], []>} : vector<2x128xbf16>, vector<128x384xbf16>, vector<2x384xf32> -> vector<2x384xf32>
    %585 = vector.extract_strided_slice %582 {offsets = [0, 0], sizes = [2, 128], strides = [1, 1]} : vector<2x384xf32> to vector<2x128xf32>
    %586 = vector.extract_strided_slice %584 {offsets = [0, 0], sizes = [2, 128], strides = [1, 1]} : vector<2x384xf32> to vector<2x128xf32>
    %587 = arith.addf %585, %586 : vector<2x128xf32>
    %588 = arith.negf %587 : vector<2x128xf32>
    %589 = math.exp %588 : vector<2x128xf32>
    %cst_156 = arith.constant 1.000000e+00 : f32
    %590 = vector.broadcast %cst_156 : f32 to vector<2x128xf32>
    %591 = arith.addf %590, %589 : vector<2x128xf32>
    %592 = arith.divf %590, %591 : vector<2x128xf32>
    %593 = vector.extract_strided_slice %582 {offsets = [0, 128], sizes = [2, 128], strides = [1, 1]} : vector<2x384xf32> to vector<2x128xf32>
    %594 = vector.extract_strided_slice %584 {offsets = [0, 128], sizes = [2, 128], strides = [1, 1]} : vector<2x384xf32> to vector<2x128xf32>
    %595 = arith.addf %593, %594 : vector<2x128xf32>
    %596 = arith.negf %595 : vector<2x128xf32>
    %597 = math.exp %596 : vector<2x128xf32>
    %cst_157 = arith.constant 1.000000e+00 : f32
    %598 = vector.broadcast %cst_157 : f32 to vector<2x128xf32>
    %599 = arith.addf %598, %597 : vector<2x128xf32>
    %600 = arith.divf %598, %599 : vector<2x128xf32>
    %601 = vector.extract_strided_slice %582 {offsets = [0, 256], sizes = [2, 128], strides = [1, 1]} : vector<2x384xf32> to vector<2x128xf32>
    %602 = vector.extract_strided_slice %584 {offsets = [0, 256], sizes = [2, 128], strides = [1, 1]} : vector<2x384xf32> to vector<2x128xf32>
    %603 = vector.broadcast %355 : vector<1x128xf32> to vector<2x128xf32>
    %604 = arith.addf %602, %603 : vector<2x128xf32>
    %605 = arith.mulf %592, %604 : vector<2x128xf32>
    %606 = arith.addf %601, %605 : vector<2x128xf32>
    %607 = math.tanh %606 : vector<2x128xf32>
    %cst_158 = arith.constant 1.000000e+00 : f32
    %608 = vector.broadcast %cst_158 : f32 to vector<2x128xf32>
    %609 = arith.subf %608, %600 : vector<2x128xf32>
    %610 = arith.mulf %609, %607 : vector<2x128xf32>
    %611 = arith.mulf %600, %573 : vector<2x128xf32>
    %612 = arith.addf %610, %611 : vector<2x128xf32>
    %c5_i32_159 = arith.constant 5 : i32
    %613 = vector.broadcast %c5_i32_159 : i32 to vector<2x1xi32>
    %614 = arith.cmpi sgt, %1, %613 : vector<2x1xi32>
    %615 = vector.shape_cast %614 : vector<2x1xi1> to vector<2x1xi1>
    %616 = vector.broadcast %615 : vector<2x1xi1> to vector<2x128xi1>
    %617 = arith.select %616, %612, %573 : vector<2x128xi1>, vector<2x128xf32>
    %cst_160 = arith.constant 0.000000e+00 : f32
    %618 = vector.shape_cast %614 : vector<2x1xi1> to vector<2x1xi1>
    %619 = vector.broadcast %618 : vector<2x1xi1> to vector<2x128xi1>
    %620 = vector.broadcast %cst_160 : f32 to vector<2x128xf32>
    %621 = arith.select %619, %612, %620 : vector<2x128xi1>, vector<2x128xf32>
    %622 = arith.truncf %621 : vector<2x128xf32> to vector<2x128xbf16>
    %c0_161 = arith.constant 0 : index
    %c10_162 = arith.constant 10 : index
    %c0_163 = arith.constant 0 : index
    %623 = vector.load %arg11[%c0_161, %c10_162, %c0_163] : memref<1x16x128xbf16, #tpu.memory_space<vmem>>, vector<1x2x128xbf16>
    %624 = vector.shape_cast %623 : vector<1x2x128xbf16> to vector<2x128xbf16>
    %625 = vector.shape_cast %622 : vector<2x128xbf16> to vector<1x2x128xbf16>
    tpu.vector_store %arg11[%c0_161, %c10_162, %c0_163], %625 {strides = array<i32>} : memref<1x16x128xbf16, #tpu.memory_space<vmem>>, vector<1x2x128xbf16>,
    %c12_164 = arith.constant 12 : index
    %c0_165 = arith.constant 0 : index
    %626 = vector.load %arg13[%c12_164, %c0_165] : memref<16x384xf32, #tpu.memory_space<vmem>>, vector<2x384xf32>
    %627 = arith.truncf %617 : vector<2x128xf32> to vector<2x128xbf16>
    %cst_166 = arith.constant dense<0.000000e+00> : vector<2x384xf32>
    %628 = tpu.matmul %627, %353, %cst_166 {dimension_numbers = #tpu.dot_dimension_numbers<[1], [0], [0], [1], [0, 0, 1, 1], [], []>} : vector<2x128xbf16>, vector<128x384xbf16>, vector<2x384xf32> -> vector<2x384xf32>
    %629 = vector.extract_strided_slice %626 {offsets = [0, 0], sizes = [2, 128], strides = [1, 1]} : vector<2x384xf32> to vector<2x128xf32>
    %630 = vector.extract_strided_slice %628 {offsets = [0, 0], sizes = [2, 128], strides = [1, 1]} : vector<2x384xf32> to vector<2x128xf32>
    %631 = arith.addf %629, %630 : vector<2x128xf32>
    %632 = arith.negf %631 : vector<2x128xf32>
    %633 = math.exp %632 : vector<2x128xf32>
    %cst_167 = arith.constant 1.000000e+00 : f32
    %634 = vector.broadcast %cst_167 : f32 to vector<2x128xf32>
    %635 = arith.addf %634, %633 : vector<2x128xf32>
    %636 = arith.divf %634, %635 : vector<2x128xf32>
    %637 = vector.extract_strided_slice %626 {offsets = [0, 128], sizes = [2, 128], strides = [1, 1]} : vector<2x384xf32> to vector<2x128xf32>
    %638 = vector.extract_strided_slice %628 {offsets = [0, 128], sizes = [2, 128], strides = [1, 1]} : vector<2x384xf32> to vector<2x128xf32>
    %639 = arith.addf %637, %638 : vector<2x128xf32>
    %640 = arith.negf %639 : vector<2x128xf32>
    %641 = math.exp %640 : vector<2x128xf32>
    %cst_168 = arith.constant 1.000000e+00 : f32
    %642 = vector.broadcast %cst_168 : f32 to vector<2x128xf32>
    %643 = arith.addf %642, %641 : vector<2x128xf32>
    %644 = arith.divf %642, %643 : vector<2x128xf32>
    %645 = vector.extract_strided_slice %626 {offsets = [0, 256], sizes = [2, 128], strides = [1, 1]} : vector<2x384xf32> to vector<2x128xf32>
    %646 = vector.extract_strided_slice %628 {offsets = [0, 256], sizes = [2, 128], strides = [1, 1]} : vector<2x384xf32> to vector<2x128xf32>
    %647 = vector.broadcast %355 : vector<1x128xf32> to vector<2x128xf32>
    %648 = arith.addf %646, %647 : vector<2x128xf32>
    %649 = arith.mulf %636, %648 : vector<2x128xf32>
    %650 = arith.addf %645, %649 : vector<2x128xf32>
    %651 = math.tanh %650 : vector<2x128xf32>
    %cst_169 = arith.constant 1.000000e+00 : f32
    %652 = vector.broadcast %cst_169 : f32 to vector<2x128xf32>
    %653 = arith.subf %652, %644 : vector<2x128xf32>
    %654 = arith.mulf %653, %651 : vector<2x128xf32>
    %655 = arith.mulf %644, %617 : vector<2x128xf32>
    %656 = arith.addf %654, %655 : vector<2x128xf32>
    %c6_i32_170 = arith.constant 6 : i32
    %657 = vector.broadcast %c6_i32_170 : i32 to vector<2x1xi32>
    %658 = arith.cmpi sgt, %1, %657 : vector<2x1xi32>
    %659 = vector.shape_cast %658 : vector<2x1xi1> to vector<2x1xi1>
    %660 = vector.broadcast %659 : vector<2x1xi1> to vector<2x128xi1>
    %661 = arith.select %660, %656, %617 : vector<2x128xi1>, vector<2x128xf32>
    %cst_171 = arith.constant 0.000000e+00 : f32
    %662 = vector.shape_cast %658 : vector<2x1xi1> to vector<2x1xi1>
    %663 = vector.broadcast %662 : vector<2x1xi1> to vector<2x128xi1>
    %664 = vector.broadcast %cst_171 : f32 to vector<2x128xf32>
    %665 = arith.select %663, %656, %664 : vector<2x128xi1>, vector<2x128xf32>
    %666 = arith.truncf %665 : vector<2x128xf32> to vector<2x128xbf16>
    %c0_172 = arith.constant 0 : index
    %c12_173 = arith.constant 12 : index
    %c0_174 = arith.constant 0 : index
    %667 = vector.load %arg11[%c0_172, %c12_173, %c0_174] : memref<1x16x128xbf16, #tpu.memory_space<vmem>>, vector<1x2x128xbf16>
    %668 = vector.shape_cast %667 : vector<1x2x128xbf16> to vector<2x128xbf16>
    %669 = vector.shape_cast %666 : vector<2x128xbf16> to vector<1x2x128xbf16>
    tpu.vector_store %arg11[%c0_172, %c12_173, %c0_174], %669 {strides = array<i32>} : memref<1x16x128xbf16, #tpu.memory_space<vmem>>, vector<1x2x128xbf16>,
    %c14_175 = arith.constant 14 : index
    %c0_176 = arith.constant 0 : index
    %670 = vector.load %arg13[%c14_175, %c0_176] : memref<16x384xf32, #tpu.memory_space<vmem>>, vector<2x384xf32>
    %671 = arith.truncf %661 : vector<2x128xf32> to vector<2x128xbf16>
    %cst_177 = arith.constant dense<0.000000e+00> : vector<2x384xf32>
    %672 = tpu.matmul %671, %353, %cst_177 {dimension_numbers = #tpu.dot_dimension_numbers<[1], [0], [0], [1], [0, 0, 1, 1], [], []>} : vector<2x128xbf16>, vector<128x384xbf16>, vector<2x384xf32> -> vector<2x384xf32>
    %673 = vector.extract_strided_slice %670 {offsets = [0, 0], sizes = [2, 128], strides = [1, 1]} : vector<2x384xf32> to vector<2x128xf32>
    %674 = vector.extract_strided_slice %672 {offsets = [0, 0], sizes = [2, 128], strides = [1, 1]} : vector<2x384xf32> to vector<2x128xf32>
    %675 = arith.addf %673, %674 : vector<2x128xf32>
    %676 = arith.negf %675 : vector<2x128xf32>
    %677 = math.exp %676 : vector<2x128xf32>
    %cst_178 = arith.constant 1.000000e+00 : f32
    %678 = vector.broadcast %cst_178 : f32 to vector<2x128xf32>
    %679 = arith.addf %678, %677 : vector<2x128xf32>
    %680 = arith.divf %678, %679 : vector<2x128xf32>
    %681 = vector.extract_strided_slice %670 {offsets = [0, 128], sizes = [2, 128], strides = [1, 1]} : vector<2x384xf32> to vector<2x128xf32>
    %682 = vector.extract_strided_slice %672 {offsets = [0, 128], sizes = [2, 128], strides = [1, 1]} : vector<2x384xf32> to vector<2x128xf32>
    %683 = arith.addf %681, %682 : vector<2x128xf32>
    %684 = arith.negf %683 : vector<2x128xf32>
    %685 = math.exp %684 : vector<2x128xf32>
    %cst_179 = arith.constant 1.000000e+00 : f32
    %686 = vector.broadcast %cst_179 : f32 to vector<2x128xf32>
    %687 = arith.addf %686, %685 : vector<2x128xf32>
    %688 = arith.divf %686, %687 : vector<2x128xf32>
    %689 = vector.extract_strided_slice %670 {offsets = [0, 256], sizes = [2, 128], strides = [1, 1]} : vector<2x384xf32> to vector<2x128xf32>
    %690 = vector.extract_strided_slice %672 {offsets = [0, 256], sizes = [2, 128], strides = [1, 1]} : vector<2x384xf32> to vector<2x128xf32>
    %691 = vector.broadcast %355 : vector<1x128xf32> to vector<2x128xf32>
    %692 = arith.addf %690, %691 : vector<2x128xf32>
    %693 = arith.mulf %680, %692 : vector<2x128xf32>
    %694 = arith.addf %689, %693 : vector<2x128xf32>
    %695 = math.tanh %694 : vector<2x128xf32>
    %cst_180 = arith.constant 1.000000e+00 : f32
    %696 = vector.broadcast %cst_180 : f32 to vector<2x128xf32>
    %697 = arith.subf %696, %688 : vector<2x128xf32>
    %698 = arith.mulf %697, %695 : vector<2x128xf32>
    %699 = arith.mulf %688, %661 : vector<2x128xf32>
    %700 = arith.addf %698, %699 : vector<2x128xf32>
    %c7_i32_181 = arith.constant 7 : i32
    %701 = vector.broadcast %c7_i32_181 : i32 to vector<2x1xi32>
    %702 = arith.cmpi sgt, %1, %701 : vector<2x1xi32>
    %703 = vector.shape_cast %702 : vector<2x1xi1> to vector<2x1xi1>
    %704 = vector.broadcast %703 : vector<2x1xi1> to vector<2x128xi1>
    %705 = arith.select %704, %700, %661 : vector<2x128xi1>, vector<2x128xf32>
    %cst_182 = arith.constant 0.000000e+00 : f32
    %706 = vector.shape_cast %702 : vector<2x1xi1> to vector<2x1xi1>
    %707 = vector.broadcast %706 : vector<2x1xi1> to vector<2x128xi1>
    %708 = vector.broadcast %cst_182 : f32 to vector<2x128xf32>
    %709 = arith.select %707, %700, %708 : vector<2x128xi1>, vector<2x128xf32>
    %710 = arith.truncf %709 : vector<2x128xf32> to vector<2x128xbf16>
    %c0_183 = arith.constant 0 : index
    %c14_184 = arith.constant 14 : index
    %c0_185 = arith.constant 0 : index
    %711 = vector.load %arg11[%c0_183, %c14_184, %c0_185] : memref<1x16x128xbf16, #tpu.memory_space<vmem>>, vector<1x2x128xbf16>
    %712 = vector.shape_cast %711 : vector<1x2x128xbf16> to vector<2x128xbf16>
    %713 = vector.shape_cast %710 : vector<2x128xbf16> to vector<1x2x128xbf16>
    tpu.vector_store %arg11[%c0_183, %c14_184, %c0_185], %713 {strides = array<i32>} : memref<1x16x128xbf16, #tpu.memory_space<vmem>>, vector<1x2x128xbf16>,
    %c0_186 = arith.constant 0 : index
    %c2_187 = arith.constant 2 : index
    %c0_188 = arith.constant 0 : index
    %714 = vector.load %arg12[%c0_186, %c2_187, %c0_188] : memref<1x4x128xf32, #tpu.memory_space<vmem>>, vector<1x2x128xf32>
    %715 = vector.shape_cast %714 : vector<1x2x128xf32> to vector<2x128xf32>
    %716 = vector.shape_cast %705 : vector<2x128xf32> to vector<1x2x128xf32>
    tpu.vector_store %arg12[%c0_186, %c2_187, %c0_188], %716 {strides = array<i32>} : memref<1x4x128xf32, #tpu.memory_space<vmem>>, vector<1x2x128xf32>,
    return
  }
  func.func @transform_0(%arg0: i32) -> (i32, i32, i32) {
    %c0_i32 = arith.constant 0 : i32
    %c0_i32_0 = arith.constant 0 : i32
    %c0_i32_1 = arith.constant 0 : i32
    return %arg0, %c0_i32, %c0_i32_0 : i32, i32, i32
  }
  func.func @transform_1(%arg0: i32) -> (i32, i32, i32) {
    %c0_i32 = arith.constant 0 : i32
    %c0_i32_0 = arith.constant 0 : i32
    %c0_i32_1 = arith.constant 0 : i32
    return %arg0, %c0_i32, %c0_i32_0 : i32, i32, i32
  }
  func.func @transform_2(%arg0: i32) -> (i32, i32) {
    %c0_i32 = arith.constant 0 : i32
    %c0_i32_0 = arith.constant 0 : i32
    %c0_i32_1 = arith.constant 0 : i32
    return %c0_i32, %c0_i32_0 : i32, i32
  }
  func.func @transform_3(%arg0: i32) -> (i32, i32) {
    %c0_i32 = arith.constant 0 : i32
    %c0_i32_0 = arith.constant 0 : i32
    %c0_i32_1 = arith.constant 0 : i32
    return %c0_i32, %c0_i32_0 : i32, i32
  }
  func.func @transform_4(%arg0: i32) -> (i32, i32) {
    %c0_i32 = arith.constant 0 : i32
    %c0_i32_0 = arith.constant 0 : i32
    %c0_i32_1 = arith.constant 0 : i32
    return %c0_i32, %c0_i32_0 : i32, i32
  }
  func.func @transform_5(%arg0: i32) -> (i32, i32) {
    %c0_i32 = arith.constant 0 : i32
    %c0_i32_0 = arith.constant 0 : i32
    %c0_i32_1 = arith.constant 0 : i32
    return %c0_i32, %c0_i32_0 : i32, i32
  }
  func.func @transform_6(%arg0: i32) -> (i32, i32) {
    %c0_i32 = arith.constant 0 : i32
    %c0_i32_0 = arith.constant 0 : i32
    %c0_i32_1 = arith.constant 0 : i32
    return %c0_i32, %c0_i32_0 : i32, i32
  }
  func.func @transform_7(%arg0: i32) -> (i32, i32) {
    %c0_i32 = arith.constant 0 : i32
    %c0_i32_0 = arith.constant 0 : i32
    %c0_i32_1 = arith.constant 0 : i32
    return %c0_i32, %c0_i32_0 : i32, i32
  }
  func.func @transform_8(%arg0: i32) -> (i32, i32) {
    %c0_i32 = arith.constant 0 : i32
    %c0_i32_0 = arith.constant 0 : i32
    %c0_i32_1 = arith.constant 0 : i32
    return %c0_i32, %c0_i32_0 : i32, i32
  }
  func.func @transform_9(%arg0: i32) -> (i32, i32) {
    %c0_i32 = arith.constant 0 : i32
    %c0_i32_0 = arith.constant 0 : i32
    %c0_i32_1 = arith.constant 0 : i32
    return %c0_i32, %c0_i32_0 : i32, i32
  }
  func.func @transform_10(%arg0: i32) -> (i32, i32, i32) {
    %c0_i32 = arith.constant 0 : i32
    %c0_i32_0 = arith.constant 0 : i32
    %c0_i32_1 = arith.constant 0 : i32
    return %arg0, %c0_i32, %c0_i32_0 : i32, i32, i32
  }
  func.func @transform_11(%arg0: i32) -> (i32, i32, i32) {
    %c0_i32 = arith.constant 0 : i32
    %c0_i32_0 = arith.constant 0 : i32
    %c0_i32_1 = arith.constant 0 : i32
    return %arg0, %c0_i32, %c0_i32_0 : i32, i32, i32
  }
}

</mosaic_0001>

<llo_original>
// kernel: tpu_custom_call.1
$region0: #{tpu_custom_call.1}
  #allocation0 [shape = 'u32[]', space=smem, size = 0x4, offset = 0x4, fixed_abs, tag = 'smem constant byte address 0x4 - core index']
  #allocation1 [shape = 'u32[144,128]{1,0:T(1,128)}', space=vmem, size = 0x12000, scoped, tag = 'internal scratch']
  #allocation2 [shape = 'f32[16,384]{1,0:T(8,128)}', space=vmem, size = 0x6000, scoped, tag = 'scratch operand']
  #allocation3 [shape = 'bf16[16,128]{1,0:T(8,128)(2,1)}', space=vmem, size = 0x1000, scoped, tag = 'scratch operand']
  %s0 = inlined_call_operand.vmem [shape: s32[2,2,1], index: 0, kind: input, shape index: {}]
  %s1 = inlined_call_operand.hbm [shape: bf16[2,16,16], index: 1, kind: input, shape index: {}]
  %s2 = inlined_call_operand.hbm [shape: bf16[16,384], index: 2, kind: input, shape index: {}]
  %s3 = inlined_call_operand.hbm [shape: bf16[128,384], index: 3, kind: input, shape index: {}]
  %s4 = inlined_call_operand.vmem [shape: f32[1,384], index: 4, kind: input, shape index: {}]
  %s5 = inlined_call_operand.vmem [shape: f32[1,128], index: 5, kind: input, shape index: {}]
  %s6 = inlined_call_operand.hbm [shape: bf16[128,384], index: 6, kind: input, shape index: {}]
  %s7 = inlined_call_operand.hbm [shape: bf16[128,384], index: 7, kind: input, shape index: {}]
  %s8 = inlined_call_operand.vmem [shape: f32[1,384], index: 8, kind: input, shape index: {}]
  %s9 = inlined_call_operand.vmem [shape: f32[1,128], index: 9, kind: input, shape index: {}]
  %s10 = inlined_call_operand.hbm [shape: bf16[2,16,128], index: 10, kind: output, shape index: {0}]
  %s11 = inlined_call_operand.hbm [shape: f32[2,4,128], index: 11, kind: output, shape index: {1}]
  %12 = xla_tuple %s10, %s11
  %s13 = sld [smem:[#allocation0]]
  $region101: #{tpu_custom_call.1} parent=0
    _
  %s15 = ssub.s32 1, %s13
  %s16 = scalar_select 0, %s15, %s13
  $region1: #{tpu_custom_call.1} parent=0
    #allocation4 [shape = 'u8[8192]{0}', space=vmem, size = 0x2000, scoped, tag = 'input window, operand 1']
    #allocation5 [shape = 's32[2]{0}', space=sflag, size = 0x8, scoped, tag = 'scoped memory for tpu_custom_call.1']
    #allocation6 [shape = 's32[2]{0}', space=sflag, size = 0x8, scoped, tag = 'scoped memory for tpu_custom_call.1']
    #allocation7 [shape = 'u8[12288]{0}', space=vmem, size = 0x3000, scoped, tag = 'input window, operand 2, single buffered']
    #allocation8 [shape = 's32[1]{0}', space=sflag, size = 0x4, scoped, tag = 'scoped memory for tpu_custom_call.1']
    #allocation9 [shape = 'u8[98304]{0}', space=vmem, size = 0x18000, scoped, tag = 'input window, operand 3, single buffered']
    #allocation10 [shape = 'u8[98304]{0}', space=vmem, size = 0x18000, scoped, tag = 'input window, operand 6, single buffered']
    #allocation11 [shape = 's32[1]{0}', space=sflag, size = 0x4, scoped, tag = 'scoped memory for tpu_custom_call.1']
    #allocation12 [shape = 'u8[98304]{0}', space=vmem, size = 0x18000, scoped, tag = 'input window, operand 7, single buffered']
    #allocation13 [shape = 'u8[8192]{0}', space=vmem, size = 0x2000, scoped, tag = 'output window, operand 0']
    #allocation14 [shape = 'u8[4096]{0}', space=vmem, size = 0x1000, scoped, tag = 'output window, operand 1']
    #allocation15 [shape = 's32[2]{0}', space=sflag, size = 0x8, scoped, tag = 'scoped memory for tpu_custom_call.1']
    %17 = vsyncpa [#allocation5], 0
    %s18 = scalar_lea.sflag [#allocation5], 1
    %19 = vsyncpa %s18, 0
    %20 = vsyncpa [#allocation8], 0
    %21 = vsyncpa [#allocation11], 0
    %22 = vsyncpa [#allocation6], 0
    %s23 = scalar_lea.sflag [#allocation6], 1
    %24 = vsyncpa %s23, 0
    %25 = vsyncpa [#allocation15], 0
    %s26 = scalar_lea.sflag [#allocation15], 1
    %27 = vsyncpa %s26, 0
    loop: start=0, step=1, limit=4
    $region2: #{tpu_custom_call.1} parent=1 // loop_pre_header
      _
    $region3: #{tpu_custom_call.1} parent=1 // loop_header
      %s29 = sphi 0, %s33
      %p30 = scmp.ge.s32.totalorder %s29, 4
      %s39 = sphi 0, %s41
      %s42 = sphi 0, %s39
      %s43 = sphi 0, %s42
      %s59 = sphi 0, %s43
      %s65 = sphi 0, %s67
      %s68 = sphi 0, %s65
      %s69 = sphi 0, %s68
      %s85 = sphi 0, %s69
      %s89 = sphi 0, %s89
      %s91 = sphi 0, %s89
      %s92 = sphi 0, %s91
      %s106 = sphi 0, %s92
      %s110 = sphi 0, %s110
      %s112 = sphi 0, %s110
      %s113 = sphi 0, %s112
      %s127 = sphi 0, %s113
      %s131 = sphi 0, %s131
      %s133 = sphi 0, %s131
      %s134 = sphi 0, %s133
      %s148 = sphi 0, %s134
      %s152 = sphi 0, %s152
      %s154 = sphi 0, %s152
      %s155 = sphi 0, %s154
      %s169 = sphi 0, %s155
      %s173 = sphi 0, %s173
      %s175 = sphi 0, %s173
      %s176 = sphi 0, %s175
      %s190 = sphi 0, %s176
      %s194 = sphi 0, %s194
      %s196 = sphi 0, %s194
      %s197 = sphi 0, %s196
      %s211 = sphi 0, %s197
      %s215 = sphi 0, %s215
      %s217 = sphi 0, %s215
      %s218 = sphi 0, %s217
      %s232 = sphi 0, %s218
      %s236 = sphi 0, %s236
      %s238 = sphi 0, %s236
      %s239 = sphi 0, %s238
      %s253 = sphi 0, %s239
      %s259 = sphi 0, %s261
      %s262 = sphi 0, %s259
      %s263 = sphi 0, %s262
      %s279 = sphi 0, %s263
      %s285 = sphi 0, %s287
      %s288 = sphi 0, %s285
      %s289 = sphi 0, %s288
      %s305 = sphi 0, %s289
    $region4: #{tpu_custom_call.1} parent=1 // loop_header_branch
      %32 = sbr.rel (%p30) target = $region8
    $region5: #{tpu_custom_call.1} parent=1 // loop_body
      %s34 = ssub.s32 %s29, 1
      %s35 = ssub.s32 %s29, 2
      %s36 = sadd.s32 %s29, 1
      %s37 = ssub.s32 %s29, %s36
      %p38 = scmp.eq.s32.totalorder %s37, 0
      %s40 = sadd.s32 %s39, 1
      %s41 = scalar_select %p38, %s39, %s40
      %p44 = pneg %p38
      %p45 = scmp.eq.s32.totalorder %s29, 1
      %p46 = por %p44, %p45
      %p47 = scmp.ne.s32.totalorder %s39, %s42
      %p48 = scmp.eq.s32.totalorder %s29, 0
      %p49 = por %p47, %p48
      %p50 = scmp.ne.s32.totalorder %s39, %s42
      %p51 = scmp.eq.s32.totalorder %s34, 1
      %p52 = por %p50, %p51
      %p53 = scmp.ne.s32.totalorder %s42, %s43
      %p54 = scmp.eq.s32.totalorder %s34, 0
      %p55 = por %p53, %p54
      %p56 = scmp.ne.s32.totalorder %s42, %s43
      %p57 = scmp.eq.s32.totalorder %s35, 1
      %p58 = por %p56, %p57
      %p60 = scmp.ne.s32.totalorder %s43, %s59
      %p61 = scmp.eq.s32.totalorder %s35, 0
      %p62 = por %p60, %p61
      %s63 = ssub.s32 %s29, %s36
      %p64 = scmp.eq.s32.totalorder %s63, 0
      %s66 = sadd.s32 %s65, 1
      %s67 = scalar_select %p64, %s65, %s66
      %p70 = pneg %p64
      %p71 = scmp.eq.s32.totalorder %s29, 1
      %p72 = por %p70, %p71
      %p73 = scmp.ne.s32.totalorder %s65, %s68
      %p74 = scmp.eq.s32.totalorder %s29, 0
      %p75 = por %p73, %p74
      %p76 = scmp.ne.s32.totalorder %s65, %s68
      %p77 = scmp.eq.s32.totalorder %s34, 1
      %p78 = por %p76, %p77
      %p79 = scmp.ne.s32.totalorder %s68, %s69
      %p80 = scmp.eq.s32.totalorder %s34, 0
      %p81 = por %p79, %p80
      %p82 = scmp.ne.s32.totalorder %s68, %s69
      %p83 = scmp.eq.s32.totalorder %s35, 1
      %p84 = por %p82, %p83
      %p86 = scmp.ne.s32.totalorder %s69, %s85
      %p87 = scmp.eq.s32.totalorder %s35, 0
      %p88 = por %p86, %p87
      %s90 = sadd.s32 %s89, 1
      %p93 = scmp.eq.s32.totalorder %s29, 1
      %p94 = scmp.ne.s32.totalorder %s89, %s91
      %p95 = scmp.eq.s32.totalorder %s29, 0
      %p96 = por %p94, %p95
      %p97 = scmp.ne.s32.totalorder %s89, %s91
      %p98 = scmp.eq.s32.totalorder %s34, 1
      %p99 = por %p97, %p98
      %p100 = scmp.ne.s32.totalorder %s91, %s92
      %p101 = scmp.eq.s32.totalorder %s34, 0
      %p102 = por %p100, %p101
      %p103 = scmp.ne.s32.totalorder %s91, %s92
      %p104 = scmp.eq.s32.totalorder %s35, 1
      %p105 = por %p103, %p104
      %p107 = scmp.ne.s32.totalorder %s92, %s106
      %p108 = scmp.eq.s32.totalorder %s35, 0
      %p109 = por %p107, %p108
      %s111 = sadd.s32 %s110, 1
      %p114 = scmp.eq.s32.totalorder %s29, 1
      %p115 = scmp.ne.s32.totalorder %s110, %s112
      %p116 = scmp.eq.s32.totalorder %s29, 0
      %p117 = por %p115, %p116
      %p118 = scmp.ne.s32.totalorder %s110, %s112
      %p119 = scmp.eq.s32.totalorder %s34, 1
      %p120 = por %p118, %p119
      %p121 = scmp.ne.s32.totalorder %s112, %s113
      %p122 = scmp.eq.s32.totalorder %s34, 0
      %p123 = por %p121, %p122
      %p124 = scmp.ne.s32.totalorder %s112, %s113
      %p125 = scmp.eq.s32.totalorder %s35, 1
      %p126 = por %p124, %p125
      %p128 = scmp.ne.s32.totalorder %s113, %s127
      %p129 = scmp.eq.s32.totalorder %s35, 0
      %p130 = por %p128, %p129
      %s132 = sadd.s32 %s131, 1
      %p135 = scmp.eq.s32.totalorder %s29, 1
      %p136 = scmp.ne.s32.totalorder %s131, %s133
      %p137 = scmp.eq.s32.totalorder %s29, 0
      %p138 = por %p136, %p137
      %p139 = scmp.ne.s32.totalorder %s131, %s133
      %p140 = scmp.eq.s32.totalorder %s34, 1
      %p141 = por %p139, %p140
      %p142 = scmp.ne.s32.totalorder %s133, %s134
      %p143 = scmp.eq.s32.totalorder %s34, 0
      %p144 = por %p142, %p143
      %p145 = scmp.ne.s32.totalorder %s133, %s134
      %p146 = scmp.eq.s32.totalorder %s35, 1
      %p147 = por %p145, %p146
      %p149 = scmp.ne.s32.totalorder %s134, %s148
      %p150 = scmp.eq.s32.totalorder %s35, 0
      %p151 = por %p149, %p150
      %s153 = sadd.s32 %s152, 1
      %p156 = scmp.eq.s32.totalorder %s29, 1
      %p157 = scmp.ne.s32.totalorder %s152, %s154
      %p158 = scmp.eq.s32.totalorder %s29, 0
      %p159 = por %p157, %p158
      %p160 = scmp.ne.s32.totalorder %s152, %s154
      %p161 = scmp.eq.s32.totalorder %s34, 1
      %p162 = por %p160, %p161
      %p163 = scmp.ne.s32.totalorder %s154, %s155
      %p164 = scmp.eq.s32.totalorder %s34, 0
      %p165 = por %p163, %p164
      %p166 = scmp.ne.s32.totalorder %s154, %s155
      %p167 = scmp.eq.s32.totalorder %s35, 1
      %p168 = por %p166, %p167
      %p170 = scmp.ne.s32.totalorder %s155, %s169
      %p171 = scmp.eq.s32.totalorder %s35, 0
      %p172 = por %p170, %p171
      %s174 = sadd.s32 %s173, 1
      %p177 = scmp.eq.s32.totalorder %s29, 1
      %p178 = scmp.ne.s32.totalorder %s173, %s175
      %p179 = scmp.eq.s32.totalorder %s29, 0
      %p180 = por %p178, %p179
      %p181 = scmp.ne.s32.totalorder %s173, %s175
      %p182 = scmp.eq.s32.totalorder %s34, 1
      %p183 = por %p181, %p182
      %p184 = scmp.ne.s32.totalorder %s175, %s176
      %p185 = scmp.eq.s32.totalorder %s34, 0
      %p186 = por %p184, %p185
      %p187 = scmp.ne.s32.totalorder %s175, %s176
      %p188 = scmp.eq.s32.totalorder %s35, 1
      %p189 = por %p187, %p188
      %p191 = scmp.ne.s32.totalorder %s176, %s190
      %p192 = scmp.eq.s32.totalorder %s35, 0
      %p193 = por %p191, %p192
      %s195 = sadd.s32 %s194, 1
      %p198 = scmp.eq.s32.totalorder %s29, 1
      %p199 = scmp.ne.s32.totalorder %s194, %s196
      %p200 = scmp.eq.s32.totalorder %s29, 0
      %p201 = por %p199, %p200
      %p202 = scmp.ne.s32.totalorder %s194, %s196
      %p203 = scmp.eq.s32.totalorder %s34, 1
      %p204 = por %p202, %p203
      %p205 = scmp.ne.s32.totalorder %s196, %s197
      %p206 = scmp.eq.s32.totalorder %s34, 0
      %p207 = por %p205, %p206
      %p208 = scmp.ne.s32.totalorder %s196, %s197
      %p209 = scmp.eq.s32.totalorder %s35, 1
      %p210 = por %p208, %p209
      %p212 = scmp.ne.s32.totalorder %s197, %s211
      %p213 = scmp.eq.s32.totalorder %s35, 0
      %p214 = por %p212, %p213
      %s216 = sadd.s32 %s215, 1
      %p219 = scmp.eq.s32.totalorder %s29, 1
      %p220 = scmp.ne.s32.totalorder %s215, %s217
      %p221 = scmp.eq.s32.totalorder %s29, 0
      %p222 = por %p220, %p221
      %p223 = scmp.ne.s32.totalorder %s215, %s217
      %p224 = scmp.eq.s32.totalorder %s34, 1
      %p225 = por %p223, %p224
      %p226 = scmp.ne.s32.totalorder %s217, %s218
      %p227 = scmp.eq.s32.totalorder %s34, 0
      %p228 = por %p226, %p227
      %p229 = scmp.ne.s32.totalorder %s217, %s218
      %p230 = scmp.eq.s32.totalorder %s35, 1
      %p231 = por %p229, %p230
      %p233 = scmp.ne.s32.totalorder %s218, %s232
      %p234 = scmp.eq.s32.totalorder %s35, 0
      %p235 = por %p233, %p234
      %s237 = sadd.s32 %s236, 1
      %p240 = scmp.eq.s32.totalorder %s29, 1
      %p241 = scmp.ne.s32.totalorder %s236, %s238
      %p242 = scmp.eq.s32.totalorder %s29, 0
      %p243 = por %p241, %p242
      %p244 = scmp.ne.s32.totalorder %s236, %s238
      %p245 = scmp.eq.s32.totalorder %s34, 1
      %p246 = por %p244, %p245
      %p247 = scmp.ne.s32.totalorder %s238, %s239
      %p248 = scmp.eq.s32.totalorder %s34, 0
      %p249 = por %p247, %p248
      %p250 = scmp.ne.s32.totalorder %s238, %s239
      %p251 = scmp.eq.s32.totalorder %s35, 1
      %p252 = por %p250, %p251
      %p254 = scmp.ne.s32.totalorder %s239, %s253
      %p255 = scmp.eq.s32.totalorder %s35, 0
      %p256 = por %p254, %p255
      %s257 = ssub.s32 %s29, %s36
      %p258 = scmp.eq.s32.totalorder %s257, 0
      %s260 = sadd.s32 %s259, 1
      %s261 = scalar_select %p258, %s259, %s260
      %p264 = pneg %p258
      %p265 = scmp.eq.s32.totalorder %s29, 1
      %p266 = por %p264, %p265
      %p267 = scmp.ne.s32.totalorder %s259, %s262
      %p268 = scmp.eq.s32.totalorder %s29, 0
      %p269 = por %p267, %p268
      %p270 = scmp.ne.s32.totalorder %s259, %s262
      %p271 = scmp.eq.s32.totalorder %s34, 1
      %p272 = por %p270, %p271
      %p273 = scmp.ne.s32.totalorder %s262, %s263
      %p274 = scmp.eq.s32.totalorder %s34, 0
      %p275 = por %p273, %p274
      %p276 = scmp.ne.s32.totalorder %s262, %s263
      %p277 = scmp.eq.s32.totalorder %s35, 1
      %p278 = por %p276, %p277
      %p280 = scmp.ne.s32.totalorder %s263, %s279
      %p281 = scmp.eq.s32.totalorder %s35, 0
      %p282 = por %p280, %p281
      %s283 = ssub.s32 %s29, %s36
      %p284 = scmp.eq.s32.totalorder %s283, 0
      %s286 = sadd.s32 %s285, 1
      %s287 = scalar_select %p284, %s285, %s286
      %p290 = pneg %p284
      %p291 = scmp.eq.s32.totalorder %s29, 1
      %p292 = por %p290, %p291
      %p293 = scmp.ne.s32.totalorder %s285, %s288
      %p294 = scmp.eq.s32.totalorder %s29, 0
      %p295 = por %p293, %p294
      %p296 = scmp.ne.s32.totalorder %s285, %s288
      %p297 = scmp.eq.s32.totalorder %s34, 1
      %p298 = por %p296, %p297
      %p299 = scmp.ne.s32.totalorder %s288, %s289
      %p300 = scmp.eq.s32.totalorder %s34, 0
      %p301 = por %p299, %p300
      %p302 = scmp.ne.s32.totalorder %s288, %s289
      %p303 = scmp.eq.s32.totalorder %s35, 1
      %p304 = por %p302, %p303
      %p306 = scmp.ne.s32.totalorder %s289, %s305
      %p307 = scmp.eq.s32.totalorder %s35, 0
      %p308 = por %p306, %p307
      %p309 = scmp.le.s32.totalorder 1, %s29
      %p310 = scmp.lt.s32.totalorder %s29, 3
      %p311 = pnand %p309, %p310
      %p312 = pneg %p311
      // Predicated region
      $region9: #{tpu_custom_call.1} parent=5 // pred_check
        _
      $region10: #{tpu_custom_call.1} parent=5 // pred_check_branch
        %314 = sbr.rel (%p311) target = $region12
      $region11: #{tpu_custom_call.1} parent=5 // pred_region
        %s315 = ssub.s32 %s29, 1
        // Predicated region
        $region13: #{tpu_custom_call.1} parent=11 // pred_check
          %p316 = pneg %p102
        $region14: #{tpu_custom_call.1} parent=11 // pred_check_branch
          %318 = sbr.rel (%p316) target = $region16
        $region15: #{tpu_custom_call.1} parent=11 // pred_region
          %s320 = ssub.s32 384, 384
          %321 = vsyncadd [#allocation8], %s320
          %s322 = sshll.u32 [#allocation7], 4
          %s323 = int_to_ptr.vmem [resolvable:$true] %s322
          %328 = dma.hbm_to_vmem [thread:$0]  %s2, 384, %s323, [#allocation8], 192, 192, 12
        $region16: #{tpu_custom_call.1} parent=11 // pred_fallthru
          _
        // Predicated region
        $region17: #{tpu_custom_call.1} parent=11 // pred_check
          %p329 = pneg %p123
        $region18: #{tpu_custom_call.1} parent=11 // pred_check_branch
          %331 = sbr.rel (%p329) target = $region20
        $region19: #{tpu_custom_call.1} parent=11 // pred_region
          %s333 = ssub.s32 3072, 3072
          %334 = vsyncadd [#allocation8], %s333
          %s335 = sshll.u32 [#allocation9], 4
          %s336 = int_to_ptr.vmem [resolvable:$true] %s335
          %341 = dma.hbm_to_vmem [thread:$0]  %s3, 3072, %s336, [#allocation8], 192, 192, 12
        $region20: #{tpu_custom_call.1} parent=11 // pred_fallthru
          _
        // Predicated region
        $region21: #{tpu_custom_call.1} parent=11 // pred_check
          %p342 = pneg %p144
        $region22: #{tpu_custom_call.1} parent=11 // pred_check_branch
          %344 = sbr.rel (%p342) target = $region24
        $region23: #{tpu_custom_call.1} parent=11 // pred_region
          _
        $region24: #{tpu_custom_call.1} parent=11 // pred_fallthru
          _
        // Predicated region
        $region25: #{tpu_custom_call.1} parent=11 // pred_check
          %p345 = pneg %p165
        $region26: #{tpu_custom_call.1} parent=11 // pred_check_branch
          %347 = sbr.rel (%p345) target = $region28
        $region27: #{tpu_custom_call.1} parent=11 // pred_region
          _
        $region28: #{tpu_custom_call.1} parent=11 // pred_fallthru
          _
        // Predicated region
        $region29: #{tpu_custom_call.1} parent=11 // pred_check
          %p348 = pneg %p186
        $region30: #{tpu_custom_call.1} parent=11 // pred_check_branch
          %350 = sbr.rel (%p348) target = $region32
        $region31: #{tpu_custom_call.1} parent=11 // pred_region
          %s352 = ssub.s32 3072, 3072
          %353 = vsyncadd [#allocation11], %s352
          %s354 = sshll.u32 [#allocation10], 4
          %s355 = int_to_ptr.vmem [resolvable:$true] %s354
          %360 = dma.hbm_to_vmem [thread:$0]  %s6, 3072, %s355, [#allocation11], 192, 192, 12
        $region32: #{tpu_custom_call.1} parent=11 // pred_fallthru
          _
        // Predicated region
        $region33: #{tpu_custom_call.1} parent=11 // pred_check
          %p361 = pneg %p207
        $region34: #{tpu_custom_call.1} parent=11 // pred_check_branch
          %363 = sbr.rel (%p361) target = $region36
        $region35: #{tpu_custom_call.1} parent=11 // pred_region
          %s365 = ssub.s32 3072, 3072
          %366 = vsyncadd [#allocation11], %s365
          %s367 = sshll.u32 [#allocation12], 4
          %s368 = int_to_ptr.vmem [resolvable:$true] %s367
          %373 = dma.hbm_to_vmem [thread:$0]  %s7, 3072, %s368, [#allocation11], 192, 192, 12
        $region36: #{tpu_custom_call.1} parent=11 // pred_fallthru
          _
        // Predicated region
        $region37: #{tpu_custom_call.1} parent=11 // pred_check
          %p374 = pneg %p228
        $region38: #{tpu_custom_call.1} parent=11 // pred_check_branch
          %376 = sbr.rel (%p374) target = $region40
        $region39: #{tpu_custom_call.1} parent=11 // pred_region
          _
        $region40: #{tpu_custom_call.1} parent=11 // pred_fallthru
          _
        // Predicated region
        $region41: #{tpu_custom_call.1} parent=11 // pred_check
          %p377 = pneg %p249
        $region42: #{tpu_custom_call.1} parent=11 // pred_check_branch
          %379 = sbr.rel (%p377) target = $region44
        $region43: #{tpu_custom_call.1} parent=11 // pred_region
          _
        $region44: #{tpu_custom_call.1} parent=11 // pred_fallthru
          _
      $region12: #{tpu_custom_call.1} parent=5 // pred_fallthru
        _
      %p380 = scmp.lt.s32.totalorder %s29, 2
      // Predicated region
      $region45: #{tpu_custom_call.1} parent=5 // pred_check
        %p381 = pneg %p380
      $region46: #{tpu_custom_call.1} parent=5 // pred_check_branch
        %383 = sbr.rel (%p381) target = $region48
      $region47: #{tpu_custom_call.1} parent=5 // pred_region
        // Predicated region
        $region49: #{tpu_custom_call.1} parent=47 // pred_check
          %p384 = pneg %p49
        $region50: #{tpu_custom_call.1} parent=47 // pred_check_branch
          %386 = sbr.rel (%p384) target = $region52
        $region51: #{tpu_custom_call.1} parent=47 // pred_region
          %p387 = scmp.lt.s32.totalorder %s29, 1
          %s388 = scalar_select %p387, %s29, 1
          %s389 = smul.addr %s388, 2
          %s390 = scalar_lea.vmem %s0, %s389
        $region52: #{tpu_custom_call.1} parent=47 // pred_fallthru
          _
        // Predicated region
        $region53: #{tpu_custom_call.1} parent=47 // pred_check
          %p391 = pneg %p75
        $region54: #{tpu_custom_call.1} parent=47 // pred_check_branch
          %393 = sbr.rel (%p391) target = $region56
        $region55: #{tpu_custom_call.1} parent=47 // pred_region
          %s394 = sand.u32 %s65, 1
          %s395 = scalar_lea.sflag [#allocation5], %s394
          %s396 = sand.u32 %s65, 1
          %s397 = smul.addr %s396, 8
          %s398 = scalar_lea.vmem [#allocation4], %s397
          %s400 = ssub.s32 128, 128
          %401 = vsyncadd %s395, %s400
          %s402 = smul.addr %s29, 2
          %s403 = smul.addr %s402, 64
          %s404 = scalar_lea.hbm %s1, %s403
          %s405 = sshll.u32 %s398, 4
          %s406 = int_to_ptr.vmem [resolvable:$true] %s405
          %411 = dma.hbm_to_vmem [thread:$0]  %s404, 128, %s406, %s395, 64, 64, 4
        $region56: #{tpu_custom_call.1} parent=47 // pred_fallthru
          _
      $region48: #{tpu_custom_call.1} parent=5 // pred_fallthru
        _
      %p412 = scmp.le.s32.totalorder 1, %s29
      %p413 = scmp.lt.s32.totalorder %s29, 3
      %p414 = pnand %p412, %p413
      %p415 = pneg %p414
      // Predicated region
      $region57: #{tpu_custom_call.1} parent=5 // pred_check
        _
      $region58: #{tpu_custom_call.1} parent=5 // pred_check_branch
        %417 = sbr.rel (%p414) target = $region60
      $region59: #{tpu_custom_call.1} parent=5 // pred_region
        %s418 = ssub.s32 %s29, 1
        %s419 = sand.u32 %s68, 1
        %s420 = scalar_lea.sflag [#allocation5], %s419
        %s421 = sand.u32 %s68, 1
        %s422 = smul.addr %s421, 8
        %s423 = scalar_lea.vmem [#allocation4], %s422
        // Predicated region
        $region61: #{tpu_custom_call.1} parent=59 // pred_check
          %p424 = pneg %p81
        $region62: #{tpu_custom_call.1} parent=59 // pred_check_branch
          %426 = sbr.rel (%p424) target = $region64
        $region63: #{tpu_custom_call.1} parent=59 // pred_region
          %427 = dma.done %s420, 128
        $region64: #{tpu_custom_call.1} parent=59 // pred_fallthru
          _
        // Predicated region
        $region65: #{tpu_custom_call.1} parent=59 // pred_check
          %p428 = pneg %p102
        $region66: #{tpu_custom_call.1} parent=59 // pred_check_branch
          %430 = sbr.rel (%p428) target = $region68
        $region67: #{tpu_custom_call.1} parent=59 // pred_region
          %431 = dma.done [#allocation8], 384
        $region68: #{tpu_custom_call.1} parent=59 // pred_fallthru
          _
        // Predicated region
        $region69: #{tpu_custom_call.1} parent=59 // pred_check
          %p432 = pneg %p123
        $region70: #{tpu_custom_call.1} parent=59 // pred_check_branch
          %434 = sbr.rel (%p432) target = $region72
        $region71: #{tpu_custom_call.1} parent=59 // pred_region
          %435 = dma.done [#allocation8], 3072
        $region72: #{tpu_custom_call.1} parent=59 // pred_fallthru
          _
        // Predicated region
        $region73: #{tpu_custom_call.1} parent=59 // pred_check
          %p436 = pneg %p186
        $region74: #{tpu_custom_call.1} parent=59 // pred_check_branch
          %438 = sbr.rel (%p436) target = $region76
        $region75: #{tpu_custom_call.1} parent=59 // pred_region
          %439 = dma.done [#allocation11], 3072
        $region76: #{tpu_custom_call.1} parent=59 // pred_fallthru
          _
        // Predicated region
        $region77: #{tpu_custom_call.1} parent=59 // pred_check
          %p440 = pneg %p207
        $region78: #{tpu_custom_call.1} parent=59 // pred_check_branch
          %442 = sbr.rel (%p440) target = $region80
        $region79: #{tpu_custom_call.1} parent=59 // pred_region
          %443 = dma.done [#allocation11], 3072
        $region80: #{tpu_custom_call.1} parent=59 // pred_fallthru
          _
        %p444 = scmp.lt.s32.totalorder %s34, 1
        %s445 = scalar_select %p444, %s34, 1
        %s446 = smul.addr %s445, 2
        %s447 = scalar_lea.vmem %s0, %s446
        %p448 = pneg %p55
        %p449 = pneg %p52
        %s450 = sand.u32 %s68, 1
        %s451 = scalar_lea.sflag [#allocation5], %s450
        %s452 = sand.u32 %s68, 1
        %s453 = smul.addr %s452, 8
        %s454 = scalar_lea.vmem [#allocation4], %s453
        %p455 = pneg %p81
        %p456 = pneg %p78
        %p457 = pneg %p102
        %p458 = pneg %p99
        %p459 = pneg %p123
        %p460 = pneg %p120
        %p461 = pneg %p144
        %p462 = pneg %p141
        %p463 = pneg %p165
        %p464 = pneg %p162
        %p465 = pneg %p186
        %p466 = pneg %p183
        %p467 = pneg %p207
        %p468 = pneg %p204
        %p469 = pneg %p228
        %p470 = pneg %p225
        %p471 = pneg %p249
        %p472 = pneg %p246
        %p473 = pneg %p275
        %p474 = pneg %p272
        %s475 = sand.u32 %s262, 1
        %s476 = scalar_lea.sflag [#allocation6], %s475
        %s477 = sand.u32 %s262, 1
        %s478 = smul.addr %s477, 8
        %s479 = scalar_lea.vmem [#allocation13], %s478
        %p480 = pneg %p301
        %p481 = pneg %p298
        %s482 = sand.u32 %s288, 1
        %s483 = scalar_lea.sflag [#allocation15], %s482
        %s484 = sand.u32 %s288, 1
        %s485 = smul.addr %s484, 4
        %s486 = scalar_lea.vmem [#allocation14], %s485
        %p487 = scmp.lt.s32.totalorder %s34, 1
        %s488 = scalar_select %p487, %s34, 1
        %s489 = smul.addr %s488, 2
        %s490 = scalar_lea.vmem %s0, %s489
        %v492 = vld [vmem:[%s490] sm:$0x3]
        %v493 = vld [vmem:[#allocation7] sm:$0xff]
        %v494 = vld [vmem:[#allocation7 + $0x8] sm:$0xf]
        %v495 = vld [vmem:[#allocation7 + $0xc] sm:$0xff]
        %v496 = vld [vmem:[#allocation7 + $0x14] sm:$0xf]
        %v497 = vld [vmem:[#allocation9] sm:$0xff]
        %v498 = vld [vmem:[#allocation9 + $0x8] sm:$0xf]
        %v499 = vld [vmem:[#allocation9 + $0xc] sm:$0xff]
        %v500 = vld [vmem:[#allocation9 + $0x14] sm:$0xf]
        %v501 = vld [vmem:[#allocation9 + $0x18] sm:$0xff]
        %v502 = vld [vmem:[#allocation9 + $0x20] sm:$0xf]
        %v503 = vld [vmem:[#allocation9 + $0x24] sm:$0xff]
        %v504 = vld [vmem:[#allocation9 + $0x2c] sm:$0xf]
        %v505 = vld [vmem:[#allocation9 + $0x30] sm:$0xff]
        %v506 = vld [vmem:[#allocation9 + $0x38] sm:$0xf]
        %v507 = vld [vmem:[#allocation9 + $0x3c] sm:$0xff]
        %v508 = vld [vmem:[#allocation9 + $0x44] sm:$0xf]
        %v509 = vld [vmem:[#allocation9 + $0x48] sm:$0xff]
        %v510 = vld [vmem:[#allocation9 + $0x50] sm:$0xf]
        %v511 = vld [vmem:[#allocation9 + $0x54] sm:$0xff]
        %v512 = vld [vmem:[#allocation9 + $0x5c] sm:$0xf]
        %v513 = vld [vmem:[#allocation9 + $0x60] sm:$0xff]
        %v514 = vld [vmem:[#allocation9 + $0x68] sm:$0xf]
        %v515 = vld [vmem:[#allocation9 + $0x6c] sm:$0xff]
        %v516 = vld [vmem:[#allocation9 + $0x74] sm:$0xf]
        %v517 = vld [vmem:[#allocation9 + $0x78] sm:$0xff]
        %v518 = vld [vmem:[#allocation9 + $0x80] sm:$0xf]
        %v519 = vld [vmem:[#allocation9 + $0x84] sm:$0xff]
        %v520 = vld [vmem:[#allocation9 + $0x8c] sm:$0xf]
        %v521 = vld [vmem:[#allocation9 + $0x90] sm:$0xff]
        %v522 = vld [vmem:[#allocation9 + $0x98] sm:$0xf]
        %v523 = vld [vmem:[#allocation9 + $0x9c] sm:$0xff]
        %v524 = vld [vmem:[#allocation9 + $0xa4] sm:$0xf]
        %v525 = vld [vmem:[#allocation9 + $0xa8] sm:$0xff]
        %v526 = vld [vmem:[#allocation9 + $0xb0] sm:$0xf]
        %v527 = vld [vmem:[#allocation9 + $0xb4] sm:$0xff]
        %v528 = vld [vmem:[#allocation9 + $0xbc] sm:$0xf]
        %v529 = vld [vmem:[%s4] sm:$0x7]
        %v530 = vld [vmem:[%s5] sm:$0x1]
        %v531 = vld [vmem:[%s423] sm:$0xf]
        %v532 = vld [vmem:[%s423 + $0x4] sm:$0xf]
        %v534 = vlaneseq
        %v535 = vshrl.u32 %v534, 7
        %v536 = vsub.s32 0, %v535
        %v537 = vrot.slane %v529, %v536
        %v538 = vlaneseq
        %v539 = vshrl.u32 %v538, 7
        %v540 = vsub.s32 1, %v539
        %v541 = vrot.slane %v529, %v540
        %v542 = vlaneseq
        %v543 = vshrl.u32 %v542, 7
        %v544 = vsub.s32 2, %v543
        %v545 = vrot.slane %v529, %v544
        %v551 = vunpack.c.l.b16 %v531
        %v552 = vunpack.c.l.b16 %v532
        %v553 = vpack.c.b16 %v552, %v551
        %v558 = vunpack.c.l.b16 %v493
        %v559 = vunpack.c.h.b16 %v493
        %v560 = vunpack.c.l.b16 %v494
        %v561 = vunpack.c.l.b16 %v495
        %v562 = vunpack.c.h.b16 %v495
        %v563 = vunpack.c.l.b16 %v496
        %v564 = vpack.c.b16 %v561, %v558
        %v565 = vpack.c.b16 %v562, %v559
        %v566 = vpack.c.b16 %v563, %v560
        %vm570 = vcmask 130048
        %v572 = vsel %vm570, %v553, 0
        %574 = vmatprep.subr.bf16.mxu0 0
        %575 = vmatpush1.bf16.msra.mxu0 0
        %576 = vmatprep.subr.bf16.mxu0 0
        %577 = vmatpush1.bf16.msra.mxu0 0
        %578 = vmatprep.subr.bf16.mxu0 0
        %579 = vmatpush1.bf16.msra.mxu0 0
        %580 = vmatprep.subr.bf16.mxu0 0
        %581 = vmatpush1.bf16.msra.mxu0 0
        %582 = vmatprep.subr.bf16.mxu0 0
        %583 = vmatpush1.bf16.msra.mxu0 0
        %584 = vmatprep.subr.bf16.mxu0 0
        %585 = vmatpush1.bf16.msra.mxu0 0
        %586 = vmatprep.subr.bf16.mxu0 0
        %587 = vmatpush1.bf16.msra.mxu0 0
        %588 = vmatprep.subr.bf16.mxu0 %v565
        %589 = vmatpush1.bf16.msra.mxu0 %v564
        %590 = vmatprep.subr.bf16.mxu0 0
        %591 = vmatpush2.bf16.msra.mxu0 0
        %592 = vmatprep.subr.bf16.mxu0 0
        %593 = vmatpush2.bf16.msra.mxu0 0
        %594 = vmatprep.subr.bf16.mxu0 0
        %595 = vmatpush2.bf16.msra.mxu0 0
        %596 = vmatprep.subr.bf16.mxu0 0
        %597 = vmatpush2.bf16.msra.mxu0 0
        %598 = vmatprep.subr.bf16.mxu0 0
        %599 = vmatpush2.bf16.msra.mxu0 0
        %600 = vmatprep.subr.bf16.mxu0 0
        %601 = vmatpush2.bf16.msra.mxu0 0
        %602 = vmatprep.subr.bf16.mxu0 0
        %603 = vmatpush2.bf16.msra.mxu0 0
        %604 = vmatprep.subr.bf16.mxu0 0
        %605 = vmatpush2.bf16.msra.mxu0 0
        %606 = vmatprep.mubr.bf16.mxu0 0
        %607 = vmatmul.mubr.bf16.gmra.mxu0 %v572
        %v608 = vpop.f32.mrf.mxu0
        %v609 = vadd.f32 %v537, %v608
        %v610 = vpop.f32.mrf.mxu0
        %v611 = vadd.f32 %v541, %v610
        %v612 = vpop.f32.mrf.mxu0
        %v613 = vadd.f32 %v537, %v612
        %v614 = vpop.f32.mrf.mxu0
        %v615 = vadd.f32 %v541, %v614
        %616 = vdwg.mxu0
        %617 = vmatprep.subr.bf16.mxu0 0
        %618 = vmatpush1.bf16.msra.mxu0 0
        %619 = vmatprep.subr.bf16.mxu0 0
        %620 = vmatpush1.bf16.msra.mxu0 0
        %621 = vmatprep.subr.bf16.mxu0 0
        %622 = vmatpush1.bf16.msra.mxu0 0
        %623 = vmatprep.subr.bf16.mxu0 0
        %624 = vmatpush1.bf16.msra.mxu0 0
        %625 = vmatprep.subr.bf16.mxu0 0
        %626 = vmatpush1.bf16.msra.mxu0 0
        %627 = vmatprep.subr.bf16.mxu0 0
        %628 = vmatpush1.bf16.msra.mxu0 0
        %629 = vmatprep.subr.bf16.mxu0 0
        %630 = vmatpush1.bf16.msra.mxu0 0
        %631 = vmatprep.subr.bf16.mxu0 0
        %632 = vmatpush1.bf16.msra.mxu0 %v566
        %633 = vmatprep.subr.bf16.mxu0 0
        %634 = vmatpush2.bf16.msra.mxu0 0
        %635 = vmatprep.subr.bf16.mxu0 0
        %636 = vmatpush2.bf16.msra.mxu0 0
        %637 = vmatprep.subr.bf16.mxu0 0
        %638 = vmatpush2.bf16.msra.mxu0 0
        %639 = vmatprep.subr.bf16.mxu0 0
        %640 = vmatpush2.bf16.msra.mxu0 0
        %641 = vmatprep.subr.bf16.mxu0 0
        %642 = vmatpush2.bf16.msra.mxu0 0
        %643 = vmatprep.subr.bf16.mxu0 0
        %644 = vmatpush2.bf16.msra.mxu0 0
        %645 = vmatprep.subr.bf16.mxu0 0
        %646 = vmatpush2.bf16.msra.mxu0 0
        %647 = vmatprep.subr.bf16.mxu0 0
        %648 = vmatpush2.bf16.msra.mxu0 0
        %649 = vmatprep.mubr.bf16.mxu0 0
        %650 = vmatmul.mubr.bf16.gmra.mxu0 %v572
        %v651 = vpop.f32.mrf.mxu0
        %v652 = vadd.f32 %v545, %v651
        %v653 = vpop.f32.mrf.mxu0
        %v654 = vpop.f32.mrf.mxu0
        %v655 = vadd.f32 %v545, %v654
        %v656 = vpop.f32.mrf.mxu0
        %657 = vdwg.mxu0
        %658 = vst [vmem:[#allocation2] sm:$0xff] %v609
        %659 = vst [vmem:[#allocation2 + $0x8] sm:$0xff] %v611
        %660 = vst [vmem:[#allocation2 + $0x10] sm:$0xff] %v652
        %661 = vst [vmem:[#allocation2 + $0x18] sm:$0xff] %v613
        %662 = vst [vmem:[#allocation2 + $0x20] sm:$0xff] %v615
        %663 = vst [vmem:[#allocation2 + $0x28] sm:$0xff] %v655
        %v664 = vld [vmem:[#allocation2] sm:$0x3]
        %v665 = vld [vmem:[#allocation2 + $0x8] sm:$0x3]
        %v666 = vld [vmem:[#allocation2 + $0x10] sm:$0x3]
        %v699 = vunpack.c.l.b16 %v497
        %v700 = vunpack.c.h.b16 %v497
        %v701 = vunpack.c.l.b16 %v498
        %v702 = vunpack.c.l.b16 %v499
        %v703 = vunpack.c.h.b16 %v499
        %v704 = vunpack.c.l.b16 %v500
        %v705 = vunpack.c.l.b16 %v501
        %v706 = vunpack.c.h.b16 %v501
        %v707 = vunpack.c.l.b16 %v502
        %v708 = vunpack.c.l.b16 %v503
        %v709 = vunpack.c.h.b16 %v503
        %v710 = vunpack.c.l.b16 %v504
        %v711 = vunpack.c.l.b16 %v505
        %v712 = vunpack.c.h.b16 %v505
        %v713 = vunpack.c.l.b16 %v506
        %v714 = vunpack.c.l.b16 %v507
        %v715 = vunpack.c.h.b16 %v507
        %v716 = vunpack.c.l.b16 %v508
        %v717 = vunpack.c.l.b16 %v509
        %v718 = vunpack.c.h.b16 %v509
        %v719 = vunpack.c.l.b16 %v510
        %v720 = vunpack.c.l.b16 %v511
        %v721 = vunpack.c.h.b16 %v511
        %v722 = vunpack.c.l.b16 %v512
        %v723 = vunpack.c.l.b16 %v513
        %v724 = vunpack.c.h.b16 %v513
        %v725 = vunpack.c.l.b16 %v514
        %v726 = vunpack.c.l.b16 %v515
        %v727 = vunpack.c.h.b16 %v515
        %v728 = vunpack.c.l.b16 %v516
        %v729 = vunpack.c.l.b16 %v517
        %v730 = vunpack.c.h.b16 %v517
        %v731 = vunpack.c.l.b16 %v518
        %v732 = vunpack.c.l.b16 %v519
        %v733 = vunpack.c.h.b16 %v519
        %v734 = vunpack.c.l.b16 %v520
        %v735 = vunpack.c.l.b16 %v521
        %v736 = vunpack.c.h.b16 %v521
        %v737 = vunpack.c.l.b16 %v522
        %v738 = vunpack.c.l.b16 %v523
        %v739 = vunpack.c.h.b16 %v523
        %v740 = vunpack.c.l.b16 %v524
        %v741 = vunpack.c.l.b16 %v525
        %v742 = vunpack.c.h.b16 %v525
        %v743 = vunpack.c.l.b16 %v526
        %v744 = vunpack.c.l.b16 %v527
        %v745 = vunpack.c.h.b16 %v527
        %v746 = vunpack.c.l.b16 %v528
        %v747 = vpack.c.b16 %v702, %v699
        %v748 = vpack.c.b16 %v703, %v700
        %v749 = vpack.c.b16 %v704, %v701
        %v750 = vpack.c.b16 %v708, %v705
        %v751 = vpack.c.b16 %v709, %v706
        %v752 = vpack.c.b16 %v710, %v707
        %v753 = vpack.c.b16 %v714, %v711
        %v754 = vpack.c.b16 %v715, %v712
        %v755 = vpack.c.b16 %v716, %v713
        %v756 = vpack.c.b16 %v720, %v717
        %v757 = vpack.c.b16 %v721, %v718
        %v758 = vpack.c.b16 %v722, %v719
        %v759 = vpack.c.b16 %v726, %v723
        %v760 = vpack.c.b16 %v727, %v724
        %v761 = vpack.c.b16 %v728, %v725
        %v762 = vpack.c.b16 %v732, %v729
        %v763 = vpack.c.b16 %v733, %v730
        %v764 = vpack.c.b16 %v734, %v731
        %v765 = vpack.c.b16 %v738, %v735
        %v766 = vpack.c.b16 %v739, %v736
        %v767 = vpack.c.b16 %v740, %v737
        %v768 = vpack.c.b16 %v744, %v741
        %v769 = vpack.c.b16 %v745, %v742
        %v770 = vpack.c.b16 %v746, %v743
        %795 = vmatprep.subr.bf16.mxu0 %v769
        %796 = vmatpush1.bf16.msra.mxu0 %v768
        %797 = vmatprep.subr.bf16.mxu0 %v766
        %798 = vmatpush1.bf16.msra.mxu0 %v765
        %799 = vmatprep.subr.bf16.mxu0 %v763
        %800 = vmatpush1.bf16.msra.mxu0 %v762
        %801 = vmatprep.subr.bf16.mxu0 %v760
        %802 = vmatpush1.bf16.msra.mxu0 %v759
        %803 = vmatprep.subr.bf16.mxu0 %v757
        %804 = vmatpush1.bf16.msra.mxu0 %v756
        %805 = vmatprep.subr.bf16.mxu0 %v754
        %806 = vmatpush1.bf16.msra.mxu0 %v753
        %807 = vmatprep.subr.bf16.mxu0 %v751
        %808 = vmatpush1.bf16.msra.mxu0 %v750
        %809 = vmatprep.subr.bf16.mxu0 %v748
        %810 = vmatpush1.bf16.msra.mxu0 %v747
        %811 = vmatprep.subr.bf16.mxu0 0
        %812 = vmatpush2.bf16.msra.mxu0 0
        %813 = vmatprep.subr.bf16.mxu0 0
        %814 = vmatpush2.bf16.msra.mxu0 0
        %815 = vmatprep.subr.bf16.mxu0 0
        %816 = vmatpush2.bf16.msra.mxu0 0
        %817 = vmatprep.subr.bf16.mxu0 0
        %818 = vmatpush2.bf16.msra.mxu0 0
        %819 = vmatprep.subr.bf16.mxu0 0
        %820 = vmatpush2.bf16.msra.mxu0 0
        %821 = vmatprep.subr.bf16.mxu0 0
        %822 = vmatpush2.bf16.msra.mxu0 0
        %823 = vmatprep.subr.bf16.mxu0 0
        %824 = vmatpush2.bf16.msra.mxu0 0
        %825 = vmatprep.subr.bf16.mxu0 0
        %826 = vmatpush2.bf16.msra.mxu0 0
        %827 = vmatprep.mubr.bf16.mxu0 0
        %828 = vmatmul.mubr.bf16.gmra.mxu0 0
        %v829 = vpop.f32.mrf.mxu0
        %v830 = vadd.f32 0.0, %v829
        %v831 = vpop.f32.mrf.mxu0
        %v832 = vadd.f32 0.0, %v831
        %v833 = vpop.f32.mrf.mxu0
        %v834 = vpop.f32.mrf.mxu0
        %835 = vdwg.mxu0
        %836 = vmatprep.subr.bf16.mxu0 0
        %837 = vmatpush1.bf16.msra.mxu0 %v770
        %838 = vmatprep.subr.bf16.mxu0 0
        %839 = vmatpush1.bf16.msra.mxu0 %v767
        %840 = vmatprep.subr.bf16.mxu0 0
        %841 = vmatpush1.bf16.msra.mxu0 %v764
        %842 = vmatprep.subr.bf16.mxu0 0
        %843 = vmatpush1.bf16.msra.mxu0 %v761
        %844 = vmatprep.subr.bf16.mxu0 0
        %845 = vmatpush1.bf16.msra.mxu0 %v758
        %846 = vmatprep.subr.bf16.mxu0 0
        %847 = vmatpush1.bf16.msra.mxu0 %v755
        %848 = vmatprep.subr.bf16.mxu0 0
        %849 = vmatpush1.bf16.msra.mxu0 %v752
        %850 = vmatprep.subr.bf16.mxu0 0
        %851 = vmatpush1.bf16.msra.mxu0 %v749
        %852 = vmatprep.subr.bf16.mxu0 0
        %853 = vmatpush2.bf16.msra.mxu0 0
        %854 = vmatprep.subr.bf16.mxu0 0
        %855 = vmatpush2.bf16.msra.mxu0 0
        %856 = vmatprep.subr.bf16.mxu0 0
        %857 = vmatpush2.bf16.msra.mxu0 0
        %858 = vmatprep.subr.bf16.mxu0 0
        %859 = vmatpush2.bf16.msra.mxu0 0
        %860 = vmatprep.subr.bf16.mxu0 0
        %861 = vmatpush2.bf16.msra.mxu0 0
        %862 = vmatprep.subr.bf16.mxu0 0
        %863 = vmatpush2.bf16.msra.mxu0 0
        %864 = vmatprep.subr.bf16.mxu0 0
        %865 = vmatpush2.bf16.msra.mxu0 0
        %866 = vmatprep.subr.bf16.mxu0 0
        %867 = vmatpush2.bf16.msra.mxu0 0
        %868 = vmatprep.mubr.bf16.mxu0 0
        %869 = vmatmul.mubr.bf16.gmra.mxu0 0
        %v870 = vpop.f32.mrf.mxu0
        %v871 = vadd.f32 0.0, %v870
        %v872 = vpop.f32.mrf.mxu0
        %v873 = vpop.f32.mrf.mxu0
        %v874 = vpop.f32.mrf.mxu0
        %875 = vdwg.mxu0
        %v876 = vadd.f32 %v664, %v830
        %v877 = vxor.u32 %v876, 2147483648
        %v878 = vmul.f32 %v877, 1.442695
        %v879 = vpow.pop %v878
        %v880 = vadd.f32 %v879, 1.0
        %v881 = vrcp.pop %v880
        %v882 = vmul.f32 1.0, %v881
        %v883 = vadd.f32 %v665, %v832
        %v884 = vxor.u32 %v883, 2147483648
        %v885 = vmul.f32 %v884, 1.442695
        %v886 = vpow.pop %v885
        %v887 = vadd.f32 %v886, 1.0
        %v888 = vrcp.pop %v887
        %v889 = vmul.f32 1.0, %v888
        %v891 = vlaneseq
        %v892 = vshrl.u32 %v891, 7
        %v893 = vsub.s32 0, %v892
        %v894 = vrot.slane %v530, %v893
        %v896 = vadd.f32 %v871, %v894
        %v897 = vmul.f32 %v882, %v896
        %v898 = vadd.f32 %v666, %v897
        %v899 = vtanh.pop %v898
        %v900 = vsub.f32 1.0, %v889
        %v901 = vmul.f32 %v900, %v899
        %v902 = vmul.f32 %v889, 0.0
        %v903 = vadd.f32 %v901, %v902
        %vm904 = vcmp.gt.s32.totalorder %v492, 0
        %v905 = vsel %vm904, 1, 0
        %906 = vset.pattern.permute.xlu0 0
        %907 = vperm.xlu0 %906, %v905
        %v908 = vpop.permute.xlu0 %907
        %vm909 = vcmp.eq.s32.totalorder %v908, 1
        %v910 = vsel %vm909, %v903, 0.0
        %v911 = vpack.c.bf16 %v910, %v910
        %912 = vst [vmem:[#allocation3] sm:$0x1] %v911
        %v913 = vld [vmem:[#allocation2] sm:$0xc]
        %v914 = vld [vmem:[#allocation2 + $0x8] sm:$0xc]
        %v915 = vld [vmem:[#allocation2 + $0x10] sm:$0xc]
        %916 = vmatprep.subr.bf16.mxu0 %v769
        %917 = vmatpush1.bf16.msra.mxu0 %v768
        %918 = vmatprep.subr.bf16.mxu0 %v766
        %919 = vmatpush1.bf16.msra.mxu0 %v765
        %920 = vmatprep.subr.bf16.mxu0 %v763
        %921 = vmatpush1.bf16.msra.mxu0 %v762
        %922 = vmatprep.subr.bf16.mxu0 %v760
        %923 = vmatpush1.bf16.msra.mxu0 %v759
        %924 = vmatprep.subr.bf16.mxu0 %v757
        %925 = vmatpush1.bf16.msra.mxu0 %v756
        %926 = vmatprep.subr.bf16.mxu0 %v754
        %927 = vmatpush1.bf16.msra.mxu0 %v753
        %928 = vmatprep.subr.bf16.mxu0 %v751
        %929 = vmatpush1.bf16.msra.mxu0 %v750
        %930 = vmatprep.subr.bf16.mxu0 %v748
        %931 = vmatpush1.bf16.msra.mxu0 %v747
        %932 = vmatprep.subr.bf16.mxu0 0
        %933 = vmatpush2.bf16.msra.mxu0 0
        %934 = vmatprep.subr.bf16.mxu0 0
        %935 = vmatpush2.bf16.msra.mxu0 0
        %936 = vmatprep.subr.bf16.mxu0 0
        %937 = vmatpush2.bf16.msra.mxu0 0
        %938 = vmatprep.subr.bf16.mxu0 0
        %939 = vmatpush2.bf16.msra.mxu0 0
        %940 = vmatprep.subr.bf16.mxu0 0
        %941 = vmatpush2.bf16.msra.mxu0 0
        %942 = vmatprep.subr.bf16.mxu0 0
        %943 = vmatpush2.bf16.msra.mxu0 0
        %944 = vmatprep.subr.bf16.mxu0 0
        %945 = vmatpush2.bf16.msra.mxu0 0
        %946 = vmatprep.subr.bf16.mxu0 0
        %947 = vmatpush2.bf16.msra.mxu0 0
        %948 = vmatprep.mubr.bf16.mxu0 0
        %949 = vmatmul.mubr.bf16.gmra.mxu0 %v911
        %v950 = vpop.f32.mrf.mxu0
        %v951 = vadd.f32 0.0, %v950
        %v952 = vpop.f32.mrf.mxu0
        %v953 = vadd.f32 0.0, %v952
        %v954 = vpop.f32.mrf.mxu0
        %v955 = vpop.f32.mrf.mxu0
        %956 = vdwg.mxu0
        %957 = vmatprep.subr.bf16.mxu0 0
        %958 = vmatpush1.bf16.msra.mxu0 %v770
        %959 = vmatprep.subr.bf16.mxu0 0
        %960 = vmatpush1.bf16.msra.mxu0 %v767
        %961 = vmatprep.subr.bf16.mxu0 0
        %962 = vmatpush1.bf16.msra.mxu0 %v764
        %963 = vmatprep.subr.bf16.mxu0 0
        %964 = vmatpush1.bf16.msra.mxu0 %v761
        %965 = vmatprep.subr.bf16.mxu0 0
        %966 = vmatpush1.bf16.msra.mxu0 %v758
        %967 = vmatprep.subr.bf16.mxu0 0
        %968 = vmatpush1.bf16.msra.mxu0 %v755
        %969 = vmatprep.subr.bf16.mxu0 0
        %970 = vmatpush1.bf16.msra.mxu0 %v752
        %971 = vmatprep.subr.bf16.mxu0 0
        %972 = vmatpush1.bf16.msra.mxu0 %v749
        %973 = vmatprep.subr.bf16.mxu0 0
        %974 = vmatpush2.bf16.msra.mxu0 0
        %975 = vmatprep.subr.bf16.mxu0 0
        %976 = vmatpush2.bf16.msra.mxu0 0
        %977 = vmatprep.subr.bf16.mxu0 0
        %978 = vmatpush2.bf16.msra.mxu0 0
        %979 = vmatprep.subr.bf16.mxu0 0
        %980 = vmatpush2.bf16.msra.mxu0 0
        %981 = vmatprep.subr.bf16.mxu0 0
        %982 = vmatpush2.bf16.msra.mxu0 0
        %983 = vmatprep.subr.bf16.mxu0 0
        %984 = vmatpush2.bf16.msra.mxu0 0
        %985 = vmatprep.subr.bf16.mxu0 0
        %986 = vmatpush2.bf16.msra.mxu0 0
        %987 = vmatprep.subr.bf16.mxu0 0
        %988 = vmatpush2.bf16.msra.mxu0 0
        %989 = vmatprep.mubr.bf16.mxu0 0
        %990 = vmatmul.mubr.bf16.gmra.mxu0 %v911
        %v991 = vpop.f32.mrf.mxu0
        %v992 = vadd.f32 0.0, %v991
        %v993 = vpop.f32.mrf.mxu0
        %v994 = vpop.f32.mrf.mxu0
        %v995 = vpop.f32.mrf.mxu0
        %996 = vdwg.mxu0
        %v998 = vrot.slane %v951, 6
        %v1000 = vadd.f32 %v913, %v998
        %v1001 = vxor.u32 %v1000, 2147483648
        %v1002 = vmul.f32 %v1001, 1.442695
        %v1003 = vpow.pop %v1002
        %v1004 = vadd.f32 %v1003, 1.0
        %v1005 = vrcp.pop %v1004
        %v1006 = vmul.f32 1.0, %v1005
        %v1008 = vrot.slane %v953, 6
        %v1010 = vadd.f32 %v914, %v1008
        %v1011 = vxor.u32 %v1010, 2147483648
        %v1012 = vmul.f32 %v1011, 1.442695
        %v1013 = vpow.pop %v1012
        %v1014 = vadd.f32 %v1013, 1.0
        %v1015 = vrcp.pop %v1014
        %v1016 = vmul.f32 1.0, %v1015
        %v1017 = vadd.f32 %v992, %v894
        %v1019 = vrot.slane %v1017, 6
        %v1021 = vmul.f32 %v1006, %v1019
        %v1022 = vadd.f32 %v915, %v1021
        %v1023 = vtanh.pop %v1022
        %v1024 = vsub.f32 1.0, %v1016
        %v1025 = vmul.f32 %v1024, %v1023
        %v1027 = vrot.slane %v910, 6
        %v1029 = vmul.f32 %v1016, %v1027
        %v1030 = vadd.f32 %v1025, %v1029
        %vm1031 = vcmp.gt.s32.totalorder %v492, 1
        %v1032 = vsel %vm1031, 1, 0
        %1033 = vset.pattern.permute.xlu0 0
        %1034 = vperm.xlu0 %1033, %v1032
        %v1035 = vpop.permute.xlu0 %1034
        %vm1036 = vcmp.eq.s32.totalorder %v1035, 1
        %v1038 = vrot.slane %v1030, 2
        %v1040 = vsel %vm1036, %v1038, %v910
        %v1041 = vsel %vm1036, %v1038, 0.0
        %v1042 = vpack.c.bf16 %v1041, %v1041
        %v1044 = vunpack.c.l.b16 %v1042
        %v1045 = vpack.c.b16 %v1044, %v1044
        %v1046 = vrot.slane %v1045, 7
        %1048 = vst [vmem:[#allocation3] sm:$0x2] %v1046
        %v1049 = vld [vmem:[#allocation2] sm:$0x30]
        %v1050 = vld [vmem:[#allocation2 + $0x8] sm:$0x30]
        %v1051 = vld [vmem:[#allocation2 + $0x10] sm:$0x30]
        %v1052 = vpack.c.bf16 %v1040, %v1040
        %1053 = vmatprep.subr.bf16.mxu0 %v769
        %1054 = vmatpush1.bf16.msra.mxu0 %v768
        %1055 = vmatprep.subr.bf16.mxu0 %v766
        %1056 = vmatpush1.bf16.msra.mxu0 %v765
        %1057 = vmatprep.subr.bf16.mxu0 %v763
        %1058 = vmatpush1.bf16.msra.mxu0 %v762
        %1059 = vmatprep.subr.bf16.mxu0 %v760
        %1060 = vmatpush1.bf16.msra.mxu0 %v759
        %1061 = vmatprep.subr.bf16.mxu0 %v757
        %1062 = vmatpush1.bf16.msra.mxu0 %v756
        %1063 = vmatprep.subr.bf16.mxu0 %v754
        %1064 = vmatpush1.bf16.msra.mxu0 %v753
        %1065 = vmatprep.subr.bf16.mxu0 %v751
        %1066 = vmatpush1.bf16.msra.mxu0 %v750
        %1067 = vmatprep.subr.bf16.mxu0 %v748
        %1068 = vmatpush1.bf16.msra.mxu0 %v747
        %1069 = vmatprep.subr.bf16.mxu0 0
        %1070 = vmatpush2.bf16.msra.mxu0 0
        %1071 = vmatprep.subr.bf16.mxu0 0
        %1072 = vmatpush2.bf16.msra.mxu0 0
        %1073 = vmatprep.subr.bf16.mxu0 0
        %1074 = vmatpush2.bf16.msra.mxu0 0
        %1075 = vmatprep.subr.bf16.mxu0 0
        %1076 = vmatpush2.bf16.msra.mxu0 0
        %1077 = vmatprep.subr.bf16.mxu0 0
        %1078 = vmatpush2.bf16.msra.mxu0 0
        %1079 = vmatprep.subr.bf16.mxu0 0
        %1080 = vmatpush2.bf16.msra.mxu0 0
        %1081 = vmatprep.subr.bf16.mxu0 0
        %1082 = vmatpush2.bf16.msra.mxu0 0
        %1083 = vmatprep.subr.bf16.mxu0 0
        %1084 = vmatpush2.bf16.msra.mxu0 0
        %1085 = vmatprep.mubr.bf16.mxu0 0
        %1086 = vmatmul.mubr.bf16.gmra.mxu0 %v1052
        %v1087 = vpop.f32.mrf.mxu0
        %v1088 = vadd.f32 0.0, %v1087
        %v1089 = vpop.f32.mrf.mxu0
        %v1090 = vadd.f32 0.0, %v1089
        %v1091 = vpop.f32.mrf.mxu0
        %v1092 = vpop.f32.mrf.mxu0
        %1093 = vdwg.mxu0
        %1094 = vmatprep.subr.bf16.mxu0 0
        %1095 = vmatpush1.bf16.msra.mxu0 %v770
        %1096 = vmatprep.subr.bf16.mxu0 0
        %1097 = vmatpush1.bf16.msra.mxu0 %v767
        %1098 = vmatprep.subr.bf16.mxu0 0
        %1099 = vmatpush1.bf16.msra.mxu0 %v764
        %1100 = vmatprep.subr.bf16.mxu0 0
        %1101 = vmatpush1.bf16.msra.mxu0 %v761
        %1102 = vmatprep.subr.bf16.mxu0 0
        %1103 = vmatpush1.bf16.msra.mxu0 %v758
        %1104 = vmatprep.subr.bf16.mxu0 0
        %1105 = vmatpush1.bf16.msra.mxu0 %v755
        %1106 = vmatprep.subr.bf16.mxu0 0
        %1107 = vmatpush1.bf16.msra.mxu0 %v752
        %1108 = vmatprep.subr.bf16.mxu0 0
        %1109 = vmatpush1.bf16.msra.mxu0 %v749
        %1110 = vmatprep.subr.bf16.mxu0 0
        %1111 = vmatpush2.bf16.msra.mxu0 0
        %1112 = vmatprep.subr.bf16.mxu0 0
        %1113 = vmatpush2.bf16.msra.mxu0 0
        %1114 = vmatprep.subr.bf16.mxu0 0
        %1115 = vmatpush2.bf16.msra.mxu0 0
        %1116 = vmatprep.subr.bf16.mxu0 0
        %1117 = vmatpush2.bf16.msra.mxu0 0
        %1118 = vmatprep.subr.bf16.mxu0 0
        %1119 = vmatpush2.bf16.msra.mxu0 0
        %1120 = vmatprep.subr.bf16.mxu0 0
        %1121 = vmatpush2.bf16.msra.mxu0 0
        %1122 = vmatprep.subr.bf16.mxu0 0
        %1123 = vmatpush2.bf16.msra.mxu0 0
        %1124 = vmatprep.subr.bf16.mxu0 0
        %1125 = vmatpush2.bf16.msra.mxu0 0
        %1126 = vmatprep.mubr.bf16.mxu0 0
        %1127 = vmatmul.mubr.bf16.gmra.mxu0 %v1052
        %v1128 = vpop.f32.mrf.mxu0
        %v1129 = vadd.f32 0.0, %v1128
        %v1130 = vpop.f32.mrf.mxu0
        %v1131 = vpop.f32.mrf.mxu0
        %v1132 = vpop.f32.mrf.mxu0
        %1133 = vdwg.mxu0
        %v1135 = vrot.slane %v1088, 4
        %v1137 = vadd.f32 %v1049, %v1135
        %v1138 = vxor.u32 %v1137, 2147483648
        %v1139 = vmul.f32 %v1138, 1.442695
        %v1140 = vpow.pop %v1139
        %v1141 = vadd.f32 %v1140, 1.0
        %v1142 = vrcp.pop %v1141
        %v1143 = vmul.f32 1.0, %v1142
        %v1145 = vrot.slane %v1090, 4
        %v1147 = vadd.f32 %v1050, %v1145
        %v1148 = vxor.u32 %v1147, 2147483648
        %v1149 = vmul.f32 %v1148, 1.442695
        %v1150 = vpow.pop %v1149
        %v1151 = vadd.f32 %v1150, 1.0
        %v1152 = vrcp.pop %v1151
        %v1153 = vmul.f32 1.0, %v1152
        %v1154 = vadd.f32 %v1129, %v894
        %v1156 = vrot.slane %v1154, 4
        %v1158 = vmul.f32 %v1143, %v1156
        %v1159 = vadd.f32 %v1051, %v1158
        %v1160 = vtanh.pop %v1159
        %v1161 = vsub.f32 1.0, %v1153
        %v1162 = vmul.f32 %v1161, %v1160
        %v1164 = vrot.slane %v1040, 4
        %v1166 = vmul.f32 %v1153, %v1164
        %v1167 = vadd.f32 %v1162, %v1166
        %vm1168 = vcmp.gt.s32.totalorder %v492, 2
        %v1169 = vsel %vm1168, 1, 0
        %1170 = vset.pattern.permute.xlu0 0
        %1171 = vperm.xlu0 %1170, %v1169
        %v1172 = vpop.permute.xlu0 %1171
        %vm1173 = vcmp.eq.s32.totalorder %v1172, 1
        %v1175 = vrot.slane %v1167, 4
        %v1177 = vsel %vm1173, %v1175, %v1040
        %v1178 = vsel %vm1173, %v1175, 0.0
        %v1179 = vpack.c.bf16 %v1178, %v1178
        %v1181 = vunpack.c.l.b16 %v1179
        %v1182 = vpack.c.b16 %v1181, %v1181
        %v1183 = vrot.slane %v1182, 6
        %1185 = vst [vmem:[#allocation3] sm:$0x4] %v1183
        %v1186 = vld [vmem:[#allocation2] sm:$0xc0]
        %v1187 = vld [vmem:[#allocation2 + $0x8] sm:$0xc0]
        %v1188 = vld [vmem:[#allocation2 + $0x10] sm:$0xc0]
        %v1189 = vpack.c.bf16 %v1177, %v1177
        %1190 = vmatprep.subr.bf16.mxu0 %v769
        %1191 = vmatpush1.bf16.msra.mxu0 %v768
        %1192 = vmatprep.subr.bf16.mxu0 %v766
        %1193 = vmatpush1.bf16.msra.mxu0 %v765
        %1194 = vmatprep.subr.bf16.mxu0 %v763
        %1195 = vmatpush1.bf16.msra.mxu0 %v762
        %1196 = vmatprep.subr.bf16.mxu0 %v760
        %1197 = vmatpush1.bf16.msra.mxu0 %v759
        %1198 = vmatprep.subr.bf16.mxu0 %v757
        %1199 = vmatpush1.bf16.msra.mxu0 %v756
        %1200 = vmatprep.subr.bf16.mxu0 %v754
        %1201 = vmatpush1.bf16.msra.mxu0 %v753
        %1202 = vmatprep.subr.bf16.mxu0 %v751
        %1203 = vmatpush1.bf16.msra.mxu0 %v750
        %1204 = vmatprep.subr.bf16.mxu0 %v748
        %1205 = vmatpush1.bf16.msra.mxu0 %v747
        %1206 = vmatprep.subr.bf16.mxu0 0
        %1207 = vmatpush2.bf16.msra.mxu0 0
        %1208 = vmatprep.subr.bf16.mxu0 0
        %1209 = vmatpush2.bf16.msra.mxu0 0
        %1210 = vmatprep.subr.bf16.mxu0 0
        %1211 = vmatpush2.bf16.msra.mxu0 0
        %1212 = vmatprep.subr.bf16.mxu0 0
        %1213 = vmatpush2.bf16.msra.mxu0 0
        %1214 = vmatprep.subr.bf16.mxu0 0
        %1215 = vmatpush2.bf16.msra.mxu0 0
        %1216 = vmatprep.subr.bf16.mxu0 0
        %1217 = vmatpush2.bf16.msra.mxu0 0
        %1218 = vmatprep.subr.bf16.mxu0 0
        %1219 = vmatpush2.bf16.msra.mxu0 0
        %1220 = vmatprep.subr.bf16.mxu0 0
        %1221 = vmatpush2.bf16.msra.mxu0 0
        %1222 = vmatprep.mubr.bf16.mxu0 0
        %1223 = vmatmul.mubr.bf16.gmra.mxu0 %v1189
        %v1224 = vpop.f32.mrf.mxu0
        %v1225 = vadd.f32 0.0, %v1224
        %v1226 = vpop.f32.mrf.mxu0
        %v1227 = vadd.f32 0.0, %v1226
        %v1228 = vpop.f32.mrf.mxu0
        %v1229 = vpop.f32.mrf.mxu0
        %1230 = vdwg.mxu0
        %1231 = vmatprep.subr.bf16.mxu0 0
        %1232 = vmatpush1.bf16.msra.mxu0 %v770
        %1233 = vmatprep.subr.bf16.mxu0 0
        %1234 = vmatpush1.bf16.msra.mxu0 %v767
        %1235 = vmatprep.subr.bf16.mxu0 0
        %1236 = vmatpush1.bf16.msra.mxu0 %v764
        %1237 = vmatprep.subr.bf16.mxu0 0
        %1238 = vmatpush1.bf16.msra.mxu0 %v761
        %1239 = vmatprep.subr.bf16.mxu0 0
        %1240 = vmatpush1.bf16.msra.mxu0 %v758
        %1241 = vmatprep.subr.bf16.mxu0 0
        %1242 = vmatpush1.bf16.msra.mxu0 %v755
        %1243 = vmatprep.subr.bf16.mxu0 0
        %1244 = vmatpush1.bf16.msra.mxu0 %v752
        %1245 = vmatprep.subr.bf16.mxu0 0
        %1246 = vmatpush1.bf16.msra.mxu0 %v749
        %1247 = vmatprep.subr.bf16.mxu0 0
        %1248 = vmatpush2.bf16.msra.mxu0 0
        %1249 = vmatprep.subr.bf16.mxu0 0
        %1250 = vmatpush2.bf16.msra.mxu0 0
        %1251 = vmatprep.subr.bf16.mxu0 0
        %1252 = vmatpush2.bf16.msra.mxu0 0
        %1253 = vmatprep.subr.bf16.mxu0 0
        %1254 = vmatpush2.bf16.msra.mxu0 0
        %1255 = vmatprep.subr.bf16.mxu0 0
        %1256 = vmatpush2.bf16.msra.mxu0 0
        %1257 = vmatprep.subr.bf16.mxu0 0
        %1258 = vmatpush2.bf16.msra.mxu0 0
        %1259 = vmatprep.subr.bf16.mxu0 0
        %1260 = vmatpush2.bf16.msra.mxu0 0
        %1261 = vmatprep.subr.bf16.mxu0 0
        %1262 = vmatpush2.bf16.msra.mxu0 0
        %1263 = vmatprep.mubr.bf16.mxu0 0
        %1264 = vmatmul.mubr.bf16.gmra.mxu0 %v1189
        %v1265 = vpop.f32.mrf.mxu0
        %v1266 = vadd.f32 0.0, %v1265
        %v1267 = vpop.f32.mrf.mxu0
        %v1268 = vpop.f32.mrf.mxu0
        %v1269 = vpop.f32.mrf.mxu0
        %1270 = vdwg.mxu0
        %v1272 = vrot.slane %v1225, 2
        %v1274 = vadd.f32 %v1186, %v1272
        %v1275 = vxor.u32 %v1274, 2147483648
        %v1276 = vmul.f32 %v1275, 1.442695
        %v1277 = vpow.pop %v1276
        %v1278 = vadd.f32 %v1277, 1.0
        %v1279 = vrcp.pop %v1278
        %v1280 = vmul.f32 1.0, %v1279
        %v1282 = vrot.slane %v1227, 2
        %v1284 = vadd.f32 %v1187, %v1282
        %v1285 = vxor.u32 %v1284, 2147483648
        %v1286 = vmul.f32 %v1285, 1.442695
        %v1287 = vpow.pop %v1286
        %v1288 = vadd.f32 %v1287, 1.0
        %v1289 = vrcp.pop %v1288
        %v1290 = vmul.f32 1.0, %v1289
        %v1291 = vadd.f32 %v1266, %v894
        %v1293 = vrot.slane %v1291, 2
        %v1295 = vmul.f32 %v1280, %v1293
        %v1296 = vadd.f32 %v1188, %v1295
        %v1297 = vtanh.pop %v1296
        %v1298 = vsub.f32 1.0, %v1290
        %v1299 = vmul.f32 %v1298, %v1297
        %v1301 = vrot.slane %v1177, 2
        %v1303 = vmul.f32 %v1290, %v1301
        %v1304 = vadd.f32 %v1299, %v1303
        %vm1305 = vcmp.gt.s32.totalorder %v492, 3
        %v1306 = vsel %vm1305, 1, 0
        %1307 = vset.pattern.permute.xlu0 0
        %1308 = vperm.xlu0 %1307, %v1306
        %v1309 = vpop.permute.xlu0 %1308
        %vm1310 = vcmp.eq.s32.totalorder %v1309, 1
        %v1312 = vrot.slane %v1304, 6
        %v1314 = vsel %vm1310, %v1312, %v1177
        %v1315 = vsel %vm1310, %v1312, 0.0
        %v1316 = vpack.c.bf16 %v1315, %v1315
        %v1318 = vunpack.c.l.b16 %v1316
        %v1319 = vpack.c.b16 %v1318, %v1318
        %v1320 = vrot.slane %v1319, 5
        %1322 = vst [vmem:[#allocation3] sm:$0x8] %v1320
        %v1323 = vld [vmem:[#allocation2 + $0x18] sm:$0x3]
        %v1324 = vld [vmem:[#allocation2 + $0x20] sm:$0x3]
        %v1325 = vld [vmem:[#allocation2 + $0x28] sm:$0x3]
        %v1326 = vpack.c.bf16 %v1314, %v1314
        %1327 = vmatprep.subr.bf16.mxu0 %v769
        %1328 = vmatpush1.bf16.msra.mxu0 %v768
        %1329 = vmatprep.subr.bf16.mxu0 %v766
        %1330 = vmatpush1.bf16.msra.mxu0 %v765
        %1331 = vmatprep.subr.bf16.mxu0 %v763
        %1332 = vmatpush1.bf16.msra.mxu0 %v762
        %1333 = vmatprep.subr.bf16.mxu0 %v760
        %1334 = vmatpush1.bf16.msra.mxu0 %v759
        %1335 = vmatprep.subr.bf16.mxu0 %v757
        %1336 = vmatpush1.bf16.msra.mxu0 %v756
        %1337 = vmatprep.subr.bf16.mxu0 %v754
        %1338 = vmatpush1.bf16.msra.mxu0 %v753
        %1339 = vmatprep.subr.bf16.mxu0 %v751
        %1340 = vmatpush1.bf16.msra.mxu0 %v750
        %1341 = vmatprep.subr.bf16.mxu0 %v748
        %1342 = vmatpush1.bf16.msra.mxu0 %v747
        %1343 = vmatprep.subr.bf16.mxu0 0
        %1344 = vmatpush2.bf16.msra.mxu0 0
        %1345 = vmatprep.subr.bf16.mxu0 0
        %1346 = vmatpush2.bf16.msra.mxu0 0
        %1347 = vmatprep.subr.bf16.mxu0 0
        %1348 = vmatpush2.bf16.msra.mxu0 0
        %1349 = vmatprep.subr.bf16.mxu0 0
        %1350 = vmatpush2.bf16.msra.mxu0 0
        %1351 = vmatprep.subr.bf16.mxu0 0
        %1352 = vmatpush2.bf16.msra.mxu0 0
        %1353 = vmatprep.subr.bf16.mxu0 0
        %1354 = vmatpush2.bf16.msra.mxu0 0
        %1355 = vmatprep.subr.bf16.mxu0 0
        %1356 = vmatpush2.bf16.msra.mxu0 0
        %1357 = vmatprep.subr.bf16.mxu0 0
        %1358 = vmatpush2.bf16.msra.mxu0 0
        %1359 = vmatprep.mubr.bf16.mxu0 0
        %1360 = vmatmul.mubr.bf16.gmra.mxu0 %v1326
        %v1361 = vpop.f32.mrf.mxu0
        %v1362 = vadd.f32 0.0, %v1361
        %v1363 = vpop.f32.mrf.mxu0
        %v1364 = vadd.f32 0.0, %v1363
        %v1365 = vpop.f32.mrf.mxu0
        %v1366 = vpop.f32.mrf.mxu0
        %1367 = vdwg.mxu0
        %1368 = vmatprep.subr.bf16.mxu0 0
        %1369 = vmatpush1.bf16.msra.mxu0 %v770
        %1370 = vmatprep.subr.bf16.mxu0 0
        %1371 = vmatpush1.bf16.msra.mxu0 %v767
        %1372 = vmatprep.subr.bf16.mxu0 0
        %1373 = vmatpush1.bf16.msra.mxu0 %v764
        %1374 = vmatprep.subr.bf16.mxu0 0
        %1375 = vmatpush1.bf16.msra.mxu0 %v761
        %1376 = vmatprep.subr.bf16.mxu0 0
        %1377 = vmatpush1.bf16.msra.mxu0 %v758
        %1378 = vmatprep.subr.bf16.mxu0 0
        %1379 = vmatpush1.bf16.msra.mxu0 %v755
        %1380 = vmatprep.subr.bf16.mxu0 0
        %1381 = vmatpush1.bf16.msra.mxu0 %v752
        %1382 = vmatprep.subr.bf16.mxu0 0
        %1383 = vmatpush1.bf16.msra.mxu0 %v749
        %1384 = vmatprep.subr.bf16.mxu0 0
        %1385 = vmatpush2.bf16.msra.mxu0 0
        %1386 = vmatprep.subr.bf16.mxu0 0
        %1387 = vmatpush2.bf16.msra.mxu0 0
        %1388 = vmatprep.subr.bf16.mxu0 0
        %1389 = vmatpush2.bf16.msra.mxu0 0
        %1390 = vmatprep.subr.bf16.mxu0 0
        %1391 = vmatpush2.bf16.msra.mxu0 0
        %1392 = vmatprep.subr.bf16.mxu0 0
        %1393 = vmatpush2.bf16.msra.mxu0 0
        %1394 = vmatprep.subr.bf16.mxu0 0
        %1395 = vmatpush2.bf16.msra.mxu0 0
        %1396 = vmatprep.subr.bf16.mxu0 0
        %1397 = vmatpush2.bf16.msra.mxu0 0
        %1398 = vmatprep.subr.bf16.mxu0 0
        %1399 = vmatpush2.bf16.msra.mxu0 0
        %1400 = vmatprep.mubr.bf16.mxu0 0
        %1401 = vmatmul.mubr.bf16.gmra.mxu0 %v1326
        %v1402 = vpop.f32.mrf.mxu0
        %v1403 = vadd.f32 0.0, %v1402
        %v1404 = vpop.f32.mrf.mxu0
        %v1405 = vpop.f32.mrf.mxu0
        %v1406 = vpop.f32.mrf.mxu0
        %1407 = vdwg.mxu0
        %v1408 = vadd.f32 %v1323, %v1362
        %v1409 = vxor.u32 %v1408, 2147483648
        %v1410 = vmul.f32 %v1409, 1.442695
        %v1411 = vpow.pop %v1410
        %v1412 = vadd.f32 %v1411, 1.0
        %v1413 = vrcp.pop %v1412
        %v1414 = vmul.f32 1.0, %v1413
        %v1415 = vadd.f32 %v1324, %v1364
        %v1416 = vxor.u32 %v1415, 2147483648
        %v1417 = vmul.f32 %v1416, 1.442695
        %v1418 = vpow.pop %v1417
        %v1419 = vadd.f32 %v1418, 1.0
        %v1420 = vrcp.pop %v1419
        %v1421 = vmul.f32 1.0, %v1420
        %v1422 = vadd.f32 %v1403, %v894
        %v1423 = vmul.f32 %v1414, %v1422
        %v1424 = vadd.f32 %v1325, %v1423
        %v1425 = vtanh.pop %v1424
        %v1426 = vsub.f32 1.0, %v1421
        %v1427 = vmul.f32 %v1426, %v1425
        %v1428 = vmul.f32 %v1421, %v1314
        %v1429 = vadd.f32 %v1427, %v1428
        %vm1430 = vcmp.gt.s32.totalorder %v492, 4
        %v1431 = vsel %vm1430, 1, 0
        %1432 = vset.pattern.permute.xlu0 0
        %1433 = vperm.xlu0 %1432, %v1431
        %v1434 = vpop.permute.xlu0 %1433
        %vm1435 = vcmp.eq.s32.totalorder %v1434, 1
        %v1436 = vsel %vm1435, %v1429, %v1314
        %v1437 = vsel %vm1435, %v1429, 0.0
        %v1438 = vpack.c.bf16 %v1437, %v1437
        %1439 = vst [vmem:[#allocation3 + $0x4] sm:$0x1] %v1438
        %v1440 = vld [vmem:[#allocation2 + $0x18] sm:$0xc]
        %v1441 = vld [vmem:[#allocation2 + $0x20] sm:$0xc]
        %v1442 = vld [vmem:[#allocation2 + $0x28] sm:$0xc]
        %v1443 = vpack.c.bf16 %v1436, %v1436
        %1444 = vmatprep.subr.bf16.mxu0 %v769
        %1445 = vmatpush1.bf16.msra.mxu0 %v768
        %1446 = vmatprep.subr.bf16.mxu0 %v766
        %1447 = vmatpush1.bf16.msra.mxu0 %v765
        %1448 = vmatprep.subr.bf16.mxu0 %v763
        %1449 = vmatpush1.bf16.msra.mxu0 %v762
        %1450 = vmatprep.subr.bf16.mxu0 %v760
        %1451 = vmatpush1.bf16.msra.mxu0 %v759
        %1452 = vmatprep.subr.bf16.mxu0 %v757
        %1453 = vmatpush1.bf16.msra.mxu0 %v756
        %1454 = vmatprep.subr.bf16.mxu0 %v754
        %1455 = vmatpush1.bf16.msra.mxu0 %v753
        %1456 = vmatprep.subr.bf16.mxu0 %v751
        %1457 = vmatpush1.bf16.msra.mxu0 %v750
        %1458 = vmatprep.subr.bf16.mxu0 %v748
        %1459 = vmatpush1.bf16.msra.mxu0 %v747
        %1460 = vmatprep.subr.bf16.mxu0 0
        %1461 = vmatpush2.bf16.msra.mxu0 0
        %1462 = vmatprep.subr.bf16.mxu0 0
        %1463 = vmatpush2.bf16.msra.mxu0 0
        %1464 = vmatprep.subr.bf16.mxu0 0
        %1465 = vmatpush2.bf16.msra.mxu0 0
        %1466 = vmatprep.subr.bf16.mxu0 0
        %1467 = vmatpush2.bf16.msra.mxu0 0
        %1468 = vmatprep.subr.bf16.mxu0 0
        %1469 = vmatpush2.bf16.msra.mxu0 0
        %1470 = vmatprep.subr.bf16.mxu0 0
        %1471 = vmatpush2.bf16.msra.mxu0 0
        %1472 = vmatprep.subr.bf16.mxu0 0
        %1473 = vmatpush2.bf16.msra.mxu0 0
        %1474 = vmatprep.subr.bf16.mxu0 0
        %1475 = vmatpush2.bf16.msra.mxu0 0
        %1476 = vmatprep.mubr.bf16.mxu0 0
        %1477 = vmatmul.mubr.bf16.gmra.mxu0 %v1443
        %v1478 = vpop.f32.mrf.mxu0
        %v1479 = vadd.f32 0.0, %v1478
        %v1480 = vpop.f32.mrf.mxu0
        %v1481 = vadd.f32 0.0, %v1480
        %v1482 = vpop.f32.mrf.mxu0
        %v1483 = vpop.f32.mrf.mxu0
        %1484 = vdwg.mxu0
        %1485 = vmatprep.subr.bf16.mxu0 0
        %1486 = vmatpush1.bf16.msra.mxu0 %v770
        %1487 = vmatprep.subr.bf16.mxu0 0
        %1488 = vmatpush1.bf16.msra.mxu0 %v767
        %1489 = vmatprep.subr.bf16.mxu0 0
        %1490 = vmatpush1.bf16.msra.mxu0 %v764
        %1491 = vmatprep.subr.bf16.mxu0 0
        %1492 = vmatpush1.bf16.msra.mxu0 %v761
        %1493 = vmatprep.subr.bf16.mxu0 0
        %1494 = vmatpush1.bf16.msra.mxu0 %v758
        %1495 = vmatprep.subr.bf16.mxu0 0
        %1496 = vmatpush1.bf16.msra.mxu0 %v755
        %1497 = vmatprep.subr.bf16.mxu0 0
        %1498 = vmatpush1.bf16.msra.mxu0 %v752
        %1499 = vmatprep.subr.bf16.mxu0 0
        %1500 = vmatpush1.bf16.msra.mxu0 %v749
        %1501 = vmatprep.subr.bf16.mxu0 0
        %1502 = vmatpush2.bf16.msra.mxu0 0
        %1503 = vmatprep.subr.bf16.mxu0 0
        %1504 = vmatpush2.bf16.msra.mxu0 0
        %1505 = vmatprep.subr.bf16.mxu0 0
        %1506 = vmatpush2.bf16.msra.mxu0 0
        %1507 = vmatprep.subr.bf16.mxu0 0
        %1508 = vmatpush2.bf16.msra.mxu0 0
        %1509 = vmatprep.subr.bf16.mxu0 0
        %1510 = vmatpush2.bf16.msra.mxu0 0
        %1511 = vmatprep.subr.bf16.mxu0 0
        %1512 = vmatpush2.bf16.msra.mxu0 0
        %1513 = vmatprep.subr.bf16.mxu0 0
        %1514 = vmatpush2.bf16.msra.mxu0 0
        %1515 = vmatprep.subr.bf16.mxu0 0
        %1516 = vmatpush2.bf16.msra.mxu0 0
        %1517 = vmatprep.mubr.bf16.mxu0 0
        %1518 = vmatmul.mubr.bf16.gmra.mxu0 %v1443
        %v1519 = vpop.f32.mrf.mxu0
        %v1520 = vadd.f32 0.0, %v1519
        %v1521 = vpop.f32.mrf.mxu0
        %v1522 = vpop.f32.mrf.mxu0
        %v1523 = vpop.f32.mrf.mxu0
        %1524 = vdwg.mxu0
        %v1526 = vrot.slane %v1479, 6
        %v1528 = vadd.f32 %v1440, %v1526
        %v1529 = vxor.u32 %v1528, 2147483648
        %v1530 = vmul.f32 %v1529, 1.442695
        %v1531 = vpow.pop %v1530
        %v1532 = vadd.f32 %v1531, 1.0
        %v1533 = vrcp.pop %v1532
        %v1534 = vmul.f32 1.0, %v1533
        %v1536 = vrot.slane %v1481, 6
        %v1538 = vadd.f32 %v1441, %v1536
        %v1539 = vxor.u32 %v1538, 2147483648
        %v1540 = vmul.f32 %v1539, 1.442695
        %v1541 = vpow.pop %v1540
        %v1542 = vadd.f32 %v1541, 1.0
        %v1543 = vrcp.pop %v1542
        %v1544 = vmul.f32 1.0, %v1543
        %v1545 = vadd.f32 %v1520, %v894
        %v1547 = vrot.slane %v1545, 6
        %v1549 = vmul.f32 %v1534, %v1547
        %v1550 = vadd.f32 %v1442, %v1549
        %v1551 = vtanh.pop %v1550
        %v1552 = vsub.f32 1.0, %v1544
        %v1553 = vmul.f32 %v1552, %v1551
        %v1555 = vrot.slane %v1436, 6
        %v1557 = vmul.f32 %v1544, %v1555
        %v1558 = vadd.f32 %v1553, %v1557
        %vm1559 = vcmp.gt.s32.totalorder %v492, 5
        %v1560 = vsel %vm1559, 1, 0
        %1561 = vset.pattern.permute.xlu0 0
        %1562 = vperm.xlu0 %1561, %v1560
        %v1563 = vpop.permute.xlu0 %1562
        %vm1564 = vcmp.eq.s32.totalorder %v1563, 1
        %v1566 = vrot.slane %v1558, 2
        %v1568 = vsel %vm1564, %v1566, %v1436
        %v1569 = vsel %vm1564, %v1566, 0.0
        %v1570 = vpack.c.bf16 %v1569, %v1569
        %v1572 = vunpack.c.l.b16 %v1570
        %v1573 = vpack.c.b16 %v1572, %v1572
        %v1574 = vrot.slane %v1573, 7
        %1576 = vst [vmem:[#allocation3 + $0x4] sm:$0x2] %v1574
        %v1577 = vld [vmem:[#allocation2 + $0x18] sm:$0x30]
        %v1578 = vld [vmem:[#allocation2 + $0x20] sm:$0x30]
        %v1579 = vld [vmem:[#allocation2 + $0x28] sm:$0x30]
        %v1580 = vpack.c.bf16 %v1568, %v1568
        %1581 = vmatprep.subr.bf16.mxu0 %v769
        %1582 = vmatpush1.bf16.msra.mxu0 %v768
        %1583 = vmatprep.subr.bf16.mxu0 %v766
        %1584 = vmatpush1.bf16.msra.mxu0 %v765
        %1585 = vmatprep.subr.bf16.mxu0 %v763
        %1586 = vmatpush1.bf16.msra.mxu0 %v762
        %1587 = vmatprep.subr.bf16.mxu0 %v760
        %1588 = vmatpush1.bf16.msra.mxu0 %v759
        %1589 = vmatprep.subr.bf16.mxu0 %v757
        %1590 = vmatpush1.bf16.msra.mxu0 %v756
        %1591 = vmatprep.subr.bf16.mxu0 %v754
        %1592 = vmatpush1.bf16.msra.mxu0 %v753
        %1593 = vmatprep.subr.bf16.mxu0 %v751
        %1594 = vmatpush1.bf16.msra.mxu0 %v750
        %1595 = vmatprep.subr.bf16.mxu0 %v748
        %1596 = vmatpush1.bf16.msra.mxu0 %v747
        %1597 = vmatprep.subr.bf16.mxu0 0
        %1598 = vmatpush2.bf16.msra.mxu0 0
        %1599 = vmatprep.subr.bf16.mxu0 0
        %1600 = vmatpush2.bf16.msra.mxu0 0
        %1601 = vmatprep.subr.bf16.mxu0 0
        %1602 = vmatpush2.bf16.msra.mxu0 0
        %1603 = vmatprep.subr.bf16.mxu0 0
        %1604 = vmatpush2.bf16.msra.mxu0 0
        %1605 = vmatprep.subr.bf16.mxu0 0
        %1606 = vmatpush2.bf16.msra.mxu0 0
        %1607 = vmatprep.subr.bf16.mxu0 0
        %1608 = vmatpush2.bf16.msra.mxu0 0
        %1609 = vmatprep.subr.bf16.mxu0 0
        %1610 = vmatpush2.bf16.msra.mxu0 0
        %1611 = vmatprep.subr.bf16.mxu0 0
        %1612 = vmatpush2.bf16.msra.mxu0 0
        %1613 = vmatprep.mubr.bf16.mxu0 0
        %1614 = vmatmul.mubr.bf16.gmra.mxu0 %v1580
        %v1615 = vpop.f32.mrf.mxu0
        %v1616 = vadd.f32 0.0, %v1615
        %v1617 = vpop.f32.mrf.mxu0
        %v1618 = vadd.f32 0.0, %v1617
        %v1619 = vpop.f32.mrf.mxu0
        %v1620 = vpop.f32.mrf.mxu0
        %1621 = vdwg.mxu0
        %1622 = vmatprep.subr.bf16.mxu0 0
        %1623 = vmatpush1.bf16.msra.mxu0 %v770
        %1624 = vmatprep.subr.bf16.mxu0 0
        %1625 = vmatpush1.bf16.msra.mxu0 %v767
        %1626 = vmatprep.subr.bf16.mxu0 0
        %1627 = vmatpush1.bf16.msra.mxu0 %v764
        %1628 = vmatprep.subr.bf16.mxu0 0
        %1629 = vmatpush1.bf16.msra.mxu0 %v761
        %1630 = vmatprep.subr.bf16.mxu0 0
        %1631 = vmatpush1.bf16.msra.mxu0 %v758
        %1632 = vmatprep.subr.bf16.mxu0 0
        %1633 = vmatpush1.bf16.msra.mxu0 %v755
        %1634 = vmatprep.subr.bf16.mxu0 0
        %1635 = vmatpush1.bf16.msra.mxu0 %v752
        %1636 = vmatprep.subr.bf16.mxu0 0
        %1637 = vmatpush1.bf16.msra.mxu0 %v749
        %1638 = vmatprep.subr.bf16.mxu0 0
        %1639 = vmatpush2.bf16.msra.mxu0 0
        %1640 = vmatprep.subr.bf16.mxu0 0
        %1641 = vmatpush2.bf16.msra.mxu0 0
        %1642 = vmatprep.subr.bf16.mxu0 0
        %1643 = vmatpush2.bf16.msra.mxu0 0
        %1644 = vmatprep.subr.bf16.mxu0 0
        %1645 = vmatpush2.bf16.msra.mxu0 0
        %1646 = vmatprep.subr.bf16.mxu0 0
        %1647 = vmatpush2.bf16.msra.mxu0 0
        %1648 = vmatprep.subr.bf16.mxu0 0
        %1649 = vmatpush2.bf16.msra.mxu0 0
        %1650 = vmatprep.subr.bf16.mxu0 0
        %1651 = vmatpush2.bf16.msra.mxu0 0
        %1652 = vmatprep.subr.bf16.mxu0 0
        %1653 = vmatpush2.bf16.msra.mxu0 0
        %1654 = vmatprep.mubr.bf16.mxu0 0
        %1655 = vmatmul.mubr.bf16.gmra.mxu0 %v1580
        %v1656 = vpop.f32.mrf.mxu0
        %v1657 = vadd.f32 0.0, %v1656
        %v1658 = vpop.f32.mrf.mxu0
        %v1659 = vpop.f32.mrf.mxu0
        %v1660 = vpop.f32.mrf.mxu0
        %1661 = vdwg.mxu0
        %v1663 = vrot.slane %v1616, 4
        %v1665 = vadd.f32 %v1577, %v1663
        %v1666 = vxor.u32 %v1665, 2147483648
        %v1667 = vmul.f32 %v1666, 1.442695
        %v1668 = vpow.pop %v1667
        %v1669 = vadd.f32 %v1668, 1.0
        %v1670 = vrcp.pop %v1669
        %v1671 = vmul.f32 1.0, %v1670
        %v1673 = vrot.slane %v1618, 4
        %v1675 = vadd.f32 %v1578, %v1673
        %v1676 = vxor.u32 %v1675, 2147483648
        %v1677 = vmul.f32 %v1676, 1.442695
        %v1678 = vpow.pop %v1677
        %v1679 = vadd.f32 %v1678, 1.0
        %v1680 = vrcp.pop %v1679
        %v1681 = vmul.f32 1.0, %v1680
        %v1682 = vadd.f32 %v1657, %v894
        %v1684 = vrot.slane %v1682, 4
        %v1686 = vmul.f32 %v1671, %v1684
        %v1687 = vadd.f32 %v1579, %v1686
        %v1688 = vtanh.pop %v1687
        %v1689 = vsub.f32 1.0, %v1681
        %v1690 = vmul.f32 %v1689, %v1688
        %v1692 = vrot.slane %v1568, 4
        %v1694 = vmul.f32 %v1681, %v1692
        %v1695 = vadd.f32 %v1690, %v1694
        %vm1696 = vcmp.gt.s32.totalorder %v492, 6
        %v1697 = vsel %vm1696, 1, 0
        %1698 = vset.pattern.permute.xlu0 0
        %1699 = vperm.xlu0 %1698, %v1697
        %v1700 = vpop.permute.xlu0 %1699
        %vm1701 = vcmp.eq.s32.totalorder %v1700, 1
        %v1703 = vrot.slane %v1695, 4
        %v1705 = vsel %vm1701, %v1703, %v1568
        %v1706 = vsel %vm1701, %v1703, 0.0
        %v1707 = vpack.c.bf16 %v1706, %v1706
        %v1709 = vunpack.c.l.b16 %v1707
        %v1710 = vpack.c.b16 %v1709, %v1709
        %v1711 = vrot.slane %v1710, 6
        %1713 = vst [vmem:[#allocation3 + $0x4] sm:$0x4] %v1711
        %v1714 = vld [vmem:[#allocation2 + $0x18] sm:$0xc0]
        %v1715 = vld [vmem:[#allocation2 + $0x20] sm:$0xc0]
        %v1716 = vld [vmem:[#allocation2 + $0x28] sm:$0xc0]
        %v1717 = vpack.c.bf16 %v1705, %v1705
        %1718 = vmatprep.subr.bf16.mxu0 %v769
        %1719 = vmatpush1.bf16.msra.mxu0 %v768
        %1720 = vmatprep.subr.bf16.mxu0 %v766
        %1721 = vmatpush1.bf16.msra.mxu0 %v765
        %1722 = vmatprep.subr.bf16.mxu0 %v763
        %1723 = vmatpush1.bf16.msra.mxu0 %v762
        %1724 = vmatprep.subr.bf16.mxu0 %v760
        %1725 = vmatpush1.bf16.msra.mxu0 %v759
        %1726 = vmatprep.subr.bf16.mxu0 %v757
        %1727 = vmatpush1.bf16.msra.mxu0 %v756
        %1728 = vmatprep.subr.bf16.mxu0 %v754
        %1729 = vmatpush1.bf16.msra.mxu0 %v753
        %1730 = vmatprep.subr.bf16.mxu0 %v751
        %1731 = vmatpush1.bf16.msra.mxu0 %v750
        %1732 = vmatprep.subr.bf16.mxu0 %v748
        %1733 = vmatpush1.bf16.msra.mxu0 %v747
        %1734 = vmatprep.subr.bf16.mxu0 0
        %1735 = vmatpush2.bf16.msra.mxu0 0
        %1736 = vmatprep.subr.bf16.mxu0 0
        %1737 = vmatpush2.bf16.msra.mxu0 0
        %1738 = vmatprep.subr.bf16.mxu0 0
        %1739 = vmatpush2.bf16.msra.mxu0 0
        %1740 = vmatprep.subr.bf16.mxu0 0
        %1741 = vmatpush2.bf16.msra.mxu0 0
        %1742 = vmatprep.subr.bf16.mxu0 0
        %1743 = vmatpush2.bf16.msra.mxu0 0
        %1744 = vmatprep.subr.bf16.mxu0 0
        %1745 = vmatpush2.bf16.msra.mxu0 0
        %1746 = vmatprep.subr.bf16.mxu0 0
        %1747 = vmatpush2.bf16.msra.mxu0 0
        %1748 = vmatprep.subr.bf16.mxu0 0
        %1749 = vmatpush2.bf16.msra.mxu0 0
        %1750 = vmatprep.mubr.bf16.mxu0 0
        %1751 = vmatmul.mubr.bf16.gmra.mxu0 %v1717
        %v1752 = vpop.f32.mrf.mxu0
        %v1753 = vadd.f32 0.0, %v1752
        %v1754 = vpop.f32.mrf.mxu0
        %v1755 = vadd.f32 0.0, %v1754
        %v1756 = vpop.f32.mrf.mxu0
        %v1757 = vpop.f32.mrf.mxu0
        %1758 = vdwg.mxu0
        %1759 = vmatprep.subr.bf16.mxu0 0
        %1760 = vmatpush1.bf16.msra.mxu0 %v770
        %1761 = vmatprep.subr.bf16.mxu0 0
        %1762 = vmatpush1.bf16.msra.mxu0 %v767
        %1763 = vmatprep.subr.bf16.mxu0 0
        %1764 = vmatpush1.bf16.msra.mxu0 %v764
        %1765 = vmatprep.subr.bf16.mxu0 0
        %1766 = vmatpush1.bf16.msra.mxu0 %v761
        %1767 = vmatprep.subr.bf16.mxu0 0
        %1768 = vmatpush1.bf16.msra.mxu0 %v758
        %1769 = vmatprep.subr.bf16.mxu0 0
        %1770 = vmatpush1.bf16.msra.mxu0 %v755
        %1771 = vmatprep.subr.bf16.mxu0 0
        %1772 = vmatpush1.bf16.msra.mxu0 %v752
        %1773 = vmatprep.subr.bf16.mxu0 0
        %1774 = vmatpush1.bf16.msra.mxu0 %v749
        %1775 = vmatprep.subr.bf16.mxu0 0
        %1776 = vmatpush2.bf16.msra.mxu0 0
        %1777 = vmatprep.subr.bf16.mxu0 0
        %1778 = vmatpush2.bf16.msra.mxu0 0
        %1779 = vmatprep.subr.bf16.mxu0 0
        %1780 = vmatpush2.bf16.msra.mxu0 0
        %1781 = vmatprep.subr.bf16.mxu0 0
        %1782 = vmatpush2.bf16.msra.mxu0 0
        %1783 = vmatprep.subr.bf16.mxu0 0
        %1784 = vmatpush2.bf16.msra.mxu0 0
        %1785 = vmatprep.subr.bf16.mxu0 0
        %1786 = vmatpush2.bf16.msra.mxu0 0
        %1787 = vmatprep.subr.bf16.mxu0 0
        %1788 = vmatpush2.bf16.msra.mxu0 0
        %1789 = vmatprep.subr.bf16.mxu0 0
        %1790 = vmatpush2.bf16.msra.mxu0 0
        %1791 = vmatprep.mubr.bf16.mxu0 0
        %1792 = vmatmul.mubr.bf16.gmra.mxu0 %v1717
        %v1793 = vpop.f32.mrf.mxu0
        %v1794 = vadd.f32 0.0, %v1793
        %v1795 = vpop.f32.mrf.mxu0
        %v1796 = vpop.f32.mrf.mxu0
        %v1797 = vpop.f32.mrf.mxu0
        %1798 = vdwg.mxu0
        %v1800 = vrot.slane %v1753, 2
        %v1802 = vadd.f32 %v1714, %v1800
        %v1803 = vxor.u32 %v1802, 2147483648
        %v1804 = vmul.f32 %v1803, 1.442695
        %v1805 = vpow.pop %v1804
        %v1806 = vadd.f32 %v1805, 1.0
        %v1807 = vrcp.pop %v1806
        %v1808 = vmul.f32 1.0, %v1807
        %v1810 = vrot.slane %v1755, 2
        %v1812 = vadd.f32 %v1715, %v1810
        %v1813 = vxor.u32 %v1812, 2147483648
        %v1814 = vmul.f32 %v1813, 1.442695
        %v1815 = vpow.pop %v1814
        %v1816 = vadd.f32 %v1815, 1.0
        %v1817 = vrcp.pop %v1816
        %v1818 = vmul.f32 1.0, %v1817
        %v1819 = vadd.f32 %v1794, %v894
        %v1821 = vrot.slane %v1819, 2
        %v1823 = vmul.f32 %v1808, %v1821
        %v1824 = vadd.f32 %v1716, %v1823
        %v1825 = vtanh.pop %v1824
        %v1826 = vsub.f32 1.0, %v1818
        %v1827 = vmul.f32 %v1826, %v1825
        %v1829 = vrot.slane %v1705, 2
        %v1831 = vmul.f32 %v1818, %v1829
        %v1832 = vadd.f32 %v1827, %v1831
        %vm1833 = vcmp.gt.s32.totalorder %v492, 7
        %v1834 = vsel %vm1833, 1, 0
        %1835 = vset.pattern.permute.xlu0 0
        %1836 = vperm.xlu0 %1835, %v1834
        %v1837 = vpop.permute.xlu0 %1836
        %vm1838 = vcmp.eq.s32.totalorder %v1837, 1
        %v1840 = vrot.slane %v1832, 6
        %v1842 = vsel %vm1838, %v1840, %v1705
        %v1843 = vsel %vm1838, %v1840, 0.0
        %v1844 = vpack.c.bf16 %v1843, %v1843
        %v1846 = vunpack.c.l.b16 %v1844
        %v1847 = vpack.c.b16 %v1846, %v1846
        %v1848 = vrot.slane %v1847, 5
        %1850 = vst [vmem:[#allocation3 + $0x4] sm:$0x8] %v1848
        %1851 = vst [vmem:[%s486] sm:$0x3] %v1842
        %v1852 = vld [vmem:[#allocation10] sm:$0xff]
        %v1853 = vld [vmem:[#allocation10 + $0x8] sm:$0xf]
        %v1854 = vld [vmem:[#allocation10 + $0xc] sm:$0xff]
        %v1855 = vld [vmem:[#allocation10 + $0x14] sm:$0xf]
        %v1856 = vld [vmem:[#allocation10 + $0x18] sm:$0xff]
        %v1857 = vld [vmem:[#allocation10 + $0x20] sm:$0xf]
        %v1858 = vld [vmem:[#allocation10 + $0x24] sm:$0xff]
        %v1859 = vld [vmem:[#allocation10 + $0x2c] sm:$0xf]
        %v1860 = vld [vmem:[#allocation10 + $0x30] sm:$0xff]
        %v1861 = vld [vmem:[#allocation10 + $0x38] sm:$0xf]
        %v1862 = vld [vmem:[#allocation10 + $0x3c] sm:$0xff]
        %v1863 = vld [vmem:[#allocation10 + $0x44] sm:$0xf]
        %v1864 = vld [vmem:[#allocation10 + $0x48] sm:$0xff]
        %v1865 = vld [vmem:[#allocation10 + $0x50] sm:$0xf]
        %v1866 = vld [vmem:[#allocation10 + $0x54] sm:$0xff]
        %v1867 = vld [vmem:[#allocation10 + $0x5c] sm:$0xf]
        %v1868 = vld [vmem:[#allocation10 + $0x60] sm:$0xff]
        %v1869 = vld [vmem:[#allocation10 + $0x68] sm:$0xf]
        %v1870 = vld [vmem:[#allocation10 + $0x6c] sm:$0xff]
        %v1871 = vld [vmem:[#allocation10 + $0x74] sm:$0xf]
        %v1872 = vld [vmem:[#allocation10 + $0x78] sm:$0xff]
        %v1873 = vld [vmem:[#allocation10 + $0x80] sm:$0xf]
        %v1874 = vld [vmem:[#allocation10 + $0x84] sm:$0xff]
        %v1875 = vld [vmem:[#allocation10 + $0x8c] sm:$0xf]
        %v1876 = vld [vmem:[#allocation10 + $0x90] sm:$0xff]
        %v1877 = vld [vmem:[#allocation10 + $0x98] sm:$0xf]
        %v1878 = vld [vmem:[#allocation10 + $0x9c] sm:$0xff]
        %v1879 = vld [vmem:[#allocation10 + $0xa4] sm:$0xf]
        %v1880 = vld [vmem:[#allocation10 + $0xa8] sm:$0xff]
        %v1881 = vld [vmem:[#allocation10 + $0xb0] sm:$0xf]
        %v1882 = vld [vmem:[#allocation10 + $0xb4] sm:$0xff]
        %v1883 = vld [vmem:[#allocation10 + $0xbc] sm:$0xf]
        %v1884 = vld [vmem:[#allocation12] sm:$0xff]
        %v1885 = vld [vmem:[#allocation12 + $0x8] sm:$0xf]
        %v1886 = vld [vmem:[#allocation12 + $0xc] sm:$0xff]
        %v1887 = vld [vmem:[#allocation12 + $0x14] sm:$0xf]
        %v1888 = vld [vmem:[#allocation12 + $0x18] sm:$0xff]
        %v1889 = vld [vmem:[#allocation12 + $0x20] sm:$0xf]
        %v1890 = vld [vmem:[#allocation12 + $0x24] sm:$0xff]
        %v1891 = vld [vmem:[#allocation12 + $0x2c] sm:$0xf]
        %v1892 = vld [vmem:[#allocation12 + $0x30] sm:$0xff]
        %v1893 = vld [vmem:[#allocation12 + $0x38] sm:$0xf]
        %v1894 = vld [vmem:[#allocation12 + $0x3c] sm:$0xff]
        %v1895 = vld [vmem:[#allocation12 + $0x44] sm:$0xf]
        %v1896 = vld [vmem:[#allocation12 + $0x48] sm:$0xff]
        %v1897 = vld [vmem:[#allocation12 + $0x50] sm:$0xf]
        %v1898 = vld [vmem:[#allocation12 + $0x54] sm:$0xff]
        %v1899 = vld [vmem:[#allocation12 + $0x5c] sm:$0xf]
        %v1900 = vld [vmem:[#allocation12 + $0x60] sm:$0xff]
        %v1901 = vld [vmem:[#allocation12 + $0x68] sm:$0xf]
        %v1902 = vld [vmem:[#allocation12 + $0x6c] sm:$0xff]
        %v1903 = vld [vmem:[#allocation12 + $0x74] sm:$0xf]
        %v1904 = vld [vmem:[#allocation12 + $0x78] sm:$0xff]
        %v1905 = vld [vmem:[#allocation12 + $0x80] sm:$0xf]
        %v1906 = vld [vmem:[#allocation12 + $0x84] sm:$0xff]
        %v1907 = vld [vmem:[#allocation12 + $0x8c] sm:$0xf]
        %v1908 = vld [vmem:[#allocation12 + $0x90] sm:$0xff]
        %v1909 = vld [vmem:[#allocation12 + $0x98] sm:$0xf]
        %v1910 = vld [vmem:[#allocation12 + $0x9c] sm:$0xff]
        %v1911 = vld [vmem:[#allocation12 + $0xa4] sm:$0xf]
        %v1912 = vld [vmem:[#allocation12 + $0xa8] sm:$0xff]
        %v1913 = vld [vmem:[#allocation12 + $0xb0] sm:$0xf]
        %v1914 = vld [vmem:[#allocation12 + $0xb4] sm:$0xff]
        %v1915 = vld [vmem:[#allocation12 + $0xbc] sm:$0xf]
        %v1916 = vld [vmem:[%s8] sm:$0x7]
        %v1917 = vld [vmem:[%s9] sm:$0x1]
        %v1918 = vld [vmem:[#allocation3] sm:$0xf]
        %v1919 = vld [vmem:[#allocation3 + $0x4] sm:$0xf]
        %v1921 = vlaneseq
        %v1922 = vshrl.u32 %v1921, 7
        %v1923 = vsub.s32 0, %v1922
        %v1924 = vrot.slane %v1916, %v1923
        %v1925 = vlaneseq
        %v1926 = vshrl.u32 %v1925, 7
        %v1927 = vsub.s32 1, %v1926
        %v1928 = vrot.slane %v1916, %v1927
        %v1929 = vlaneseq
        %v1930 = vshrl.u32 %v1929, 7
        %v1931 = vsub.s32 2, %v1930
        %v1932 = vrot.slane %v1916, %v1931
        %v1938 = vunpack.c.l.b16 %v1918
        %v1939 = vunpack.c.l.b16 %v1919
        %v1940 = vpack.c.b16 %v1939, %v1938
        %v1974 = vunpack.c.l.b16 %v1852
        %v1975 = vunpack.c.h.b16 %v1852
        %v1976 = vunpack.c.l.b16 %v1853
        %v1977 = vunpack.c.l.b16 %v1854
        %v1978 = vunpack.c.h.b16 %v1854
        %v1979 = vunpack.c.l.b16 %v1855
        %v1980 = vunpack.c.l.b16 %v1856
        %v1981 = vunpack.c.h.b16 %v1856
        %v1982 = vunpack.c.l.b16 %v1857
        %v1983 = vunpack.c.l.b16 %v1858
        %v1984 = vunpack.c.h.b16 %v1858
        %v1985 = vunpack.c.l.b16 %v1859
        %v1986 = vunpack.c.l.b16 %v1860
        %v1987 = vunpack.c.h.b16 %v1860
        %v1988 = vunpack.c.l.b16 %v1861
        %v1989 = vunpack.c.l.b16 %v1862
        %v1990 = vunpack.c.h.b16 %v1862
        %v1991 = vunpack.c.l.b16 %v1863
        %v1992 = vunpack.c.l.b16 %v1864
        %v1993 = vunpack.c.h.b16 %v1864
        %v1994 = vunpack.c.l.b16 %v1865
        %v1995 = vunpack.c.l.b16 %v1866
        %v1996 = vunpack.c.h.b16 %v1866
        %v1997 = vunpack.c.l.b16 %v1867
        %v1998 = vunpack.c.l.b16 %v1868
        %v1999 = vunpack.c.h.b16 %v1868
        %v2000 = vunpack.c.l.b16 %v1869
        %v2001 = vunpack.c.l.b16 %v1870
        %v2002 = vunpack.c.h.b16 %v1870
        %v2003 = vunpack.c.l.b16 %v1871
        %v2004 = vunpack.c.l.b16 %v1872
        %v2005 = vunpack.c.h.b16 %v1872
        %v2006 = vunpack.c.l.b16 %v1873
        %v2007 = vunpack.c.l.b16 %v1874
        %v2008 = vunpack.c.h.b16 %v1874
        %v2009 = vunpack.c.l.b16 %v1875
        %v2010 = vunpack.c.l.b16 %v1876
        %v2011 = vunpack.c.h.b16 %v1876
        %v2012 = vunpack.c.l.b16 %v1877
        %v2013 = vunpack.c.l.b16 %v1878
        %v2014 = vunpack.c.h.b16 %v1878
        %v2015 = vunpack.c.l.b16 %v1879
        %v2016 = vunpack.c.l.b16 %v1880
        %v2017 = vunpack.c.h.b16 %v1880
        %v2018 = vunpack.c.l.b16 %v1881
        %v2019 = vunpack.c.l.b16 %v1882
        %v2020 = vunpack.c.h.b16 %v1882
        %v2021 = vunpack.c.l.b16 %v1883
        %v2022 = vpack.c.b16 %v1977, %v1974
        %v2023 = vpack.c.b16 %v1978, %v1975
        %v2024 = vpack.c.b16 %v1979, %v1976
        %v2025 = vpack.c.b16 %v1983, %v1980
        %v2026 = vpack.c.b16 %v1984, %v1981
        %v2027 = vpack.c.b16 %v1985, %v1982
        %v2028 = vpack.c.b16 %v1989, %v1986
        %v2029 = vpack.c.b16 %v1990, %v1987
        %v2030 = vpack.c.b16 %v1991, %v1988
        %v2031 = vpack.c.b16 %v1995, %v1992
        %v2032 = vpack.c.b16 %v1996, %v1993
        %v2033 = vpack.c.b16 %v1997, %v1994
        %v2034 = vpack.c.b16 %v2001, %v1998
        %v2035 = vpack.c.b16 %v2002, %v1999
        %v2036 = vpack.c.b16 %v2003, %v2000
        %v2037 = vpack.c.b16 %v2007, %v2004
        %v2038 = vpack.c.b16 %v2008, %v2005
        %v2039 = vpack.c.b16 %v2009, %v2006
        %v2040 = vpack.c.b16 %v2013, %v2010
        %v2041 = vpack.c.b16 %v2014, %v2011
        %v2042 = vpack.c.b16 %v2015, %v2012
        %v2043 = vpack.c.b16 %v2019, %v2016
        %v2044 = vpack.c.b16 %v2020, %v2017
        %v2045 = vpack.c.b16 %v2021, %v2018
        %2070 = vmatprep.subr.bf16.mxu0 %v2044
        %2071 = vmatpush1.bf16.msra.mxu0 %v2043
        %2072 = vmatprep.subr.bf16.mxu0 %v2041
        %2073 = vmatpush1.bf16.msra.mxu0 %v2040
        %2074 = vmatprep.subr.bf16.mxu0 %v2038
        %2075 = vmatpush1.bf16.msra.mxu0 %v2037
        %2076 = vmatprep.subr.bf16.mxu0 %v2035
        %2077 = vmatpush1.bf16.msra.mxu0 %v2034
        %2078 = vmatprep.subr.bf16.mxu0 %v2032
        %2079 = vmatpush1.bf16.msra.mxu0 %v2031
        %2080 = vmatprep.subr.bf16.mxu0 %v2029
        %2081 = vmatpush1.bf16.msra.mxu0 %v2028
        %2082 = vmatprep.subr.bf16.mxu0 %v2026
        %2083 = vmatpush1.bf16.msra.mxu0 %v2025
        %2084 = vmatprep.subr.bf16.mxu0 %v2023
        %2085 = vmatpush1.bf16.msra.mxu0 %v2022
        %2086 = vmatprep.subr.bf16.mxu0 0
        %2087 = vmatpush2.bf16.msra.mxu0 0
        %2088 = vmatprep.subr.bf16.mxu0 0
        %2089 = vmatpush2.bf16.msra.mxu0 0
        %2090 = vmatprep.subr.bf16.mxu0 0
        %2091 = vmatpush2.bf16.msra.mxu0 0
        %2092 = vmatprep.subr.bf16.mxu0 0
        %2093 = vmatpush2.bf16.msra.mxu0 0
        %2094 = vmatprep.subr.bf16.mxu0 0
        %2095 = vmatpush2.bf16.msra.mxu0 0
        %2096 = vmatprep.subr.bf16.mxu0 0
        %2097 = vmatpush2.bf16.msra.mxu0 0
        %2098 = vmatprep.subr.bf16.mxu0 0
        %2099 = vmatpush2.bf16.msra.mxu0 0
        %2100 = vmatprep.subr.bf16.mxu0 0
        %2101 = vmatpush2.bf16.msra.mxu0 0
        %2102 = vmatprep.mubr.bf16.mxu0 0
        %2103 = vmatmul.mubr.bf16.gmra.mxu0 %v1940
        %v2104 = vpop.f32.mrf.mxu0
        %v2105 = vadd.f32 %v1924, %v2104
        %v2106 = vpop.f32.mrf.mxu0
        %v2107 = vadd.f32 %v1928, %v2106
        %v2108 = vpop.f32.mrf.mxu0
        %v2109 = vadd.f32 %v1924, %v2108
        %v2110 = vpop.f32.mrf.mxu0
        %v2111 = vadd.f32 %v1928, %v2110
        %2112 = vdwg.mxu0
        %2113 = vmatprep.subr.bf16.mxu0 0
        %2114 = vmatpush1.bf16.msra.mxu0 %v2045
        %2115 = vmatprep.subr.bf16.mxu0 0
        %2116 = vmatpush1.bf16.msra.mxu0 %v2042
        %2117 = vmatprep.subr.bf16.mxu0 0
        %2118 = vmatpush1.bf16.msra.mxu0 %v2039
        %2119 = vmatprep.subr.bf16.mxu0 0
        %2120 = vmatpush1.bf16.msra.mxu0 %v2036
        %2121 = vmatprep.subr.bf16.mxu0 0
        %2122 = vmatpush1.bf16.msra.mxu0 %v2033
        %2123 = vmatprep.subr.bf16.mxu0 0
        %2124 = vmatpush1.bf16.msra.mxu0 %v2030
        %2125 = vmatprep.subr.bf16.mxu0 0
        %2126 = vmatpush1.bf16.msra.mxu0 %v2027
        %2127 = vmatprep.subr.bf16.mxu0 0
        %2128 = vmatpush1.bf16.msra.mxu0 %v2024
        %2129 = vmatprep.subr.bf16.mxu0 0
        %2130 = vmatpush2.bf16.msra.mxu0 0
        %2131 = vmatprep.subr.bf16.mxu0 0
        %2132 = vmatpush2.bf16.msra.mxu0 0
        %2133 = vmatprep.subr.bf16.mxu0 0
        %2134 = vmatpush2.bf16.msra.mxu0 0
        %2135 = vmatprep.subr.bf16.mxu0 0
        %2136 = vmatpush2.bf16.msra.mxu0 0
        %2137 = vmatprep.subr.bf16.mxu0 0
        %2138 = vmatpush2.bf16.msra.mxu0 0
        %2139 = vmatprep.subr.bf16.mxu0 0
        %2140 = vmatpush2.bf16.msra.mxu0 0
        %2141 = vmatprep.subr.bf16.mxu0 0
        %2142 = vmatpush2.bf16.msra.mxu0 0
        %2143 = vmatprep.subr.bf16.mxu0 0
        %2144 = vmatpush2.bf16.msra.mxu0 0
        %2145 = vmatprep.mubr.bf16.mxu0 0
        %2146 = vmatmul.mubr.bf16.gmra.mxu0 %v1940
        %v2147 = vpop.f32.mrf.mxu0
        %v2148 = vadd.f32 %v1932, %v2147
        %v2149 = vpop.f32.mrf.mxu0
        %v2150 = vpop.f32.mrf.mxu0
        %v2151 = vadd.f32 %v1932, %v2150
        %v2152 = vpop.f32.mrf.mxu0
        %2153 = vdwg.mxu0
        %2154 = vst [vmem:[#allocation2] sm:$0xff] %v2105
        %2155 = vst [vmem:[#allocation2 + $0x8] sm:$0xff] %v2107
        %2156 = vst [vmem:[#allocation2 + $0x10] sm:$0xff] %v2148
        %2157 = vst [vmem:[#allocation2 + $0x18] sm:$0xff] %v2109
        %2158 = vst [vmem:[#allocation2 + $0x20] sm:$0xff] %v2111
        %2159 = vst [vmem:[#allocation2 + $0x28] sm:$0xff] %v2151
        %v2160 = vld [vmem:[#allocation2] sm:$0x3]
        %v2161 = vld [vmem:[#allocation2 + $0x8] sm:$0x3]
        %v2162 = vld [vmem:[#allocation2 + $0x10] sm:$0x3]
        %v2195 = vunpack.c.l.b16 %v1884
        %v2196 = vunpack.c.h.b16 %v1884
        %v2197 = vunpack.c.l.b16 %v1885
        %v2198 = vunpack.c.l.b16 %v1886
        %v2199 = vunpack.c.h.b16 %v1886
        %v2200 = vunpack.c.l.b16 %v1887
        %v2201 = vunpack.c.l.b16 %v1888
        %v2202 = vunpack.c.h.b16 %v1888
        %v2203 = vunpack.c.l.b16 %v1889
        %v2204 = vunpack.c.l.b16 %v1890
        %v2205 = vunpack.c.h.b16 %v1890
        %v2206 = vunpack.c.l.b16 %v1891
        %v2207 = vunpack.c.l.b16 %v1892
        %v2208 = vunpack.c.h.b16 %v1892
        %v2209 = vunpack.c.l.b16 %v1893
        %v2210 = vunpack.c.l.b16 %v1894
        %v2211 = vunpack.c.h.b16 %v1894
        %v2212 = vunpack.c.l.b16 %v1895
        %v2213 = vunpack.c.l.b16 %v1896
        %v2214 = vunpack.c.h.b16 %v1896
        %v2215 = vunpack.c.l.b16 %v1897
        %v2216 = vunpack.c.l.b16 %v1898
        %v2217 = vunpack.c.h.b16 %v1898
        %v2218 = vunpack.c.l.b16 %v1899
        %v2219 = vunpack.c.l.b16 %v1900
        %v2220 = vunpack.c.h.b16 %v1900
        %v2221 = vunpack.c.l.b16 %v1901
        %v2222 = vunpack.c.l.b16 %v1902
        %v2223 = vunpack.c.h.b16 %v1902
        %v2224 = vunpack.c.l.b16 %v1903
        %v2225 = vunpack.c.l.b16 %v1904
        %v2226 = vunpack.c.h.b16 %v1904
        %v2227 = vunpack.c.l.b16 %v1905
        %v2228 = vunpack.c.l.b16 %v1906
        %v2229 = vunpack.c.h.b16 %v1906
        %v2230 = vunpack.c.l.b16 %v1907
        %v2231 = vunpack.c.l.b16 %v1908
        %v2232 = vunpack.c.h.b16 %v1908
        %v2233 = vunpack.c.l.b16 %v1909
        %v2234 = vunpack.c.l.b16 %v1910
        %v2235 = vunpack.c.h.b16 %v1910
        %v2236 = vunpack.c.l.b16 %v1911
        %v2237 = vunpack.c.l.b16 %v1912
        %v2238 = vunpack.c.h.b16 %v1912
        %v2239 = vunpack.c.l.b16 %v1913
        %v2240 = vunpack.c.l.b16 %v1914
        %v2241 = vunpack.c.h.b16 %v1914
        %v2242 = vunpack.c.l.b16 %v1915
        %v2243 = vpack.c.b16 %v2198, %v2195
        %v2244 = vpack.c.b16 %v2199, %v2196
        %v2245 = vpack.c.b16 %v2200, %v2197
        %v2246 = vpack.c.b16 %v2204, %v2201
        %v2247 = vpack.c.b16 %v2205, %v2202
        %v2248 = vpack.c.b16 %v2206, %v2203
        %v2249 = vpack.c.b16 %v2210, %v2207
        %v2250 = vpack.c.b16 %v2211, %v2208
        %v2251 = vpack.c.b16 %v2212, %v2209
        %v2252 = vpack.c.b16 %v2216, %v2213
        %v2253 = vpack.c.b16 %v2217, %v2214
        %v2254 = vpack.c.b16 %v2218, %v2215
        %v2255 = vpack.c.b16 %v2222, %v2219
        %v2256 = vpack.c.b16 %v2223, %v2220
        %v2257 = vpack.c.b16 %v2224, %v2221
        %v2258 = vpack.c.b16 %v2228, %v2225
        %v2259 = vpack.c.b16 %v2229, %v2226
        %v2260 = vpack.c.b16 %v2230, %v2227
        %v2261 = vpack.c.b16 %v2234, %v2231
        %v2262 = vpack.c.b16 %v2235, %v2232
        %v2263 = vpack.c.b16 %v2236, %v2233
        %v2264 = vpack.c.b16 %v2240, %v2237
        %v2265 = vpack.c.b16 %v2241, %v2238
        %v2266 = vpack.c.b16 %v2242, %v2239
        %2291 = vmatprep.subr.bf16.mxu0 %v2265
        %2292 = vmatpush1.bf16.msra.mxu0 %v2264
        %2293 = vmatprep.subr.bf16.mxu0 %v2262
        %2294 = vmatpush1.bf16.msra.mxu0 %v2261
        %2295 = vmatprep.subr.bf16.mxu0 %v2259
        %2296 = vmatpush1.bf16.msra.mxu0 %v2258
        %2297 = vmatprep.subr.bf16.mxu0 %v2256
        %2298 = vmatpush1.bf16.msra.mxu0 %v2255
        %2299 = vmatprep.subr.bf16.mxu0 %v2253
        %2300 = vmatpush1.bf16.msra.mxu0 %v2252
        %2301 = vmatprep.subr.bf16.mxu0 %v2250
        %2302 = vmatpush1.bf16.msra.mxu0 %v2249
        %2303 = vmatprep.subr.bf16.mxu0 %v2247
        %2304 = vmatpush1.bf16.msra.mxu0 %v2246
        %2305 = vmatprep.subr.bf16.mxu0 %v2244
        %2306 = vmatpush1.bf16.msra.mxu0 %v2243
        %2307 = vmatprep.subr.bf16.mxu0 0
        %2308 = vmatpush2.bf16.msra.mxu0 0
        %2309 = vmatprep.subr.bf16.mxu0 0
        %2310 = vmatpush2.bf16.msra.mxu0 0
        %2311 = vmatprep.subr.bf16.mxu0 0
        %2312 = vmatpush2.bf16.msra.mxu0 0
        %2313 = vmatprep.subr.bf16.mxu0 0
        %2314 = vmatpush2.bf16.msra.mxu0 0
        %2315 = vmatprep.subr.bf16.mxu0 0
        %2316 = vmatpush2.bf16.msra.mxu0 0
        %2317 = vmatprep.subr.bf16.mxu0 0
        %2318 = vmatpush2.bf16.msra.mxu0 0
        %2319 = vmatprep.subr.bf16.mxu0 0
        %2320 = vmatpush2.bf16.msra.mxu0 0
        %2321 = vmatprep.subr.bf16.mxu0 0
        %2322 = vmatpush2.bf16.msra.mxu0 0
        %2323 = vmatprep.mubr.bf16.mxu0 0
        %2324 = vmatmul.mubr.bf16.gmra.mxu0 0
        %v2325 = vpop.f32.mrf.mxu0
        %v2326 = vadd.f32 0.0, %v2325
        %v2327 = vpop.f32.mrf.mxu0
        %v2328 = vadd.f32 0.0, %v2327
        %v2329 = vpop.f32.mrf.mxu0
        %v2330 = vpop.f32.mrf.mxu0
        %2331 = vdwg.mxu0
        %2332 = vmatprep.subr.bf16.mxu0 0
        %2333 = vmatpush1.bf16.msra.mxu0 %v2266
        %2334 = vmatprep.subr.bf16.mxu0 0
        %2335 = vmatpush1.bf16.msra.mxu0 %v2263
        %2336 = vmatprep.subr.bf16.mxu0 0
        %2337 = vmatpush1.bf16.msra.mxu0 %v2260
        %2338 = vmatprep.subr.bf16.mxu0 0
        %2339 = vmatpush1.bf16.msra.mxu0 %v2257
        %2340 = vmatprep.subr.bf16.mxu0 0
        %2341 = vmatpush1.bf16.msra.mxu0 %v2254
        %2342 = vmatprep.subr.bf16.mxu0 0
        %2343 = vmatpush1.bf16.msra.mxu0 %v2251
        %2344 = vmatprep.subr.bf16.mxu0 0
        %2345 = vmatpush1.bf16.msra.mxu0 %v2248
        %2346 = vmatprep.subr.bf16.mxu0 0
        %2347 = vmatpush1.bf16.msra.mxu0 %v2245
        %2348 = vmatprep.subr.bf16.mxu0 0
        %2349 = vmatpush2.bf16.msra.mxu0 0
        %2350 = vmatprep.subr.bf16.mxu0 0
        %2351 = vmatpush2.bf16.msra.mxu0 0
        %2352 = vmatprep.subr.bf16.mxu0 0
        %2353 = vmatpush2.bf16.msra.mxu0 0
        %2354 = vmatprep.subr.bf16.mxu0 0
        %2355 = vmatpush2.bf16.msra.mxu0 0
        %2356 = vmatprep.subr.bf16.mxu0 0
        %2357 = vmatpush2.bf16.msra.mxu0 0
        %2358 = vmatprep.subr.bf16.mxu0 0
        %2359 = vmatpush2.bf16.msra.mxu0 0
        %2360 = vmatprep.subr.bf16.mxu0 0
        %2361 = vmatpush2.bf16.msra.mxu0 0
        %2362 = vmatprep.subr.bf16.mxu0 0
        %2363 = vmatpush2.bf16.msra.mxu0 0
        %2364 = vmatprep.mubr.bf16.mxu0 0
        %2365 = vmatmul.mubr.bf16.gmra.mxu0 0
        %v2366 = vpop.f32.mrf.mxu0
        %v2367 = vadd.f32 0.0, %v2366
        %v2368 = vpop.f32.mrf.mxu0
        %v2369 = vpop.f32.mrf.mxu0
        %v2370 = vpop.f32.mrf.mxu0
        %2371 = vdwg.mxu0
        %v2372 = vadd.f32 %v2160, %v2326
        %v2373 = vxor.u32 %v2372, 2147483648
        %v2374 = vmul.f32 %v2373, 1.442695
        %v2375 = vpow.pop %v2374
        %v2376 = vadd.f32 %v2375, 1.0
        %v2377 = vrcp.pop %v2376
        %v2378 = vmul.f32 1.0, %v2377
        %v2379 = vadd.f32 %v2161, %v2328
        %v2380 = vxor.u32 %v2379, 2147483648
        %v2381 = vmul.f32 %v2380, 1.442695
        %v2382 = vpow.pop %v2381
        %v2383 = vadd.f32 %v2382, 1.0
        %v2384 = vrcp.pop %v2383
        %v2385 = vmul.f32 1.0, %v2384
        %v2387 = vlaneseq
        %v2388 = vshrl.u32 %v2387, 7
        %v2389 = vsub.s32 0, %v2388
        %v2390 = vrot.slane %v1917, %v2389
        %v2392 = vadd.f32 %v2367, %v2390
        %v2393 = vmul.f32 %v2378, %v2392
        %v2394 = vadd.f32 %v2162, %v2393
        %v2395 = vtanh.pop %v2394
        %v2396 = vsub.f32 1.0, %v2385
        %v2397 = vmul.f32 %v2396, %v2395
        %v2398 = vmul.f32 %v2385, 0.0
        %v2399 = vadd.f32 %v2397, %v2398
        %v2400 = vsel %vm909, %v2399, 0.0
        %v2401 = vpack.c.bf16 %v2400, %v2400
        %2402 = vst [vmem:[%s479] sm:$0x1] %v2401
        %v2403 = vld [vmem:[#allocation2] sm:$0xc]
        %v2404 = vld [vmem:[#allocation2 + $0x8] sm:$0xc]
        %v2405 = vld [vmem:[#allocation2 + $0x10] sm:$0xc]
        %2406 = vmatprep.subr.bf16.mxu0 %v2265
        %2407 = vmatpush1.bf16.msra.mxu0 %v2264
        %2408 = vmatprep.subr.bf16.mxu0 %v2262
        %2409 = vmatpush1.bf16.msra.mxu0 %v2261
        %2410 = vmatprep.subr.bf16.mxu0 %v2259
        %2411 = vmatpush1.bf16.msra.mxu0 %v2258
        %2412 = vmatprep.subr.bf16.mxu0 %v2256
        %2413 = vmatpush1.bf16.msra.mxu0 %v2255
        %2414 = vmatprep.subr.bf16.mxu0 %v2253
        %2415 = vmatpush1.bf16.msra.mxu0 %v2252
        %2416 = vmatprep.subr.bf16.mxu0 %v2250
        %2417 = vmatpush1.bf16.msra.mxu0 %v2249
        %2418 = vmatprep.subr.bf16.mxu0 %v2247
        %2419 = vmatpush1.bf16.msra.mxu0 %v2246
        %2420 = vmatprep.subr.bf16.mxu0 %v2244
        %2421 = vmatpush1.bf16.msra.mxu0 %v2243
        %2422 = vmatprep.subr.bf16.mxu0 0
        %2423 = vmatpush2.bf16.msra.mxu0 0
        %2424 = vmatprep.subr.bf16.mxu0 0
        %2425 = vmatpush2.bf16.msra.mxu0 0
        %2426 = vmatprep.subr.bf16.mxu0 0
        %2427 = vmatpush2.bf16.msra.mxu0 0
        %2428 = vmatprep.subr.bf16.mxu0 0
        %2429 = vmatpush2.bf16.msra.mxu0 0
        %2430 = vmatprep.subr.bf16.mxu0 0
        %2431 = vmatpush2.bf16.msra.mxu0 0
        %2432 = vmatprep.subr.bf16.mxu0 0
        %2433 = vmatpush2.bf16.msra.mxu0 0
        %2434 = vmatprep.subr.bf16.mxu0 0
        %2435 = vmatpush2.bf16.msra.mxu0 0
        %2436 = vmatprep.subr.bf16.mxu0 0
        %2437 = vmatpush2.bf16.msra.mxu0 0
        %2438 = vmatprep.mubr.bf16.mxu0 0
        %2439 = vmatmul.mubr.bf16.gmra.mxu0 %v2401
        %v2440 = vpop.f32.mrf.mxu0
        %v2441 = vadd.f32 0.0, %v2440
        %v2442 = vpop.f32.mrf.mxu0
        %v2443 = vadd.f32 0.0, %v2442
        %v2444 = vpop.f32.mrf.mxu0
        %v2445 = vpop.f32.mrf.mxu0
        %2446 = vdwg.mxu0
        %2447 = vmatprep.subr.bf16.mxu0 0
        %2448 = vmatpush1.bf16.msra.mxu0 %v2266
        %2449 = vmatprep.subr.bf16.mxu0 0
        %2450 = vmatpush1.bf16.msra.mxu0 %v2263
        %2451 = vmatprep.subr.bf16.mxu0 0
        %2452 = vmatpush1.bf16.msra.mxu0 %v2260
        %2453 = vmatprep.subr.bf16.mxu0 0
        %2454 = vmatpush1.bf16.msra.mxu0 %v2257
        %2455 = vmatprep.subr.bf16.mxu0 0
        %2456 = vmatpush1.bf16.msra.mxu0 %v2254
        %2457 = vmatprep.subr.bf16.mxu0 0
        %2458 = vmatpush1.bf16.msra.mxu0 %v2251
        %2459 = vmatprep.subr.bf16.mxu0 0
        %2460 = vmatpush1.bf16.msra.mxu0 %v2248
        %2461 = vmatprep.subr.bf16.mxu0 0
        %2462 = vmatpush1.bf16.msra.mxu0 %v2245
        %2463 = vmatprep.subr.bf16.mxu0 0
        %2464 = vmatpush2.bf16.msra.mxu0 0
        %2465 = vmatprep.subr.bf16.mxu0 0
        %2466 = vmatpush2.bf16.msra.mxu0 0
        %2467 = vmatprep.subr.bf16.mxu0 0
        %2468 = vmatpush2.bf16.msra.mxu0 0
        %2469 = vmatprep.subr.bf16.mxu0 0
        %2470 = vmatpush2.bf16.msra.mxu0 0
        %2471 = vmatprep.subr.bf16.mxu0 0
        %2472 = vmatpush2.bf16.msra.mxu0 0
        %2473 = vmatprep.subr.bf16.mxu0 0
        %2474 = vmatpush2.bf16.msra.mxu0 0
        %2475 = vmatprep.subr.bf16.mxu0 0
        %2476 = vmatpush2.bf16.msra.mxu0 0
        %2477 = vmatprep.subr.bf16.mxu0 0
        %2478 = vmatpush2.bf16.msra.mxu0 0
        %2479 = vmatprep.mubr.bf16.mxu0 0
        %2480 = vmatmul.mubr.bf16.gmra.mxu0 %v2401
        %v2481 = vpop.f32.mrf.mxu0
        %v2482 = vadd.f32 0.0, %v2481
        %v2483 = vpop.f32.mrf.mxu0
        %v2484 = vpop.f32.mrf.mxu0
        %v2485 = vpop.f32.mrf.mxu0
        %2486 = vdwg.mxu0
        %v2488 = vrot.slane %v2441, 6
        %v2490 = vadd.f32 %v2403, %v2488
        %v2491 = vxor.u32 %v2490, 2147483648
        %v2492 = vmul.f32 %v2491, 1.442695
        %v2493 = vpow.pop %v2492
        %v2494 = vadd.f32 %v2493, 1.0
        %v2495 = vrcp.pop %v2494
        %v2496 = vmul.f32 1.0, %v2495
        %v2498 = vrot.slane %v2443, 6
        %v2500 = vadd.f32 %v2404, %v2498
        %v2501 = vxor.u32 %v2500, 2147483648
        %v2502 = vmul.f32 %v2501, 1.442695
        %v2503 = vpow.pop %v2502
        %v2504 = vadd.f32 %v2503, 1.0
        %v2505 = vrcp.pop %v2504
        %v2506 = vmul.f32 1.0, %v2505
        %v2507 = vadd.f32 %v2482, %v2390
        %v2509 = vrot.slane %v2507, 6
        %v2511 = vmul.f32 %v2496, %v2509
        %v2512 = vadd.f32 %v2405, %v2511
        %v2513 = vtanh.pop %v2512
        %v2514 = vsub.f32 1.0, %v2506
        %v2515 = vmul.f32 %v2514, %v2513
        %v2517 = vrot.slane %v2400, 6
        %v2519 = vmul.f32 %v2506, %v2517
        %v2520 = vadd.f32 %v2515, %v2519
        %v2522 = vrot.slane %v2520, 2
        %v2524 = vsel %vm1036, %v2522, %v2400
        %v2525 = vsel %vm1036, %v2522, 0.0
        %v2526 = vpack.c.bf16 %v2525, %v2525
        %v2528 = vunpack.c.l.b16 %v2526
        %v2529 = vpack.c.b16 %v2528, %v2528
        %v2530 = vrot.slane %v2529, 7
        %2532 = vst [vmem:[%s479] sm:$0x2] %v2530
        %v2533 = vld [vmem:[#allocation2] sm:$0x30]
        %v2534 = vld [vmem:[#allocation2 + $0x8] sm:$0x30]
        %v2535 = vld [vmem:[#allocation2 + $0x10] sm:$0x30]
        %v2536 = vpack.c.bf16 %v2524, %v2524
        %2537 = vmatprep.subr.bf16.mxu0 %v2265
        %2538 = vmatpush1.bf16.msra.mxu0 %v2264
        %2539 = vmatprep.subr.bf16.mxu0 %v2262
        %2540 = vmatpush1.bf16.msra.mxu0 %v2261
        %2541 = vmatprep.subr.bf16.mxu0 %v2259
        %2542 = vmatpush1.bf16.msra.mxu0 %v2258
        %2543 = vmatprep.subr.bf16.mxu0 %v2256
        %2544 = vmatpush1.bf16.msra.mxu0 %v2255
        %2545 = vmatprep.subr.bf16.mxu0 %v2253
        %2546 = vmatpush1.bf16.msra.mxu0 %v2252
        %2547 = vmatprep.subr.bf16.mxu0 %v2250
        %2548 = vmatpush1.bf16.msra.mxu0 %v2249
        %2549 = vmatprep.subr.bf16.mxu0 %v2247
        %2550 = vmatpush1.bf16.msra.mxu0 %v2246
        %2551 = vmatprep.subr.bf16.mxu0 %v2244
        %2552 = vmatpush1.bf16.msra.mxu0 %v2243
        %2553 = vmatprep.subr.bf16.mxu0 0
        %2554 = vmatpush2.bf16.msra.mxu0 0
        %2555 = vmatprep.subr.bf16.mxu0 0
        %2556 = vmatpush2.bf16.msra.mxu0 0
        %2557 = vmatprep.subr.bf16.mxu0 0
        %2558 = vmatpush2.bf16.msra.mxu0 0
        %2559 = vmatprep.subr.bf16.mxu0 0
        %2560 = vmatpush2.bf16.msra.mxu0 0
        %2561 = vmatprep.subr.bf16.mxu0 0
        %2562 = vmatpush2.bf16.msra.mxu0 0
        %2563 = vmatprep.subr.bf16.mxu0 0
        %2564 = vmatpush2.bf16.msra.mxu0 0
        %2565 = vmatprep.subr.bf16.mxu0 0
        %2566 = vmatpush2.bf16.msra.mxu0 0
        %2567 = vmatprep.subr.bf16.mxu0 0
        %2568 = vmatpush2.bf16.msra.mxu0 0
        %2569 = vmatprep.mubr.bf16.mxu0 0
        %2570 = vmatmul.mubr.bf16.gmra.mxu0 %v2536
        %v2571 = vpop.f32.mrf.mxu0
        %v2572 = vadd.f32 0.0, %v2571
        %v2573 = vpop.f32.mrf.mxu0
        %v2574 = vadd.f32 0.0, %v2573
        %v2575 = vpop.f32.mrf.mxu0
        %v2576 = vpop.f32.mrf.mxu0
        %2577 = vdwg.mxu0
        %2578 = vmatprep.subr.bf16.mxu0 0
        %2579 = vmatpush1.bf16.msra.mxu0 %v2266
        %2580 = vmatprep.subr.bf16.mxu0 0
        %2581 = vmatpush1.bf16.msra.mxu0 %v2263
        %2582 = vmatprep.subr.bf16.mxu0 0
        %2583 = vmatpush1.bf16.msra.mxu0 %v2260
        %2584 = vmatprep.subr.bf16.mxu0 0
        %2585 = vmatpush1.bf16.msra.mxu0 %v2257
        %2586 = vmatprep.subr.bf16.mxu0 0
        %2587 = vmatpush1.bf16.msra.mxu0 %v2254
        %2588 = vmatprep.subr.bf16.mxu0 0
        %2589 = vmatpush1.bf16.msra.mxu0 %v2251
        %2590 = vmatprep.subr.bf16.mxu0 0
        %2591 = vmatpush1.bf16.msra.mxu0 %v2248
        %2592 = vmatprep.subr.bf16.mxu0 0
        %2593 = vmatpush1.bf16.msra.mxu0 %v2245
        %2594 = vmatprep.subr.bf16.mxu0 0
        %2595 = vmatpush2.bf16.msra.mxu0 0
        %2596 = vmatprep.subr.bf16.mxu0 0
        %2597 = vmatpush2.bf16.msra.mxu0 0
        %2598 = vmatprep.subr.bf16.mxu0 0
        %2599 = vmatpush2.bf16.msra.mxu0 0
        %2600 = vmatprep.subr.bf16.mxu0 0
        %2601 = vmatpush2.bf16.msra.mxu0 0
        %2602 = vmatprep.subr.bf16.mxu0 0
        %2603 = vmatpush2.bf16.msra.mxu0 0
        %2604 = vmatprep.subr.bf16.mxu0 0
        %2605 = vmatpush2.bf16.msra.mxu0 0
        %2606 = vmatprep.subr.bf16.mxu0 0
        %2607 = vmatpush2.bf16.msra.mxu0 0
        %2608 = vmatprep.subr.bf16.mxu0 0
        %2609 = vmatpush2.bf16.msra.mxu0 0
        %2610 = vmatprep.mubr.bf16.mxu0 0
        %2611 = vmatmul.mubr.bf16.gmra.mxu0 %v2536
        %v2612 = vpop.f32.mrf.mxu0
        %v2613 = vadd.f32 0.0, %v2612
        %v2614 = vpop.f32.mrf.mxu0
        %v2615 = vpop.f32.mrf.mxu0
        %v2616 = vpop.f32.mrf.mxu0
        %2617 = vdwg.mxu0
        %v2619 = vrot.slane %v2572, 4
        %v2621 = vadd.f32 %v2533, %v2619
        %v2622 = vxor.u32 %v2621, 2147483648
        %v2623 = vmul.f32 %v2622, 1.442695
        %v2624 = vpow.pop %v2623
        %v2625 = vadd.f32 %v2624, 1.0
        %v2626 = vrcp.pop %v2625
        %v2627 = vmul.f32 1.0, %v2626
        %v2629 = vrot.slane %v2574, 4
        %v2631 = vadd.f32 %v2534, %v2629
        %v2632 = vxor.u32 %v2631, 2147483648
        %v2633 = vmul.f32 %v2632, 1.442695
        %v2634 = vpow.pop %v2633
        %v2635 = vadd.f32 %v2634, 1.0
        %v2636 = vrcp.pop %v2635
        %v2637 = vmul.f32 1.0, %v2636
        %v2638 = vadd.f32 %v2613, %v2390
        %v2640 = vrot.slane %v2638, 4
        %v2642 = vmul.f32 %v2627, %v2640
        %v2643 = vadd.f32 %v2535, %v2642
        %v2644 = vtanh.pop %v2643
        %v2645 = vsub.f32 1.0, %v2637
        %v2646 = vmul.f32 %v2645, %v2644
        %v2648 = vrot.slane %v2524, 4
        %v2650 = vmul.f32 %v2637, %v2648
        %v2651 = vadd.f32 %v2646, %v2650
        %v2653 = vrot.slane %v2651, 4
        %v2655 = vsel %vm1173, %v2653, %v2524
        %v2656 = vsel %vm1173, %v2653, 0.0
        %v2657 = vpack.c.bf16 %v2656, %v2656
        %v2659 = vunpack.c.l.b16 %v2657
        %v2660 = vpack.c.b16 %v2659, %v2659
        %v2661 = vrot.slane %v2660, 6
        %2663 = vst [vmem:[%s479] sm:$0x4] %v2661
        %v2664 = vld [vmem:[#allocation2] sm:$0xc0]
        %v2665 = vld [vmem:[#allocation2 + $0x8] sm:$0xc0]
        %v2666 = vld [vmem:[#allocation2 + $0x10] sm:$0xc0]
        %v2667 = vpack.c.bf16 %v2655, %v2655
        %2668 = vmatprep.subr.bf16.mxu0 %v2265
        %2669 = vmatpush1.bf16.msra.mxu0 %v2264
        %2670 = vmatprep.subr.bf16.mxu0 %v2262
        %2671 = vmatpush1.bf16.msra.mxu0 %v2261
        %2672 = vmatprep.subr.bf16.mxu0 %v2259
        %2673 = vmatpush1.bf16.msra.mxu0 %v2258
        %2674 = vmatprep.subr.bf16.mxu0 %v2256
        %2675 = vmatpush1.bf16.msra.mxu0 %v2255
        %2676 = vmatprep.subr.bf16.mxu0 %v2253
        %2677 = vmatpush1.bf16.msra.mxu0 %v2252
        %2678 = vmatprep.subr.bf16.mxu0 %v2250
        %2679 = vmatpush1.bf16.msra.mxu0 %v2249
        %2680 = vmatprep.subr.bf16.mxu0 %v2247
        %2681 = vmatpush1.bf16.msra.mxu0 %v2246
        %2682 = vmatprep.subr.bf16.mxu0 %v2244
        %2683 = vmatpush1.bf16.msra.mxu0 %v2243
        %2684 = vmatprep.subr.bf16.mxu0 0
        %2685 = vmatpush2.bf16.msra.mxu0 0
        %2686 = vmatprep.subr.bf16.mxu0 0
        %2687 = vmatpush2.bf16.msra.mxu0 0
        %2688 = vmatprep.subr.bf16.mxu0 0
        %2689 = vmatpush2.bf16.msra.mxu0 0
        %2690 = vmatprep.subr.bf16.mxu0 0
        %2691 = vmatpush2.bf16.msra.mxu0 0
        %2692 = vmatprep.subr.bf16.mxu0 0
        %2693 = vmatpush2.bf16.msra.mxu0 0
        %2694 = vmatprep.subr.bf16.mxu0 0
        %2695 = vmatpush2.bf16.msra.mxu0 0
        %2696 = vmatprep.subr.bf16.mxu0 0
        %2697 = vmatpush2.bf16.msra.mxu0 0
        %2698 = vmatprep.subr.bf16.mxu0 0
        %2699 = vmatpush2.bf16.msra.mxu0 0
        %2700 = vmatprep.mubr.bf16.mxu0 0
        %2701 = vmatmul.mubr.bf16.gmra.mxu0 %v2667
        %v2702 = vpop.f32.mrf.mxu0
        %v2703 = vadd.f32 0.0, %v2702
        %v2704 = vpop.f32.mrf.mxu0
        %v2705 = vadd.f32 0.0, %v2704
        %v2706 = vpop.f32.mrf.mxu0
        %v2707 = vpop.f32.mrf.mxu0
        %2708 = vdwg.mxu0
        %2709 = vmatprep.subr.bf16.mxu0 0
        %2710 = vmatpush1.bf16.msra.mxu0 %v2266
        %2711 = vmatprep.subr.bf16.mxu0 0
        %2712 = vmatpush1.bf16.msra.mxu0 %v2263
        %2713 = vmatprep.subr.bf16.mxu0 0
        %2714 = vmatpush1.bf16.msra.mxu0 %v2260
        %2715 = vmatprep.subr.bf16.mxu0 0
        %2716 = vmatpush1.bf16.msra.mxu0 %v2257
        %2717 = vmatprep.subr.bf16.mxu0 0
        %2718 = vmatpush1.bf16.msra.mxu0 %v2254
        %2719 = vmatprep.subr.bf16.mxu0 0
        %2720 = vmatpush1.bf16.msra.mxu0 %v2251
        %2721 = vmatprep.subr.bf16.mxu0 0
        %2722 = vmatpush1.bf16.msra.mxu0 %v2248
        %2723 = vmatprep.subr.bf16.mxu0 0
        %2724 = vmatpush1.bf16.msra.mxu0 %v2245
        %2725 = vmatprep.subr.bf16.mxu0 0
        %2726 = vmatpush2.bf16.msra.mxu0 0
        %2727 = vmatprep.subr.bf16.mxu0 0
        %2728 = vmatpush2.bf16.msra.mxu0 0
        %2729 = vmatprep.subr.bf16.mxu0 0
        %2730 = vmatpush2.bf16.msra.mxu0 0
        %2731 = vmatprep.subr.bf16.mxu0 0
        %2732 = vmatpush2.bf16.msra.mxu0 0
        %2733 = vmatprep.subr.bf16.mxu0 0
        %2734 = vmatpush2.bf16.msra.mxu0 0
        %2735 = vmatprep.subr.bf16.mxu0 0
        %2736 = vmatpush2.bf16.msra.mxu0 0
        %2737 = vmatprep.subr.bf16.mxu0 0
        %2738 = vmatpush2.bf16.msra.mxu0 0
        %2739 = vmatprep.subr.bf16.mxu0 0
        %2740 = vmatpush2.bf16.msra.mxu0 0
        %2741 = vmatprep.mubr.bf16.mxu0 0
        %2742 = vmatmul.mubr.bf16.gmra.mxu0 %v2667
        %v2743 = vpop.f32.mrf.mxu0
        %v2744 = vadd.f32 0.0, %v2743
        %v2745 = vpop.f32.mrf.mxu0
        %v2746 = vpop.f32.mrf.mxu0
        %v2747 = vpop.f32.mrf.mxu0
        %2748 = vdwg.mxu0
        %v2750 = vrot.slane %v2703, 2
        %v2752 = vadd.f32 %v2664, %v2750
        %v2753 = vxor.u32 %v2752, 2147483648
        %v2754 = vmul.f32 %v2753, 1.442695
        %v2755 = vpow.pop %v2754
        %v2756 = vadd.f32 %v2755, 1.0
        %v2757 = vrcp.pop %v2756
        %v2758 = vmul.f32 1.0, %v2757
        %v2760 = vrot.slane %v2705, 2
        %v2762 = vadd.f32 %v2665, %v2760
        %v2763 = vxor.u32 %v2762, 2147483648
        %v2764 = vmul.f32 %v2763, 1.442695
        %v2765 = vpow.pop %v2764
        %v2766 = vadd.f32 %v2765, 1.0
        %v2767 = vrcp.pop %v2766
        %v2768 = vmul.f32 1.0, %v2767
        %v2769 = vadd.f32 %v2744, %v2390
        %v2771 = vrot.slane %v2769, 2
        %v2773 = vmul.f32 %v2758, %v2771
        %v2774 = vadd.f32 %v2666, %v2773
        %v2775 = vtanh.pop %v2774
        %v2776 = vsub.f32 1.0, %v2768
        %v2777 = vmul.f32 %v2776, %v2775
        %v2779 = vrot.slane %v2655, 2
        %v2781 = vmul.f32 %v2768, %v2779
        %v2782 = vadd.f32 %v2777, %v2781
        %v2784 = vrot.slane %v2782, 6
        %v2786 = vsel %vm1310, %v2784, %v2655
        %v2787 = vsel %vm1310, %v2784, 0.0
        %v2788 = vpack.c.bf16 %v2787, %v2787
        %v2790 = vunpack.c.l.b16 %v2788
        %v2791 = vpack.c.b16 %v2790, %v2790
        %v2792 = vrot.slane %v2791, 5
        %2794 = vst [vmem:[%s479] sm:$0x8] %v2792
        %v2795 = vld [vmem:[#allocation2 + $0x18] sm:$0x3]
        %v2796 = vld [vmem:[#allocation2 + $0x20] sm:$0x3]
        %v2797 = vld [vmem:[#allocation2 + $0x28] sm:$0x3]
        %v2798 = vpack.c.bf16 %v2786, %v2786
        %2799 = vmatprep.subr.bf16.mxu0 %v2265
        %2800 = vmatpush1.bf16.msra.mxu0 %v2264
        %2801 = vmatprep.subr.bf16.mxu0 %v2262
        %2802 = vmatpush1.bf16.msra.mxu0 %v2261
        %2803 = vmatprep.subr.bf16.mxu0 %v2259
        %2804 = vmatpush1.bf16.msra.mxu0 %v2258
        %2805 = vmatprep.subr.bf16.mxu0 %v2256
        %2806 = vmatpush1.bf16.msra.mxu0 %v2255
        %2807 = vmatprep.subr.bf16.mxu0 %v2253
        %2808 = vmatpush1.bf16.msra.mxu0 %v2252
        %2809 = vmatprep.subr.bf16.mxu0 %v2250
        %2810 = vmatpush1.bf16.msra.mxu0 %v2249
        %2811 = vmatprep.subr.bf16.mxu0 %v2247
        %2812 = vmatpush1.bf16.msra.mxu0 %v2246
        %2813 = vmatprep.subr.bf16.mxu0 %v2244
        %2814 = vmatpush1.bf16.msra.mxu0 %v2243
        %2815 = vmatprep.subr.bf16.mxu0 0
        %2816 = vmatpush2.bf16.msra.mxu0 0
        %2817 = vmatprep.subr.bf16.mxu0 0
        %2818 = vmatpush2.bf16.msra.mxu0 0
        %2819 = vmatprep.subr.bf16.mxu0 0
        %2820 = vmatpush2.bf16.msra.mxu0 0
        %2821 = vmatprep.subr.bf16.mxu0 0
        %2822 = vmatpush2.bf16.msra.mxu0 0
        %2823 = vmatprep.subr.bf16.mxu0 0
        %2824 = vmatpush2.bf16.msra.mxu0 0
        %2825 = vmatprep.subr.bf16.mxu0 0
        %2826 = vmatpush2.bf16.msra.mxu0 0
        %2827 = vmatprep.subr.bf16.mxu0 0
        %2828 = vmatpush2.bf16.msra.mxu0 0
        %2829 = vmatprep.subr.bf16.mxu0 0
        %2830 = vmatpush2.bf16.msra.mxu0 0
        %2831 = vmatprep.mubr.bf16.mxu0 0
        %2832 = vmatmul.mubr.bf16.gmra.mxu0 %v2798
        %v2833 = vpop.f32.mrf.mxu0
        %v2834 = vadd.f32 0.0, %v2833
        %v2835 = vpop.f32.mrf.mxu0
        %v2836 = vadd.f32 0.0, %v2835
        %v2837 = vpop.f32.mrf.mxu0
        %v2838 = vpop.f32.mrf.mxu0
        %2839 = vdwg.mxu0
        %2840 = vmatprep.subr.bf16.mxu0 0
        %2841 = vmatpush1.bf16.msra.mxu0 %v2266
        %2842 = vmatprep.subr.bf16.mxu0 0
        %2843 = vmatpush1.bf16.msra.mxu0 %v2263
        %2844 = vmatprep.subr.bf16.mxu0 0
        %2845 = vmatpush1.bf16.msra.mxu0 %v2260
        %2846 = vmatprep.subr.bf16.mxu0 0
        %2847 = vmatpush1.bf16.msra.mxu0 %v2257
        %2848 = vmatprep.subr.bf16.mxu0 0
        %2849 = vmatpush1.bf16.msra.mxu0 %v2254
        %2850 = vmatprep.subr.bf16.mxu0 0
        %2851 = vmatpush1.bf16.msra.mxu0 %v2251
        %2852 = vmatprep.subr.bf16.mxu0 0
        %2853 = vmatpush1.bf16.msra.mxu0 %v2248
        %2854 = vmatprep.subr.bf16.mxu0 0
        %2855 = vmatpush1.bf16.msra.mxu0 %v2245
        %2856 = vmatprep.subr.bf16.mxu0 0
        %2857 = vmatpush2.bf16.msra.mxu0 0
        %2858 = vmatprep.subr.bf16.mxu0 0
        %2859 = vmatpush2.bf16.msra.mxu0 0
        %2860 = vmatprep.subr.bf16.mxu0 0
        %2861 = vmatpush2.bf16.msra.mxu0 0
        %2862 = vmatprep.subr.bf16.mxu0 0
        %2863 = vmatpush2.bf16.msra.mxu0 0
        %2864 = vmatprep.subr.bf16.mxu0 0
        %2865 = vmatpush2.bf16.msra.mxu0 0
        %2866 = vmatprep.subr.bf16.mxu0 0
        %2867 = vmatpush2.bf16.msra.mxu0 0
        %2868 = vmatprep.subr.bf16.mxu0 0
        %2869 = vmatpush2.bf16.msra.mxu0 0
        %2870 = vmatprep.subr.bf16.mxu0 0
        %2871 = vmatpush2.bf16.msra.mxu0 0
        %2872 = vmatprep.mubr.bf16.mxu0 0
        %2873 = vmatmul.mubr.bf16.gmra.mxu0 %v2798
        %v2874 = vpop.f32.mrf.mxu0
        %v2875 = vadd.f32 0.0, %v2874
        %v2876 = vpop.f32.mrf.mxu0
        %v2877 = vpop.f32.mrf.mxu0
        %v2878 = vpop.f32.mrf.mxu0
        %2879 = vdwg.mxu0
        %v2880 = vadd.f32 %v2795, %v2834
        %v2881 = vxor.u32 %v2880, 2147483648
        %v2882 = vmul.f32 %v2881, 1.442695
        %v2883 = vpow.pop %v2882
        %v2884 = vadd.f32 %v2883, 1.0
        %v2885 = vrcp.pop %v2884
        %v2886 = vmul.f32 1.0, %v2885
        %v2887 = vadd.f32 %v2796, %v2836
        %v2888 = vxor.u32 %v2887, 2147483648
        %v2889 = vmul.f32 %v2888, 1.442695
        %v2890 = vpow.pop %v2889
        %v2891 = vadd.f32 %v2890, 1.0
        %v2892 = vrcp.pop %v2891
        %v2893 = vmul.f32 1.0, %v2892
        %v2894 = vadd.f32 %v2875, %v2390
        %v2895 = vmul.f32 %v2886, %v2894
        %v2896 = vadd.f32 %v2797, %v2895
        %v2897 = vtanh.pop %v2896
        %v2898 = vsub.f32 1.0, %v2893
        %v2899 = vmul.f32 %v2898, %v2897
        %v2900 = vmul.f32 %v2893, %v2786
        %v2901 = vadd.f32 %v2899, %v2900
        %v2902 = vsel %vm1435, %v2901, %v2786
        %v2903 = vsel %vm1435, %v2901, 0.0
        %v2904 = vpack.c.bf16 %v2903, %v2903
        %2905 = vst [vmem:[%s479 + $0x4] sm:$0x1] %v2904
        %v2906 = vld [vmem:[#allocation2 + $0x18] sm:$0xc]
        %v2907 = vld [vmem:[#allocation2 + $0x20] sm:$0xc]
        %v2908 = vld [vmem:[#allocation2 + $0x28] sm:$0xc]
        %v2909 = vpack.c.bf16 %v2902, %v2902
        %2910 = vmatprep.subr.bf16.mxu0 %v2265
        %2911 = vmatpush1.bf16.msra.mxu0 %v2264
        %2912 = vmatprep.subr.bf16.mxu0 %v2262
        %2913 = vmatpush1.bf16.msra.mxu0 %v2261
        %2914 = vmatprep.subr.bf16.mxu0 %v2259
        %2915 = vmatpush1.bf16.msra.mxu0 %v2258
        %2916 = vmatprep.subr.bf16.mxu0 %v2256
        %2917 = vmatpush1.bf16.msra.mxu0 %v2255
        %2918 = vmatprep.subr.bf16.mxu0 %v2253
        %2919 = vmatpush1.bf16.msra.mxu0 %v2252
        %2920 = vmatprep.subr.bf16.mxu0 %v2250
        %2921 = vmatpush1.bf16.msra.mxu0 %v2249
        %2922 = vmatprep.subr.bf16.mxu0 %v2247
        %2923 = vmatpush1.bf16.msra.mxu0 %v2246
        %2924 = vmatprep.subr.bf16.mxu0 %v2244
        %2925 = vmatpush1.bf16.msra.mxu0 %v2243
        %2926 = vmatprep.subr.bf16.mxu0 0
        %2927 = vmatpush2.bf16.msra.mxu0 0
        %2928 = vmatprep.subr.bf16.mxu0 0
        %2929 = vmatpush2.bf16.msra.mxu0 0
        %2930 = vmatprep.subr.bf16.mxu0 0
        %2931 = vmatpush2.bf16.msra.mxu0 0
        %2932 = vmatprep.subr.bf16.mxu0 0
        %2933 = vmatpush2.bf16.msra.mxu0 0
        %2934 = vmatprep.subr.bf16.mxu0 0
        %2935 = vmatpush2.bf16.msra.mxu0 0
        %2936 = vmatprep.subr.bf16.mxu0 0
        %2937 = vmatpush2.bf16.msra.mxu0 0
        %2938 = vmatprep.subr.bf16.mxu0 0
        %2939 = vmatpush2.bf16.msra.mxu0 0
        %2940 = vmatprep.subr.bf16.mxu0 0
        %2941 = vmatpush2.bf16.msra.mxu0 0
        %2942 = vmatprep.mubr.bf16.mxu0 0
        %2943 = vmatmul.mubr.bf16.gmra.mxu0 %v2909
        %v2944 = vpop.f32.mrf.mxu0
        %v2945 = vadd.f32 0.0, %v2944
        %v2946 = vpop.f32.mrf.mxu0
        %v2947 = vadd.f32 0.0, %v2946
        %v2948 = vpop.f32.mrf.mxu0
        %v2949 = vpop.f32.mrf.mxu0
        %2950 = vdwg.mxu0
        %2951 = vmatprep.subr.bf16.mxu0 0
        %2952 = vmatpush1.bf16.msra.mxu0 %v2266
        %2953 = vmatprep.subr.bf16.mxu0 0
        %2954 = vmatpush1.bf16.msra.mxu0 %v2263
        %2955 = vmatprep.subr.bf16.mxu0 0
        %2956 = vmatpush1.bf16.msra.mxu0 %v2260
        %2957 = vmatprep.subr.bf16.mxu0 0
        %2958 = vmatpush1.bf16.msra.mxu0 %v2257
        %2959 = vmatprep.subr.bf16.mxu0 0
        %2960 = vmatpush1.bf16.msra.mxu0 %v2254
        %2961 = vmatprep.subr.bf16.mxu0 0
        %2962 = vmatpush1.bf16.msra.mxu0 %v2251
        %2963 = vmatprep.subr.bf16.mxu0 0
        %2964 = vmatpush1.bf16.msra.mxu0 %v2248
        %2965 = vmatprep.subr.bf16.mxu0 0
        %2966 = vmatpush1.bf16.msra.mxu0 %v2245
        %2967 = vmatprep.subr.bf16.mxu0 0
        %2968 = vmatpush2.bf16.msra.mxu0 0
        %2969 = vmatprep.subr.bf16.mxu0 0
        %2970 = vmatpush2.bf16.msra.mxu0 0
        %2971 = vmatprep.subr.bf16.mxu0 0
        %2972 = vmatpush2.bf16.msra.mxu0 0
        %2973 = vmatprep.subr.bf16.mxu0 0
        %2974 = vmatpush2.bf16.msra.mxu0 0
        %2975 = vmatprep.subr.bf16.mxu0 0
        %2976 = vmatpush2.bf16.msra.mxu0 0
        %2977 = vmatprep.subr.bf16.mxu0 0
        %2978 = vmatpush2.bf16.msra.mxu0 0
        %2979 = vmatprep.subr.bf16.mxu0 0
        %2980 = vmatpush2.bf16.msra.mxu0 0
        %2981 = vmatprep.subr.bf16.mxu0 0
        %2982 = vmatpush2.bf16.msra.mxu0 0
        %2983 = vmatprep.mubr.bf16.mxu0 0
        %2984 = vmatmul.mubr.bf16.gmra.mxu0 %v2909
        %v2985 = vpop.f32.mrf.mxu0
        %v2986 = vadd.f32 0.0, %v2985
        %v2987 = vpop.f32.mrf.mxu0
        %v2988 = vpop.f32.mrf.mxu0
        %v2989 = vpop.f32.mrf.mxu0
        %2990 = vdwg.mxu0
        %v2992 = vrot.slane %v2945, 6
        %v2994 = vadd.f32 %v2906, %v2992
        %v2995 = vxor.u32 %v2994, 2147483648
        %v2996 = vmul.f32 %v2995, 1.442695
        %v2997 = vpow.pop %v2996
        %v2998 = vadd.f32 %v2997, 1.0
        %v2999 = vrcp.pop %v2998
        %v3000 = vmul.f32 1.0, %v2999
        %v3002 = vrot.slane %v2947, 6
        %v3004 = vadd.f32 %v2907, %v3002
        %v3005 = vxor.u32 %v3004, 2147483648
        %v3006 = vmul.f32 %v3005, 1.442695
        %v3007 = vpow.pop %v3006
        %v3008 = vadd.f32 %v3007, 1.0
        %v3009 = vrcp.pop %v3008
        %v3010 = vmul.f32 1.0, %v3009
        %v3011 = vadd.f32 %v2986, %v2390
        %v3013 = vrot.slane %v3011, 6
        %v3015 = vmul.f32 %v3000, %v3013
        %v3016 = vadd.f32 %v2908, %v3015
        %v3017 = vtanh.pop %v3016
        %v3018 = vsub.f32 1.0, %v3010
        %v3019 = vmul.f32 %v3018, %v3017
        %v3021 = vrot.slane %v2902, 6
        %v3023 = vmul.f32 %v3010, %v3021
        %v3024 = vadd.f32 %v3019, %v3023
        %v3026 = vrot.slane %v3024, 2
        %v3028 = vsel %vm1564, %v3026, %v2902
        %v3029 = vsel %vm1564, %v3026, 0.0
        %v3030 = vpack.c.bf16 %v3029, %v3029
        %v3032 = vunpack.c.l.b16 %v3030
        %v3033 = vpack.c.b16 %v3032, %v3032
        %v3034 = vrot.slane %v3033, 7
        %3036 = vst [vmem:[%s479 + $0x4] sm:$0x2] %v3034
        %v3037 = vld [vmem:[#allocation2 + $0x18] sm:$0x30]
        %v3038 = vld [vmem:[#allocation2 + $0x20] sm:$0x30]
        %v3039 = vld [vmem:[#allocation2 + $0x28] sm:$0x30]
        %v3040 = vpack.c.bf16 %v3028, %v3028
        %3041 = vmatprep.subr.bf16.mxu0 %v2265
        %3042 = vmatpush1.bf16.msra.mxu0 %v2264
        %3043 = vmatprep.subr.bf16.mxu0 %v2262
        %3044 = vmatpush1.bf16.msra.mxu0 %v2261
        %3045 = vmatprep.subr.bf16.mxu0 %v2259
        %3046 = vmatpush1.bf16.msra.mxu0 %v2258
        %3047 = vmatprep.subr.bf16.mxu0 %v2256
        %3048 = vmatpush1.bf16.msra.mxu0 %v2255
        %3049 = vmatprep.subr.bf16.mxu0 %v2253
        %3050 = vmatpush1.bf16.msra.mxu0 %v2252
        %3051 = vmatprep.subr.bf16.mxu0 %v2250
        %3052 = vmatpush1.bf16.msra.mxu0 %v2249
        %3053 = vmatprep.subr.bf16.mxu0 %v2247
        %3054 = vmatpush1.bf16.msra.mxu0 %v2246
        %3055 = vmatprep.subr.bf16.mxu0 %v2244
        %3056 = vmatpush1.bf16.msra.mxu0 %v2243
        %3057 = vmatprep.subr.bf16.mxu0 0
        %3058 = vmatpush2.bf16.msra.mxu0 0
        %3059 = vmatprep.subr.bf16.mxu0 0
        %3060 = vmatpush2.bf16.msra.mxu0 0
        %3061 = vmatprep.subr.bf16.mxu0 0
        %3062 = vmatpush2.bf16.msra.mxu0 0
        %3063 = vmatprep.subr.bf16.mxu0 0
        %3064 = vmatpush2.bf16.msra.mxu0 0
        %3065 = vmatprep.subr.bf16.mxu0 0
        %3066 = vmatpush2.bf16.msra.mxu0 0
        %3067 = vmatprep.subr.bf16.mxu0 0
        %3068 = vmatpush2.bf16.msra.mxu0 0
        %3069 = vmatprep.subr.bf16.mxu0 0
        %3070 = vmatpush2.bf16.msra.mxu0 0
        %3071 = vmatprep.subr.bf16.mxu0 0
        %3072 = vmatpush2.bf16.msra.mxu0 0
        %3073 = vmatprep.mubr.bf16.mxu0 0
        %3074 = vmatmul.mubr.bf16.gmra.mxu0 %v3040
        %v3075 = vpop.f32.mrf.mxu0
        %v3076 = vadd.f32 0.0, %v3075
        %v3077 = vpop.f32.mrf.mxu0
        %v3078 = vadd.f32 0.0, %v3077
        %v3079 = vpop.f32.mrf.mxu0
        %v3080 = vpop.f32.mrf.mxu0
        %3081 = vdwg.mxu0
        %3082 = vmatprep.subr.bf16.mxu0 0
        %3083 = vmatpush1.bf16.msra.mxu0 %v2266
        %3084 = vmatprep.subr.bf16.mxu0 0
        %3085 = vmatpush1.bf16.msra.mxu0 %v2263
        %3086 = vmatprep.subr.bf16.mxu0 0
        %3087 = vmatpush1.bf16.msra.mxu0 %v2260
        %3088 = vmatprep.subr.bf16.mxu0 0
        %3089 = vmatpush1.bf16.msra.mxu0 %v2257
        %3090 = vmatprep.subr.bf16.mxu0 0
        %3091 = vmatpush1.bf16.msra.mxu0 %v2254
        %3092 = vmatprep.subr.bf16.mxu0 0
        %3093 = vmatpush1.bf16.msra.mxu0 %v2251
        %3094 = vmatprep.subr.bf16.mxu0 0
        %3095 = vmatpush1.bf16.msra.mxu0 %v2248
        %3096 = vmatprep.subr.bf16.mxu0 0
        %3097 = vmatpush1.bf16.msra.mxu0 %v2245
        %3098 = vmatprep.subr.bf16.mxu0 0
        %3099 = vmatpush2.bf16.msra.mxu0 0
        %3100 = vmatprep.subr.bf16.mxu0 0
        %3101 = vmatpush2.bf16.msra.mxu0 0
        %3102 = vmatprep.subr.bf16.mxu0 0
        %3103 = vmatpush2.bf16.msra.mxu0 0
        %3104 = vmatprep.subr.bf16.mxu0 0
        %3105 = vmatpush2.bf16.msra.mxu0 0
        %3106 = vmatprep.subr.bf16.mxu0 0
        %3107 = vmatpush2.bf16.msra.mxu0 0
        %3108 = vmatprep.subr.bf16.mxu0 0
        %3109 = vmatpush2.bf16.msra.mxu0 0
        %3110 = vmatprep.subr.bf16.mxu0 0
        %3111 = vmatpush2.bf16.msra.mxu0 0
        %3112 = vmatprep.subr.bf16.mxu0 0
        %3113 = vmatpush2.bf16.msra.mxu0 0
        %3114 = vmatprep.mubr.bf16.mxu0 0
        %3115 = vmatmul.mubr.bf16.gmra.mxu0 %v3040
        %v3116 = vpop.f32.mrf.mxu0
        %v3117 = vadd.f32 0.0, %v3116
        %v3118 = vpop.f32.mrf.mxu0
        %v3119 = vpop.f32.mrf.mxu0
        %v3120 = vpop.f32.mrf.mxu0
        %3121 = vdwg.mxu0
        %v3123 = vrot.slane %v3076, 4
        %v3125 = vadd.f32 %v3037, %v3123
        %v3126 = vxor.u32 %v3125, 2147483648
        %v3127 = vmul.f32 %v3126, 1.442695
        %v3128 = vpow.pop %v3127
        %v3129 = vadd.f32 %v3128, 1.0
        %v3130 = vrcp.pop %v3129
        %v3131 = vmul.f32 1.0, %v3130
        %v3133 = vrot.slane %v3078, 4
        %v3135 = vadd.f32 %v3038, %v3133
        %v3136 = vxor.u32 %v3135, 2147483648
        %v3137 = vmul.f32 %v3136, 1.442695
        %v3138 = vpow.pop %v3137
        %v3139 = vadd.f32 %v3138, 1.0
        %v3140 = vrcp.pop %v3139
        %v3141 = vmul.f32 1.0, %v3140
        %v3142 = vadd.f32 %v3117, %v2390
        %v3144 = vrot.slane %v3142, 4
        %v3146 = vmul.f32 %v3131, %v3144
        %v3147 = vadd.f32 %v3039, %v3146
        %v3148 = vtanh.pop %v3147
        %v3149 = vsub.f32 1.0, %v3141
        %v3150 = vmul.f32 %v3149, %v3148
        %v3152 = vrot.slane %v3028, 4
        %v3154 = vmul.f32 %v3141, %v3152
        %v3155 = vadd.f32 %v3150, %v3154
        %v3157 = vrot.slane %v3155, 4
        %v3159 = vsel %vm1701, %v3157, %v3028
        %v3160 = vsel %vm1701, %v3157, 0.0
        %v3161 = vpack.c.bf16 %v3160, %v3160
        %v3163 = vunpack.c.l.b16 %v3161
        %v3164 = vpack.c.b16 %v3163, %v3163
        %v3165 = vrot.slane %v3164, 6
        %3167 = vst [vmem:[%s479 + $0x4] sm:$0x4] %v3165
        %v3168 = vld [vmem:[#allocation2 + $0x18] sm:$0xc0]
        %v3169 = vld [vmem:[#allocation2 + $0x20] sm:$0xc0]
        %v3170 = vld [vmem:[#allocation2 + $0x28] sm:$0xc0]
        %v3171 = vpack.c.bf16 %v3159, %v3159
        %3172 = vmatprep.subr.bf16.mxu0 %v2265
        %3173 = vmatpush1.bf16.msra.mxu0 %v2264
        %3174 = vmatprep.subr.bf16.mxu0 %v2262
        %3175 = vmatpush1.bf16.msra.mxu0 %v2261
        %3176 = vmatprep.subr.bf16.mxu0 %v2259
        %3177 = vmatpush1.bf16.msra.mxu0 %v2258
        %3178 = vmatprep.subr.bf16.mxu0 %v2256
        %3179 = vmatpush1.bf16.msra.mxu0 %v2255
        %3180 = vmatprep.subr.bf16.mxu0 %v2253
        %3181 = vmatpush1.bf16.msra.mxu0 %v2252
        %3182 = vmatprep.subr.bf16.mxu0 %v2250
        %3183 = vmatpush1.bf16.msra.mxu0 %v2249
        %3184 = vmatprep.subr.bf16.mxu0 %v2247
        %3185 = vmatpush1.bf16.msra.mxu0 %v2246
        %3186 = vmatprep.subr.bf16.mxu0 %v2244
        %3187 = vmatpush1.bf16.msra.mxu0 %v2243
        %3188 = vmatprep.subr.bf16.mxu0 0
        %3189 = vmatpush2.bf16.msra.mxu0 0
        %3190 = vmatprep.subr.bf16.mxu0 0
        %3191 = vmatpush2.bf16.msra.mxu0 0
        %3192 = vmatprep.subr.bf16.mxu0 0
        %3193 = vmatpush2.bf16.msra.mxu0 0
        %3194 = vmatprep.subr.bf16.mxu0 0
        %3195 = vmatpush2.bf16.msra.mxu0 0
        %3196 = vmatprep.subr.bf16.mxu0 0
        %3197 = vmatpush2.bf16.msra.mxu0 0
        %3198 = vmatprep.subr.bf16.mxu0 0
        %3199 = vmatpush2.bf16.msra.mxu0 0
        %3200 = vmatprep.subr.bf16.mxu0 0
        %3201 = vmatpush2.bf16.msra.mxu0 0
        %3202 = vmatprep.subr.bf16.mxu0 0
        %3203 = vmatpush2.bf16.msra.mxu0 0
        %3204 = vmatprep.mubr.bf16.mxu0 0
        %3205 = vmatmul.mubr.bf16.gmra.mxu0 %v3171
        %v3206 = vpop.f32.mrf.mxu0
        %v3207 = vadd.f32 0.0, %v3206
        %v3208 = vpop.f32.mrf.mxu0
        %v3209 = vadd.f32 0.0, %v3208
        %v3210 = vpop.f32.mrf.mxu0
        %v3211 = vpop.f32.mrf.mxu0
        %3212 = vdwg.mxu0
        %3213 = vmatprep.subr.bf16.mxu0 0
        %3214 = vmatpush1.bf16.msra.mxu0 %v2266
        %3215 = vmatprep.subr.bf16.mxu0 0
        %3216 = vmatpush1.bf16.msra.mxu0 %v2263
        %3217 = vmatprep.subr.bf16.mxu0 0
        %3218 = vmatpush1.bf16.msra.mxu0 %v2260
        %3219 = vmatprep.subr.bf16.mxu0 0
        %3220 = vmatpush1.bf16.msra.mxu0 %v2257
        %3221 = vmatprep.subr.bf16.mxu0 0
        %3222 = vmatpush1.bf16.msra.mxu0 %v2254
        %3223 = vmatprep.subr.bf16.mxu0 0
        %3224 = vmatpush1.bf16.msra.mxu0 %v2251
        %3225 = vmatprep.subr.bf16.mxu0 0
        %3226 = vmatpush1.bf16.msra.mxu0 %v2248
        %3227 = vmatprep.subr.bf16.mxu0 0
        %3228 = vmatpush1.bf16.msra.mxu0 %v2245
        %3229 = vmatprep.subr.bf16.mxu0 0
        %3230 = vmatpush2.bf16.msra.mxu0 0
        %3231 = vmatprep.subr.bf16.mxu0 0
        %3232 = vmatpush2.bf16.msra.mxu0 0
        %3233 = vmatprep.subr.bf16.mxu0 0
        %3234 = vmatpush2.bf16.msra.mxu0 0
        %3235 = vmatprep.subr.bf16.mxu0 0
        %3236 = vmatpush2.bf16.msra.mxu0 0
        %3237 = vmatprep.subr.bf16.mxu0 0
        %3238 = vmatpush2.bf16.msra.mxu0 0
        %3239 = vmatprep.subr.bf16.mxu0 0
        %3240 = vmatpush2.bf16.msra.mxu0 0
        %3241 = vmatprep.subr.bf16.mxu0 0
        %3242 = vmatpush2.bf16.msra.mxu0 0
        %3243 = vmatprep.subr.bf16.mxu0 0
        %3244 = vmatpush2.bf16.msra.mxu0 0
        %3245 = vmatprep.mubr.bf16.mxu0 0
        %3246 = vmatmul.mubr.bf16.gmra.mxu0 %v3171
        %v3247 = vpop.f32.mrf.mxu0
        %v3248 = vadd.f32 0.0, %v3247
        %v3249 = vpop.f32.mrf.mxu0
        %v3250 = vpop.f32.mrf.mxu0
        %v3251 = vpop.f32.mrf.mxu0
        %3252 = vdwg.mxu0
        %v3254 = vrot.slane %v3207, 2
        %v3256 = vadd.f32 %v3168, %v3254
        %v3257 = vxor.u32 %v3256, 2147483648
        %v3258 = vmul.f32 %v3257, 1.442695
        %v3259 = vpow.pop %v3258
        %v3260 = vadd.f32 %v3259, 1.0
        %v3261 = vrcp.pop %v3260
        %v3262 = vmul.f32 1.0, %v3261
        %v3264 = vrot.slane %v3209, 2
        %v3266 = vadd.f32 %v3169, %v3264
        %v3267 = vxor.u32 %v3266, 2147483648
        %v3268 = vmul.f32 %v3267, 1.442695
        %v3269 = vpow.pop %v3268
        %v3270 = vadd.f32 %v3269, 1.0
        %v3271 = vrcp.pop %v3270
        %v3272 = vmul.f32 1.0, %v3271
        %v3273 = vadd.f32 %v3248, %v2390
        %v3275 = vrot.slane %v3273, 2
        %v3277 = vmul.f32 %v3262, %v3275
        %v3278 = vadd.f32 %v3170, %v3277
        %v3279 = vtanh.pop %v3278
        %v3280 = vsub.f32 1.0, %v3272
        %v3281 = vmul.f32 %v3280, %v3279
        %v3283 = vrot.slane %v3159, 2
        %v3285 = vmul.f32 %v3272, %v3283
        %v3286 = vadd.f32 %v3281, %v3285
        %v3288 = vrot.slane %v3286, 6
        %v3290 = vsel %vm1838, %v3288, %v3159
        %v3291 = vsel %vm1838, %v3288, 0.0
        %v3292 = vpack.c.bf16 %v3291, %v3291
        %v3294 = vunpack.c.l.b16 %v3292
        %v3295 = vpack.c.b16 %v3294, %v3294
        %v3296 = vrot.slane %v3295, 5
        %3298 = vst [vmem:[%s479 + $0x4] sm:$0x8] %v3296
        %3299 = vst [vmem:[%s486 + $0x2] sm:$0x3] %v3290
        %s3300 = sand.u32 %s262, 1
        %s3301 = scalar_lea.sflag [#allocation6], %s3300
        %s3302 = sand.u32 %s262, 1
        %s3303 = smul.addr %s3302, 8
        %s3304 = scalar_lea.vmem [#allocation13], %s3303
        %s3305 = sand.u32 %s288, 1
        %s3306 = scalar_lea.sflag [#allocation15], %s3305
        %s3307 = sand.u32 %s288, 1
        %s3308 = smul.addr %s3307, 4
        %s3309 = scalar_lea.vmem [#allocation14], %s3308
        // Predicated region
        $region81: #{tpu_custom_call.1} parent=59 // pred_check
          %p3310 = pneg %p272
        $region82: #{tpu_custom_call.1} parent=59 // pred_check_branch
          %3312 = sbr.rel (%p3310) target = $region84
        $region83: #{tpu_custom_call.1} parent=59 // pred_region
          %s3314 = ssub.s32 128, 128
          %3315 = vsyncadd %s3301, %s3314
          %s3316 = smul.addr %s34, 2
          %s3317 = smul.addr %s3316, 64
          %s3318 = scalar_lea.hbm %s10, %s3317
          %s3319 = sshll.u32 %s3304, 4
          %s3320 = int_to_ptr.vmem [resolvable:$true] %s3319
          %3325 = dma.vmem_to_hbm [thread:$0]  %s3320, 128, %s3318, %s3301, 64, 64, 4
        $region84: #{tpu_custom_call.1} parent=59 // pred_fallthru
          _
        // Predicated region
        $region85: #{tpu_custom_call.1} parent=59 // pred_check
          %p3326 = pneg %p298
        $region86: #{tpu_custom_call.1} parent=59 // pred_check_branch
          %3328 = sbr.rel (%p3326) target = $region88
        $region87: #{tpu_custom_call.1} parent=59 // pred_region
          %s3330 = ssub.s32 64, 64
          %3331 = vsyncadd %s3306, %s3330
          %s3332 = smul.addr %s34, 64
          %s3333 = scalar_lea.hbm %s11, %s3332
          %s3335 = sshll.u32 %s3309, 4
          %s3336 = int_to_ptr.vmem [resolvable:$true] %s3335
          %3338 = dma.vmem_to_hbm [thread:$0]  %s3336, 64, %s3333, %s3306
        $region88: #{tpu_custom_call.1} parent=59 // pred_fallthru
          _
      $region60: #{tpu_custom_call.1} parent=5 // pred_fallthru
        _
      %p3339 = scmp.le.s32.totalorder 2, %s29
      // Predicated region
      $region89: #{tpu_custom_call.1} parent=5 // pred_check
        %p3340 = pneg %p3339
      $region90: #{tpu_custom_call.1} parent=5 // pred_check_branch
        %3342 = sbr.rel (%p3340) target = $region92
      $region91: #{tpu_custom_call.1} parent=5 // pred_region
        %s3343 = ssub.s32 %s29, 2
        // Predicated region
        $region93: #{tpu_custom_call.1} parent=91 // pred_check
          %p3344 = pneg %p278
        $region94: #{tpu_custom_call.1} parent=91 // pred_check_branch
          %3346 = sbr.rel (%p3344) target = $region96
        $region95: #{tpu_custom_call.1} parent=91 // pred_region
          %s3347 = sand.u32 %s263, 1
          %s3348 = scalar_lea.sflag [#allocation6], %s3347
          %s3349 = sand.u32 %s263, 1
          %s3350 = smul.addr %s3349, 8
          %s3351 = scalar_lea.vmem [#allocation13], %s3350
          %3352 = dma.done %s3348, 128
        $region96: #{tpu_custom_call.1} parent=91 // pred_fallthru
          _
        // Predicated region
        $region97: #{tpu_custom_call.1} parent=91 // pred_check
          %p3353 = pneg %p304
        $region98: #{tpu_custom_call.1} parent=91 // pred_check_branch
          %3355 = sbr.rel (%p3353) target = $region100
        $region99: #{tpu_custom_call.1} parent=91 // pred_region
          %s3356 = sand.u32 %s289, 1
          %s3357 = scalar_lea.sflag [#allocation15], %s3356
          %s3358 = sand.u32 %s289, 1
          %s3359 = smul.addr %s3358, 4
          %s3360 = scalar_lea.vmem [#allocation14], %s3359
          %3361 = dma.done %s3357, 64
        $region100: #{tpu_custom_call.1} parent=91 // pred_fallthru
          _
      $region92: #{tpu_custom_call.1} parent=5 // pred_fallthru
        _
    $region6: #{tpu_custom_call.1} parent=1 // loop_footer
      %s33 = sadd.s32 1, %s29
    $region7: #{tpu_custom_call.1} parent=1 // loop_footer_branch
      %28 = sbr.rel target = $region3
    $region8: #{tpu_custom_call.1} parent=1 // loop_exit
      _
    %3362 = vsyncpa [#allocation5], 1
    %s3363 = scalar_lea.sflag [#allocation5], 1
    %3364 = vsyncpa %s3363, 1
    %3365 = vsyncpa [#allocation8], 1
    %3366 = vsyncpa [#allocation11], 1
    %3367 = vsyncpa [#allocation6], 1
    %s3368 = scalar_lea.sflag [#allocation6], 1
    %3369 = vsyncpa %s3368, 1
    %3370 = vsyncpa [#allocation15], 1
    %s3371 = scalar_lea.sflag [#allocation15], 1
    %3372 = vsyncpa %s3371, 1

</llo_original>
